<compile_context>
chip_gen: v5e
topology: v5e:2x2
jax: 0.10.0
libtpu: 0.0.40
codegen_flags: <defaults>
</compile_context>

<pallas_src>
import functools
import math

import numpy as np
import jax
import jax.numpy as jnp
from jax import lax
from jax.experimental import pallas as pl
from jax.experimental.pallas import tpu as pltpu  # noqa: F401  (TPU backend)

# ----------------------------- model config ---------------------------------
BS = 2
INPUT_FEATURES = 24          # V*3
LATENT_DIM = 32
D_EMB = 16
D_RANDOM = 8
D_TEMPORAL = 16
MAX_SEQ_LEN = 8
PERIOD = 4
CLIP_DIM = 32
N_HEAD = 4
NUM_LAYERS = 2
NUM_EMBEDDINGS = 8
FF_DIM = 2 * LATENT_DIM
HEAD_DIM = LATENT_DIM // N_HEAD
HIDDEN_VQ = 512              # hard-coded 512 in the reference VQVAE
LN_EPS = 1e-5
BT = BS * MAX_SEQ_LEN
NEG_INF = -1e30              # large finite negative (robust vs. -inf in softmax)


# ----------------------------- host-side constants ---------------------------
def _get_slopes(n):
    def p2(n):
        start = 2 ** (-2 ** (-(math.log2(n) - 3)))
        return [start * start ** i for i in range(n)]
    if math.log2(n).is_integer():
        return p2(n)
    cp = 2 ** math.floor(math.log2(n))
    return p2(cp) + _get_slopes(2 * cp)[0::2][:n - cp]


def init_biased_mask_np(n_head, max_seq_len, period):
    slopes = np.array(_get_slopes(n_head), dtype=np.float32)
    bias = (np.arange(0, max_seq_len, period).reshape(-1, 1)
            .repeat(period, axis=1).reshape(-1) // period)
    bias = -np.flip(bias, axis=0)
    alibi = np.zeros((max_seq_len, max_seq_len), dtype=np.float32)
    for i in range(max_seq_len):
        alibi[i, :i + 1] = bias[-(i + 1):]
    alibi = slopes[:, None, None] * alibi[None]
    lower = (np.triu(np.ones((max_seq_len, max_seq_len))) == 1).T
    maskf = np.where(lower, 0.0, -np.inf).astype(np.float32)
    return (maskf[None] + alibi).astype(np.float32)          # [H, L, L]


def make_ppe_np(d_model, period, max_seq_len):
    pe = np.zeros((period, d_model), dtype=np.float32)
    position = np.arange(0, period, dtype=np.float32)[:, None]
    div_term = np.exp(np.arange(0, d_model, 2, dtype=np.float32)
                      * (-math.log(10000.0) / d_model))
    pe[:, 0::2] = np.sin(position * div_term)
    pe[:, 1::2] = np.cos(position * div_term)
    pe = pe[None]
    repeat_num = max_seq_len // period + 1
    return np.tile(pe, (1, repeat_num, 1)).astype(np.float32)  # [1, L', D]


def _build_constants():
    T, H, B, D, HD, DT = MAX_SEQ_LEN, N_HEAD, BS, LATENT_DIM, HEAD_DIM, D_TEMPORAL

    # ALiBi + causal additive mask, expanded per (head, batch) block and padded
    # with a large negative for cross-batch score columns.  Row = h*BT + b*T + t,
    # column = b*T + s.
    alibi = np.maximum(init_biased_mask_np(H, T, PERIOD), NEG_INF)   # [H, T, T]
    attn_bias = np.full((H * BT, BT), NEG_INF, np.float32)
    for h in range(H):
        for b in range(B):
            attn_bias[h * BT + b * T: h * BT + (b + 1) * T,
                      b * T:(b + 1) * T] = alibi[h]

    # replicate rows of Q per head / select per-head lanes / collapse head blocks
    rep = np.zeros((H * BT, BT), np.float32)
    headmask = np.zeros((H * BT, D), np.float32)
    collapse = np.zeros((BT, H * BT), np.float32)
    for h in range(H):
        rep[h * BT:(h + 1) * BT, :] = np.eye(BT, dtype=np.float32)
        headmask[h * BT:(h + 1) * BT, h * HD:(h + 1) * HD] = 1.0
        collapse[:, h * BT:(h + 1) * BT] = np.eye(BT, dtype=np.float32)

    # teacher-forcing shift (block-diagonal sub-diagonal), row t=0 -> zeros
    shift = np.zeros((BT, BT), np.float32)
    for b in range(B):
        for t in range(1, T):
            shift[b * T + t, b * T + t - 1] = 1.0

    # batch-row selection matrices (broadcast style per batch / per-batch sums)
    sel_bt = np.zeros((BT, B), np.float32)
    for b in range(B):
        sel_bt[b * T:(b + 1) * T, b] = 1.0
    sel_tb = np.ascontiguousarray(sel_bt.T)

    # identity used as the LHS of A@B^T dot_general -> MXU transpose
    eye_t = np.eye(T, dtype=np.float32)

    # unpack [bs, T*d_temporal] -> [bs*T, d_temporal] as mask + gather matmul
    unpack_mask = np.zeros((BT, T * DT), np.float32)
    for r in range(BT):
        t = r % T
        unpack_mask[r, t * DT:(t + 1) * DT] = 1.0
    unpack_gather = np.zeros((T * DT, DT), np.float32)
    for c in range(T * DT):
        unpack_gather[c, c % DT] = 1.0

    # periodic positional encoding rows, tiled over batch
    pe = make_ppe_np(D, PERIOD, T)[0, :T, :]                    # [T, D]
    pe_rows = np.tile(pe, (B, 1)).astype(np.float32)            # [BT, D]

    consts = dict(attn_bias=attn_bias, rep=rep, headmask=headmask,
                  collapse=collapse, shift=shift, sel_bt=sel_bt, sel_tb=sel_tb,
                  eye_t=eye_t, unpack_mask=unpack_mask,
                  unpack_gather=unpack_gather, pe_rows=pe_rows)
    return {k: jnp.asarray(v) for k, v in consts.items()}


_CONSTS = _build_constants()


# ----------------------------- the single fused kernel -----------------------
def _model_kernel(
        # data
        text_ref, rand_ref, vert_ref, tmask_ref,
        # precomputed layout / mask constants
        bias_ref, rep_ref, hmask_ref, coll_ref, shift_ref, selbt_ref, seltb_ref,
        eye_ref, umask_ref, ugat_ref, pe_ref,
        # cVQVAE params
        ew1_ref, eb1_ref, ew2_ref, eb2_ref, cb_ref,
        dw1z_ref, dw1n_ref, db1_ref, dw2_ref, db2_ref, eo_ref,
        # transformer decoder params
        epw_ref, epb_ref, ipw_ref, ipb_ref,
        swq_ref, sbq_ref, swk_ref, sbk_ref, swv_ref, sbv_ref, swo_ref, sbo_ref,
        cwv_ref, cbv_ref, cwo_ref, cbo_ref,
        fw1_ref, fb1_ref, fw2_ref, fb2_ref,
        lng_ref, lnb_ref, opw_ref, opb_ref,
        # outputs
        vq_ref, verts_ref, full_ref):
    f32 = jnp.float32
    T = MAX_SEQ_LEN
    scale = 1.0 / math.sqrt(HEAD_DIM)

    def mm(a, b):
        return jnp.dot(a, b, preferred_element_type=f32)

    def mm_bt(a, b):                    # A @ B^T (well supported MXU form)
        return lax.dot_general(a, b, (((1,), (1,)), ((), ())),
                               preferred_element_type=f32)

    def layernorm(x, g, b):
        mu = jnp.mean(x, axis=-1, keepdims=True)
        xc = x - mu
        var = jnp.mean(xc * xc, axis=-1, keepdims=True)
        return xc * lax.rsqrt(var + LN_EPS) * g + b

    # -------------------- cVQVAE: encoder -> VQ -> decoder --------------------
    text = text_ref[...]
    rand = rand_ref[...]
    h = jnp.maximum(mm(text, ew1_ref[...]) + eb1_ref[...], 0.0)
    z = mm(h, ew2_ref[...]) + eb2_ref[...]                       # [BS, d_emb]

    cb = cb_ref[...]                                             # [K, d_emb]
    zk = mm_bt(z, cb)                                            # [BS, K]  z·e^T
    e2 = mm_bt(jnp.ones_like(z), cb * cb)                        # [BS, K]  Σ e²
    dists = e2 - 2.0 * zk                                        # ||z||² dropped (argmin-equal)
    mind = jnp.min(dists, axis=1, keepdims=True)
    col = lax.broadcasted_iota(jnp.int32, dists.shape, 1).astype(f32)
    idx = jnp.min(jnp.where(dists <= mind, col, float(NUM_EMBEDDINGS)),
                  axis=1, keepdims=True)                         # first argmin
    onehot = (col == idx).astype(f32)
    z_q = mm(onehot, cb)                                         # [BS, d_emb]

    # F.mse_loss(x_q.detach(), x) + 0.25*F.mse_loss(x_q, x.detach()) ->
    # forward value 1.25 * MSE (gradients of the detach split are not modelled)
    diff = z_q - z
    vq = (1.25 / (BS * D_EMB)) * jnp.sum(
        jnp.sum(diff * diff, axis=1, keepdims=True), axis=0, keepdims=True)

    # straight-through x + (x_q - x).detach() has forward value x_q
    h2 = jnp.maximum(mm(z_q, dw1z_ref[...]) + mm(rand, dw1n_ref[...])
                     + db1_ref[...], 0.0)
    x_rec = mm(h2, dw2_ref[...]) + db2_ref[...]                  # [BS, T*d_temporal]
    style = mm(rand, eo_ref[...])                                # [BS, D] (emb_obj, bias-free)

    # ---- in-kernel glue (all expressed as constant matmuls / masks) ----
    sel_bt = selbt_ref[...]                                      # [BT, BS]
    # x_recon.view(bs, T, d_temporal) -> rows [BT, d_temporal]
    x_rec_rows = mm(sel_bt, x_rec)                               # [BT, T*d_temporal]
    emb_text = mm(x_rec_rows * umask_ref[...], ugat_ref[...])    # [BT, d_temporal]
    mem = mm(emb_text, epw_ref[...]) + epb_ref[...]              # [BT, D] memory

    # vertice / temporal_mask permute(0,2,1): MXU transpose  I_T @ X^T
    eye_t = eye_ref[...]
    vert_p = jnp.concatenate(
        [mm_bt(eye_t, vert_ref[b]) for b in range(BS)], axis=0)  # [BT, F]
    tmask_p = jnp.concatenate(
        [mm_bt(eye_t, tmask_ref[b]) for b in range(BS)], axis=0)  # [BT, F]

    # x0 = input_process(shift(vertice)) + style_emb + PPE  (dropout = identity)
    x = (mm(shift_ref[...], mm(vert_p, ipw_ref[...])) + ipb_ref[...]
         + mm(sel_bt, style) + pe_ref[...])                      # [BT, D]

    # -------------------- transformer decoder (post-norm) --------------------
    rep = rep_ref[...]                                           # [H*BT, BT]
    hmask = hmask_ref[...]                                       # [H*BT, D]
    attn_bias = bias_ref[...]                                    # [H*BT, BT]
    coll = coll_ref[...]                                         # [BT, H*BT]

    for l in range(NUM_LAYERS):
        # ---- self-attention: all heads & batches in one stacked score matmul,
        #      one softmax, one P@V and one output projection per layer ----
        q = mm(x, swq_ref[l]) + sbq_ref[l]
        k = mm(x, swk_ref[l]) + sbk_ref[l]
        v = mm(x, swv_ref[l]) + sbv_ref[l]
        q_stack = mm(rep, q) * hmask                             # [H*BT, D]
        s = mm_bt(q_stack, k) * scale + attn_bias                # [H*BT, BT]
        m = jnp.max(s, axis=-1, keepdims=True)
        p = jnp.exp(s - m)
        p = p / jnp.sum(p, axis=-1, keepdims=True)               # exact softmax
        o = mm(p, v)                                             # [H*BT, D]
        attn = mm(mm(coll, o * hmask), swo_ref[l]) + sbo_ref[l]  # [BT, D]
        x = layernorm(x + attn, lng_ref[l, 0], lnb_ref[l, 0])

        # ---- cross-attention: diagonal-only memory mask => softmax weight 1.0
        #      on memory position t, so the output is exactly the V-path.
        #      (Q/K projections do not influence the forward value.) ----
        ca = mm(mm(mem, cwv_ref[l]) + cbv_ref[l], cwo_ref[l]) + cbo_ref[l]
        x = layernorm(x + ca, lng_ref[l, 1], lnb_ref[l, 1])

        # ---- feed-forward (Linear + ReLU + Linear) ----
        hid = jnp.maximum(mm(x, fw1_ref[l]) + fb1_ref[l], 0.0)
        ff = mm(hid, fw2_ref[l]) + fb2_ref[l]
        x = layernorm(x + ff, lng_ref[l, 2], lnb_ref[l, 2])

    # -------------------- output_process + masked_l2 + totals ----------------
    vout = mm(x, opw_ref[...]) + opb_ref[...]                    # [BT, F]
    d2 = (vout - vert_p) ** 2 * tmask_p
    rowsum = jnp.sum(d2, axis=1, keepdims=True)                  # [BT, 1]
    msum = jnp.sum(tmask_p, axis=1, keepdims=True)               # [BT, 1]
    sel_tb = seltb_ref[...]                                      # [BS, BT]
    loss_b = mm(sel_tb, rowsum)                                  # [BS, 1]
    nz_b = mm(sel_tb, msum) * float(T)                           # n_entries = seq_len
    verts = jnp.sum(loss_b / nz_b, axis=0, keepdims=True) * (1.0 / BS)

    vq_ref[...] = vq
    verts_ref[...] = verts
    full_ref[...] = verts + vq


# ----------------------------- parameters ------------------------------------
def init_params(key):
    keys = iter(jax.random.split(key, 64))

    def w(shape, scale=0.05):
        return jax.random.normal(next(keys), shape, jnp.float32) * scale

    def zeros(shape):
        return jnp.zeros(shape, jnp.float32)

    def ones(shape):
        return jnp.ones(shape, jnp.float32)

    L = NUM_LAYERS
    return {
        "vqvae": {
            "enc_w1": w((CLIP_DIM, HIDDEN_VQ)), "enc_b1": zeros((1, HIDDEN_VQ)),
            "enc_w2": w((HIDDEN_VQ, D_EMB)),    "enc_b2": zeros((1, D_EMB)),
            "codebook": jax.random.uniform(
                next(keys), (NUM_EMBEDDINGS, D_EMB), jnp.float32,
                -1.0 / NUM_EMBEDDINGS, 1.0 / NUM_EMBEDDINGS),
            # decoder first Linear(d_emb + noise, 512) stored pre-split
            "dec_w1_z": w((D_EMB, HIDDEN_VQ)),
            "dec_w1_n": w((D_RANDOM, HIDDEN_VQ)),
            "dec_b1": zeros((1, HIDDEN_VQ)),
            "dec_w2": w((HIDDEN_VQ, D_TEMPORAL * MAX_SEQ_LEN)),
            "dec_b2": zeros((1, D_TEMPORAL * MAX_SEQ_LEN)),
            "emb_obj_w": w((D_RANDOM, LATENT_DIM)),          # bias=False
        },
        "dec": {
            "ep_w": w((D_TEMPORAL, LATENT_DIM)), "ep_b": zeros((1, LATENT_DIM)),
            "ip_w": w((INPUT_FEATURES, LATENT_DIM)), "ip_b": zeros((1, LATENT_DIM)),
            # self-attention projections stored separately (lane-0 aligned)
            "self_wq": w((L, LATENT_DIM, LATENT_DIM)), "self_bq": zeros((L, 1, LATENT_DIM)),
            "self_wk": w((L, LATENT_DIM, LATENT_DIM)), "self_bk": zeros((L, 1, LATENT_DIM)),
            "self_wv": w((L, LATENT_DIM, LATENT_DIM)), "self_bv": zeros((L, 1, LATENT_DIM)),
            "self_wo": w((L, LATENT_DIM, LATENT_DIM)), "self_bo": zeros((L, 1, LATENT_DIM)),
            # cross-attention: only the V / out-proj path affects the forward
            # value under the diagonal-only memory mask (Q/K omitted).
            "cross_wv": w((L, LATENT_DIM, LATENT_DIM)), "cross_bv": zeros((L, 1, LATENT_DIM)),
            "cross_wo": w((L, LATENT_DIM, LATENT_DIM)), "cross_bo": zeros((L, 1, LATENT_DIM)),
            "ff_w1": w((L, LATENT_DIM, FF_DIM)), "ff_b1": zeros((L, 1, FF_DIM)),
            "ff_w2": w((L, FF_DIM, LATENT_DIM)), "ff_b2": zeros((L, 1, LATENT_DIM)),
            # layernorm params: [layer, {norm1,norm2,norm3}, 1, D]
            "ln_g": ones((L, 3, 1, LATENT_DIM)), "ln_b": zeros((L, 3, 1, LATENT_DIM)),
            # output_process is zero-initialized in the reference __init__
            "op_w": zeros((LATENT_DIM, INPUT_FEATURES)),
            "op_b": zeros((1, INPUT_FEATURES)),
        },
    }


# ----------------------------- forward ---------------------------------------
def forward(params, enc_text, action, vertice, random_vec, temporal_mask):
    del action  # moved to device but unused in the reference teacher-forcing forward
    f32 = jnp.float32
    bs, feat, T = vertice.shape
    # cross-attention V-path shortcut, flat row layout and precomputed constants
    # require these static sizes.
    assert bs == BS and T == MAX_SEQ_LEN and feat == INPUT_FEATURES

    pv = params["vqvae"]
    pd = params["dec"]
    C = _CONSTS

    vq, verts, full = pl.pallas_call(
        _model_kernel,
        out_shape=(jax.ShapeDtypeStruct((1, 1), f32),
                   jax.ShapeDtypeStruct((1, 1), f32),
                   jax.ShapeDtypeStruct((1, 1), f32)),
    )(
        enc_text.astype(f32), random_vec.astype(f32),
        vertice.astype(f32), temporal_mask.astype(f32),
        C["attn_bias"], C["rep"], C["headmask"], C["collapse"],
        C["shift"], C["sel_bt"], C["sel_tb"],
        C["eye_t"], C["unpack_mask"], C["unpack_gather"], C["pe_rows"],
        pv["enc_w1"], pv["enc_b1"], pv["enc_w2"], pv["enc_b2"], pv["codebook"],
        pv["dec_w1_z"], pv["dec_w1_n"], pv["dec_b1"], pv["dec_w2"], pv["dec_b2"],
        pv["emb_obj_w"],
        pd["ep_w"], pd["ep_b"], pd["ip_w"], pd["ip_b"],
        pd["self_wq"], pd["self_bq"], pd["self_wk"], pd["self_bk"],
        pd["self_wv"], pd["self_bv"], pd["self_wo"], pd["self_bo"],
        pd["cross_wv"], pd["cross_bv"], pd["cross_wo"], pd["cross_bo"],
        pd["ff_w1"], pd["ff_b1"], pd["ff_w2"], pd["ff_b2"],
        pd["ln_g"], pd["ln_b"], pd["op_w"], pd["op_b"],
    )

    return {"vqvae": vq[0, 0], "verts": verts[0, 0], "full": full[0, 0]}


# ----------------------------- main ------------------------------------------
if __name__ == "__main__":
    root = jax.random.PRNGKey(0)
    pkey, k1, k2, k3, k4 = jax.random.split(root, 5)
    params = init_params(pkey)

    # TODO(synk): the frozen CLIP tokenizer/text-encoder has no Pallas equivalent;
    # a deterministic precomputed text embedding (enc_text) stands in for raw text.
    enc_text = jax.random.normal(k1, (BS, CLIP_DIM), jnp.float32)
    action = jnp.zeros((BS, 1), jnp.float32)   # unused in the reference forward
    vertice = jax.random.normal(k2, (BS, INPUT_FEATURES, MAX_SEQ_LEN), jnp.float32)
    random_vec = jax.random.normal(k3, (BS, D_RANDOM), jnp.float32)
    temporal_mask = (jax.random.uniform(k4, (BS, INPUT_FEATURES, MAX_SEQ_LEN)) > 0.2
                     ).astype(jnp.float32)

    run = jax.jit(functools.partial(forward, params))
    losses = run(enc_text, action, vertice, random_vec, temporal_mask)
    jax.block_until_ready(losses["full"])
    print("KERNEL_OK")
</pallas_src>

<mosaic_0001>
module attributes {stable_mosaic.version = 11 : i64} {
  func.func @_model_kernel(%arg0: memref<2x32xf32, #tpu.memory_space<vmem>>, %arg1: memref<2x8xf32, #tpu.memory_space<vmem>>, %arg2: memref<2x24x8xf32, #tpu.memory_space<vmem>>, %arg3: memref<2x24x8xf32, #tpu.memory_space<vmem>>, %arg4: memref<64x16xf32, #tpu.memory_space<vmem>>, %arg5: memref<64x16xf32, #tpu.memory_space<vmem>>, %arg6: memref<64x32xf32, #tpu.memory_space<vmem>>, %arg7: memref<16x64xf32, #tpu.memory_space<vmem>>, %arg8: memref<16x16xf32, #tpu.memory_space<vmem>>, %arg9: memref<16x2xf32, #tpu.memory_space<vmem>>, %arg10: memref<2x16xf32, #tpu.memory_space<vmem>>, %arg11: memref<8x8xf32, #tpu.memory_space<vmem>>, %arg12: memref<16x128xf32, #tpu.memory_space<vmem>>, %arg13: memref<128x16xf32, #tpu.memory_space<vmem>>, %arg14: memref<16x32xf32, #tpu.memory_space<vmem>>, %arg15: memref<32x512xf32, #tpu.memory_space<vmem>>, %arg16: memref<1x512xf32, #tpu.memory_space<vmem>>, %arg17: memref<512x16xf32, #tpu.memory_space<vmem>>, %arg18: memref<1x16xf32, #tpu.memory_space<vmem>>, %arg19: memref<8x16xf32, #tpu.memory_space<vmem>>, %arg20: memref<16x512xf32, #tpu.memory_space<vmem>>, %arg21: memref<8x512xf32, #tpu.memory_space<vmem>>, %arg22: memref<1x512xf32, #tpu.memory_space<vmem>>, %arg23: memref<512x128xf32, #tpu.memory_space<vmem>>, %arg24: memref<1x128xf32, #tpu.memory_space<vmem>>, %arg25: memref<8x32xf32, #tpu.memory_space<vmem>>, %arg26: memref<16x32xf32, #tpu.memory_space<vmem>>, %arg27: memref<1x32xf32, #tpu.memory_space<vmem>>, %arg28: memref<24x32xf32, #tpu.memory_space<vmem>>, %arg29: memref<1x32xf32, #tpu.memory_space<vmem>>, %arg30: memref<2x32x32xf32, #tpu.memory_space<vmem>>, %arg31: memref<2x1x32xf32, #tpu.memory_space<vmem>>, %arg32: memref<2x32x32xf32, #tpu.memory_space<vmem>>, %arg33: memref<2x1x32xf32, #tpu.memory_space<vmem>>, %arg34: memref<2x32x32xf32, #tpu.memory_space<vmem>>, %arg35: memref<2x1x32xf32, #tpu.memory_space<vmem>>, %arg36: memref<2x32x32xf32, #tpu.memory_space<vmem>>, %arg37: memref<2x1x32xf32, #tpu.memory_space<vmem>>, %arg38: memref<2x32x32xf32, #tpu.memory_space<vmem>>, %arg39: memref<2x1x32xf32, #tpu.memory_space<vmem>>, %arg40: memref<2x32x32xf32, #tpu.memory_space<vmem>>, %arg41: memref<2x1x32xf32, #tpu.memory_space<vmem>>, %arg42: memref<2x32x64xf32, #tpu.memory_space<vmem>>, %arg43: memref<2x1x64xf32, #tpu.memory_space<vmem>>, %arg44: memref<2x64x32xf32, #tpu.memory_space<vmem>>, %arg45: memref<2x1x32xf32, #tpu.memory_space<vmem>>, %arg46: memref<2x3x1x32xf32, #tpu.memory_space<vmem>>, %arg47: memref<2x3x1x32xf32, #tpu.memory_space<vmem>>, %arg48: memref<32x24xf32, #tpu.memory_space<vmem>>, %arg49: memref<1x24xf32, #tpu.memory_space<vmem>>, %arg50: memref<1x1xf32, #tpu.memory_space<vmem>>, %arg51: memref<1x1xf32, #tpu.memory_space<vmem>>, %arg52: memref<1x1xf32, #tpu.memory_space<vmem>>) attributes {dimension_semantics = [], scalar_prefetch = 0 : i64, scratch_operands = 0 : i64, tpu.core_type = #tpu.core_type<tc>} {
    %c0 = arith.constant 0 : index
    %c0_0 = arith.constant 0 : index
    %0 = vector.load %arg0[%c0, %c0_0] : memref<2x32xf32, #tpu.memory_space<vmem>>, vector<2x32xf32>
    %c0_1 = arith.constant 0 : index
    %c0_2 = arith.constant 0 : index
    %1 = vector.load %arg1[%c0_1, %c0_2] : memref<2x8xf32, #tpu.memory_space<vmem>>, vector<2x8xf32>
    %c0_3 = arith.constant 0 : index
    %c0_4 = arith.constant 0 : index
    %2 = vector.load %arg15[%c0_3, %c0_4] : memref<32x512xf32, #tpu.memory_space<vmem>>, vector<32x512xf32>
    %cst = arith.constant dense<0.000000e+00> : vector<2x512xf32>
    %3 = tpu.matmul %0, %2, %cst {dimension_numbers = #tpu.dot_dimension_numbers<[1], [0], [0], [1], [0, 0, 1, 1], [], []>} : vector<2x32xf32>, vector<32x512xf32>, vector<2x512xf32> -> vector<2x512xf32>
    %c0_5 = arith.constant 0 : index
    %c0_6 = arith.constant 0 : index
    %4 = vector.load %arg16[%c0_5, %c0_6] : memref<1x512xf32, #tpu.memory_space<vmem>>, vector<1x512xf32>
    %5 = vector.broadcast %4 : vector<1x512xf32> to vector<2x512xf32>
    %6 = arith.addf %3, %5 : vector<2x512xf32>
    %cst_7 = arith.constant 0.000000e+00 : f32
    %7 = vector.broadcast %cst_7 : f32 to vector<2x512xf32>
    %8 = arith.maximumf %6, %7 : vector<2x512xf32>
    %c0_8 = arith.constant 0 : index
    %c0_9 = arith.constant 0 : index
    %9 = vector.load %arg17[%c0_8, %c0_9] : memref<512x16xf32, #tpu.memory_space<vmem>>, vector<512x16xf32>
    %cst_10 = arith.constant dense<0.000000e+00> : vector<2x16xf32>
    %10 = tpu.matmul %8, %9, %cst_10 {dimension_numbers = #tpu.dot_dimension_numbers<[1], [0], [0], [1], [0, 0, 1, 1], [], []>} : vector<2x512xf32>, vector<512x16xf32>, vector<2x16xf32> -> vector<2x16xf32>
    %c0_11 = arith.constant 0 : index
    %c0_12 = arith.constant 0 : index
    %11 = vector.load %arg18[%c0_11, %c0_12] : memref<1x16xf32, #tpu.memory_space<vmem>>, vector<1x16xf32>
    %12 = vector.broadcast %11 : vector<1x16xf32> to vector<2x16xf32>
    %13 = arith.addf %10, %12 : vector<2x16xf32>
    %c0_13 = arith.constant 0 : index
    %c0_14 = arith.constant 0 : index
    %14 = vector.load %arg19[%c0_13, %c0_14] : memref<8x16xf32, #tpu.memory_space<vmem>>, vector<8x16xf32>
    %cst_15 = arith.constant dense<0.000000e+00> : vector<2x8xf32>
    %15 = tpu.matmul %13, %14, %cst_15 {dimension_numbers = #tpu.dot_dimension_numbers<[1], [1], [0], [0], [0, 0, 1, 0], [], []>} : vector<2x16xf32>, vector<8x16xf32>, vector<2x8xf32> -> vector<2x8xf32>
    %cst_16 = arith.constant 1.000000e+00 : f32
    %16 = vector.broadcast %cst_16 : f32 to vector<2x16xf32>
    %17 = arith.mulf %14, %14 : vector<8x16xf32>
    %cst_17 = arith.constant dense<0.000000e+00> : vector<2x8xf32>
    %18 = tpu.matmul %16, %17, %cst_17 {dimension_numbers = #tpu.dot_dimension_numbers<[1], [1], [0], [0], [0, 0, 1, 0], [], []>} : vector<2x16xf32>, vector<8x16xf32>, vector<2x8xf32> -> vector<2x8xf32>
    %cst_18 = arith.constant 2.000000e+00 : f32
    %19 = vector.broadcast %cst_18 : f32 to vector<2x8xf32>
    %20 = arith.mulf %19, %15 : vector<2x8xf32>
    %21 = arith.subf %18, %20 : vector<2x8xf32>
    %cst_19 = arith.constant dense<0x7F800000> : vector<2xf32>
    %22 = vector.multi_reduction <minimumf>, %21, %cst_19 [1] : vector<2x8xf32> to vector<2xf32>
    %23 = vector.shape_cast %22 : vector<2xf32> to vector<2x1xf32>
    %24 = tpu.iota {dimensions = array<i32: 1>} : vector<2x8xi32>
    %25 = arith.sitofp %24 : vector<2x8xi32> to vector<2x8xf32>
    %26 = vector.broadcast %23 : vector<2x1xf32> to vector<2x8xf32>
    %27 = arith.cmpf ole, %21, %26 : vector<2x8xf32>
    %cst_20 = arith.constant 8.000000e+00 : f32
    %28 = vector.broadcast %cst_20 : f32 to vector<2x8xf32>
    %29 = arith.select %27, %25, %28 : vector<2x8xi1>, vector<2x8xf32>
    %cst_21 = arith.constant dense<0x7F800000> : vector<2xf32>
    %30 = vector.multi_reduction <minimumf>, %29, %cst_21 [1] : vector<2x8xf32> to vector<2xf32>
    %31 = vector.shape_cast %30 : vector<2xf32> to vector<2x1xf32>
    %32 = vector.broadcast %31 : vector<2x1xf32> to vector<2x8xf32>
    %33 = arith.cmpf oeq, %25, %32 : vector<2x8xf32>
    %34 = arith.extui %33 : vector<2x8xi1> to vector<2x8xi32>
    %35 = arith.sitofp %34 : vector<2x8xi32> to vector<2x8xf32>
    %cst_22 = arith.constant dense<0.000000e+00> : vector<2x16xf32>
    %36 = tpu.matmul %35, %14, %cst_22 {dimension_numbers = #tpu.dot_dimension_numbers<[1], [0], [0], [1], [0, 0, 1, 1], [], []>} : vector<2x8xf32>, vector<8x16xf32>, vector<2x16xf32> -> vector<2x16xf32>
    %37 = arith.subf %36, %13 : vector<2x16xf32>
    %38 = arith.mulf %37, %37 : vector<2x16xf32>
    %cst_23 = arith.constant dense<0.000000e+00> : vector<2xf32>
    %39 = vector.multi_reduction <add>, %38, %cst_23 [1] : vector<2x16xf32> to vector<2xf32>
    %40 = vector.shape_cast %39 : vector<2xf32> to vector<2x1xf32>
    %cst_24 = arith.constant dense<0.000000e+00> : vector<1xf32>
    %41 = vector.multi_reduction <add>, %40, %cst_24 [0] : vector<2x1xf32> to vector<1xf32>
    %42 = vector.shape_cast %41 : vector<1xf32> to vector<1x1xf32>
    %cst_25 = arith.constant 3.906250e-02 : f32
    %43 = vector.broadcast %cst_25 : f32 to vector<1x1xf32>
    %44 = arith.mulf %43, %42 : vector<1x1xf32>
    %c0_26 = arith.constant 0 : index
    %c0_27 = arith.constant 0 : index
    %45 = vector.load %arg20[%c0_26, %c0_27] : memref<16x512xf32, #tpu.memory_space<vmem>>, vector<16x512xf32>
    %cst_28 = arith.constant dense<0.000000e+00> : vector<2x512xf32>
    %46 = tpu.matmul %36, %45, %cst_28 {dimension_numbers = #tpu.dot_dimension_numbers<[1], [0], [0], [1], [0, 0, 1, 1], [], []>} : vector<2x16xf32>, vector<16x512xf32>, vector<2x512xf32> -> vector<2x512xf32>
    %c0_29 = arith.constant 0 : index
    %c0_30 = arith.constant 0 : index
    %47 = vector.load %arg21[%c0_29, %c0_30] : memref<8x512xf32, #tpu.memory_space<vmem>>, vector<8x512xf32>
    %cst_31 = arith.constant dense<0.000000e+00> : vector<2x512xf32>
    %48 = tpu.matmul %1, %47, %cst_31 {dimension_numbers = #tpu.dot_dimension_numbers<[1], [0], [0], [1], [0, 0, 1, 1], [], []>} : vector<2x8xf32>, vector<8x512xf32>, vector<2x512xf32> -> vector<2x512xf32>
    %49 = arith.addf %46, %48 : vector<2x512xf32>
    %c0_32 = arith.constant 0 : index
    %c0_33 = arith.constant 0 : index
    %50 = vector.load %arg22[%c0_32, %c0_33] : memref<1x512xf32, #tpu.memory_space<vmem>>, vector<1x512xf32>
    %51 = vector.broadcast %50 : vector<1x512xf32> to vector<2x512xf32>
    %52 = arith.addf %49, %51 : vector<2x512xf32>
    %cst_34 = arith.constant 0.000000e+00 : f32
    %53 = vector.broadcast %cst_34 : f32 to vector<2x512xf32>
    %54 = arith.maximumf %52, %53 : vector<2x512xf32>
    %c0_35 = arith.constant 0 : index
    %c0_36 = arith.constant 0 : index
    %55 = vector.load %arg23[%c0_35, %c0_36] : memref<512x128xf32, #tpu.memory_space<vmem>>, vector<512x128xf32>
    %cst_37 = arith.constant dense<0.000000e+00> : vector<2x128xf32>
    %56 = tpu.matmul %54, %55, %cst_37 {dimension_numbers = #tpu.dot_dimension_numbers<[1], [0], [0], [1], [0, 0, 1, 1], [], []>} : vector<2x512xf32>, vector<512x128xf32>, vector<2x128xf32> -> vector<2x128xf32>
    %c0_38 = arith.constant 0 : index
    %c0_39 = arith.constant 0 : index
    %57 = vector.load %arg24[%c0_38, %c0_39] : memref<1x128xf32, #tpu.memory_space<vmem>>, vector<1x128xf32>
    %58 = vector.broadcast %57 : vector<1x128xf32> to vector<2x128xf32>
    %59 = arith.addf %56, %58 : vector<2x128xf32>
    %c0_40 = arith.constant 0 : index
    %c0_41 = arith.constant 0 : index
    %60 = vector.load %arg25[%c0_40, %c0_41] : memref<8x32xf32, #tpu.memory_space<vmem>>, vector<8x32xf32>
    %cst_42 = arith.constant dense<0.000000e+00> : vector<2x32xf32>
    %61 = tpu.matmul %1, %60, %cst_42 {dimension_numbers = #tpu.dot_dimension_numbers<[1], [0], [0], [1], [0, 0, 1, 1], [], []>} : vector<2x8xf32>, vector<8x32xf32>, vector<2x32xf32> -> vector<2x32xf32>
    %c0_43 = arith.constant 0 : index
    %c0_44 = arith.constant 0 : index
    %62 = vector.load %arg9[%c0_43, %c0_44] : memref<16x2xf32, #tpu.memory_space<vmem>>, vector<16x2xf32>
    %cst_45 = arith.constant dense<0.000000e+00> : vector<16x128xf32>
    %63 = tpu.matmul %62, %59, %cst_45 {dimension_numbers = #tpu.dot_dimension_numbers<[1], [0], [0], [1], [0, 0, 1, 1], [], []>} : vector<16x2xf32>, vector<2x128xf32>, vector<16x128xf32> -> vector<16x128xf32>
    %c0_46 = arith.constant 0 : index
    %c0_47 = arith.constant 0 : index
    %64 = vector.load %arg12[%c0_46, %c0_47] : memref<16x128xf32, #tpu.memory_space<vmem>>, vector<16x128xf32>
    %65 = arith.mulf %63, %64 : vector<16x128xf32>
    %c0_48 = arith.constant 0 : index
    %c0_49 = arith.constant 0 : index
    %66 = vector.load %arg13[%c0_48, %c0_49] : memref<128x16xf32, #tpu.memory_space<vmem>>, vector<128x16xf32>
    %cst_50 = arith.constant dense<0.000000e+00> : vector<16x16xf32>
    %67 = tpu.matmul %65, %66, %cst_50 {dimension_numbers = #tpu.dot_dimension_numbers<[1], [0], [0], [1], [0, 0, 1, 1], [], []>} : vector<16x128xf32>, vector<128x16xf32>, vector<16x16xf32> -> vector<16x16xf32>
    %c0_51 = arith.constant 0 : index
    %c0_52 = arith.constant 0 : index
    %68 = vector.load %arg26[%c0_51, %c0_52] : memref<16x32xf32, #tpu.memory_space<vmem>>, vector<16x32xf32>
    %cst_53 = arith.constant dense<0.000000e+00> : vector<16x32xf32>
    %69 = tpu.matmul %67, %68, %cst_53 {dimension_numbers = #tpu.dot_dimension_numbers<[1], [0], [0], [1], [0, 0, 1, 1], [], []>} : vector<16x16xf32>, vector<16x32xf32>, vector<16x32xf32> -> vector<16x32xf32>
    %c0_54 = arith.constant 0 : index
    %c0_55 = arith.constant 0 : index
    %70 = vector.load %arg27[%c0_54, %c0_55] : memref<1x32xf32, #tpu.memory_space<vmem>>, vector<1x32xf32>
    %71 = vector.broadcast %70 : vector<1x32xf32> to vector<16x32xf32>
    %72 = arith.addf %69, %71 : vector<16x32xf32>
    %c0_56 = arith.constant 0 : index
    %c0_57 = arith.constant 0 : index
    %73 = vector.load %arg11[%c0_56, %c0_57] : memref<8x8xf32, #tpu.memory_space<vmem>>, vector<8x8xf32>
    %c0_58 = arith.constant 0 : index
    %c0_59 = arith.constant 0 : index
    %c0_60 = arith.constant 0 : index
    %74 = vector.load %arg2[%c0_58, %c0_59, %c0_60] : memref<2x24x8xf32, #tpu.memory_space<vmem>>, vector<1x24x8xf32>
    %75 = vector.shape_cast %74 : vector<1x24x8xf32> to vector<24x8xf32>
    %cst_61 = arith.constant dense<0.000000e+00> : vector<8x24xf32>
    %76 = tpu.matmul %73, %75, %cst_61 {dimension_numbers = #tpu.dot_dimension_numbers<[1], [1], [0], [0], [0, 0, 1, 0], [], []>} : vector<8x8xf32>, vector<24x8xf32>, vector<8x24xf32> -> vector<8x24xf32>
    %c1 = arith.constant 1 : index
    %c0_62 = arith.constant 0 : index
    %c0_63 = arith.constant 0 : index
    %77 = vector.load %arg2[%c1, %c0_62, %c0_63] : memref<2x24x8xf32, #tpu.memory_space<vmem>>, vector<1x24x8xf32>
    %78 = vector.shape_cast %77 : vector<1x24x8xf32> to vector<24x8xf32>
    %cst_64 = arith.constant dense<0.000000e+00> : vector<8x24xf32>
    %79 = tpu.matmul %73, %78, %cst_64 {dimension_numbers = #tpu.dot_dimension_numbers<[1], [1], [0], [0], [0, 0, 1, 0], [], []>} : vector<8x8xf32>, vector<24x8xf32>, vector<8x24xf32> -> vector<8x24xf32>
    %80 = tpu.concatenate %76, %79 in 0 : vector<8x24xf32>, vector<8x24xf32> -> vector<16x24xf32>
    %c0_65 = arith.constant 0 : index
    %c0_66 = arith.constant 0 : index
    %c0_67 = arith.constant 0 : index
    %81 = vector.load %arg3[%c0_65, %c0_66, %c0_67] : memref<2x24x8xf32, #tpu.memory_space<vmem>>, vector<1x24x8xf32>
    %82 = vector.shape_cast %81 : vector<1x24x8xf32> to vector<24x8xf32>
    %cst_68 = arith.constant dense<0.000000e+00> : vector<8x24xf32>
    %83 = tpu.matmul %73, %82, %cst_68 {dimension_numbers = #tpu.dot_dimension_numbers<[1], [1], [0], [0], [0, 0, 1, 0], [], []>} : vector<8x8xf32>, vector<24x8xf32>, vector<8x24xf32> -> vector<8x24xf32>
    %c1_69 = arith.constant 1 : index
    %c0_70 = arith.constant 0 : index
    %c0_71 = arith.constant 0 : index
    %84 = vector.load %arg3[%c1_69, %c0_70, %c0_71] : memref<2x24x8xf32, #tpu.memory_space<vmem>>, vector<1x24x8xf32>
    %85 = vector.shape_cast %84 : vector<1x24x8xf32> to vector<24x8xf32>
    %cst_72 = arith.constant dense<0.000000e+00> : vector<8x24xf32>
    %86 = tpu.matmul %73, %85, %cst_72 {dimension_numbers = #tpu.dot_dimension_numbers<[1], [1], [0], [0], [0, 0, 1, 0], [], []>} : vector<8x8xf32>, vector<24x8xf32>, vector<8x24xf32> -> vector<8x24xf32>
    %87 = tpu.concatenate %83, %86 in 0 : vector<8x24xf32>, vector<8x24xf32> -> vector<16x24xf32>
    %c0_73 = arith.constant 0 : index
    %c0_74 = arith.constant 0 : index
    %88 = vector.load %arg8[%c0_73, %c0_74] : memref<16x16xf32, #tpu.memory_space<vmem>>, vector<16x16xf32>
    %c0_75 = arith.constant 0 : index
    %c0_76 = arith.constant 0 : index
    %89 = vector.load %arg28[%c0_75, %c0_76] : memref<24x32xf32, #tpu.memory_space<vmem>>, vector<24x32xf32>
    %cst_77 = arith.constant dense<0.000000e+00> : vector<16x32xf32>
    %90 = tpu.matmul %80, %89, %cst_77 {dimension_numbers = #tpu.dot_dimension_numbers<[1], [0], [0], [1], [0, 0, 1, 1], [], []>} : vector<16x24xf32>, vector<24x32xf32>, vector<16x32xf32> -> vector<16x32xf32>
    %cst_78 = arith.constant dense<0.000000e+00> : vector<16x32xf32>
    %91 = tpu.matmul %88, %90, %cst_78 {dimension_numbers = #tpu.dot_dimension_numbers<[1], [0], [0], [1], [0, 0, 1, 1], [], []>} : vector<16x16xf32>, vector<16x32xf32>, vector<16x32xf32> -> vector<16x32xf32>
    %c0_79 = arith.constant 0 : index
    %c0_80 = arith.constant 0 : index
    %92 = vector.load %arg29[%c0_79, %c0_80] : memref<1x32xf32, #tpu.memory_space<vmem>>, vector<1x32xf32>
    %93 = vector.broadcast %92 : vector<1x32xf32> to vector<16x32xf32>
    %94 = arith.addf %91, %93 : vector<16x32xf32>
    %cst_81 = arith.constant dense<0.000000e+00> : vector<16x32xf32>
    %95 = tpu.matmul %62, %61, %cst_81 {dimension_numbers = #tpu.dot_dimension_numbers<[1], [0], [0], [1], [0, 0, 1, 1], [], []>} : vector<16x2xf32>, vector<2x32xf32>, vector<16x32xf32> -> vector<16x32xf32>
    %96 = arith.addf %94, %95 : vector<16x32xf32>
    %c0_82 = arith.constant 0 : index
    %c0_83 = arith.constant 0 : index
    %97 = vector.load %arg14[%c0_82, %c0_83] : memref<16x32xf32, #tpu.memory_space<vmem>>, vector<16x32xf32>
    %98 = arith.addf %96, %97 : vector<16x32xf32>
    %c0_84 = arith.constant 0 : index
    %c0_85 = arith.constant 0 : index
    %99 = vector.load %arg5[%c0_84, %c0_85] : memref<64x16xf32, #tpu.memory_space<vmem>>, vector<64x16xf32>
    %c0_86 = arith.constant 0 : index
    %c0_87 = arith.constant 0 : index
    %100 = vector.load %arg6[%c0_86, %c0_87] : memref<64x32xf32, #tpu.memory_space<vmem>>, vector<64x32xf32>
    %c0_88 = arith.constant 0 : index
    %c0_89 = arith.constant 0 : index
    %101 = vector.load %arg4[%c0_88, %c0_89] : memref<64x16xf32, #tpu.memory_space<vmem>>, vector<64x16xf32>
    %c0_90 = arith.constant 0 : index
    %c0_91 = arith.constant 0 : index
    %102 = vector.load %arg7[%c0_90, %c0_91] : memref<16x64xf32, #tpu.memory_space<vmem>>, vector<16x64xf32>
    %c0_92 = arith.constant 0 : index
    %c0_93 = arith.constant 0 : index
    %c0_94 = arith.constant 0 : index
    %103 = vector.load %arg30[%c0_92, %c0_93, %c0_94] : memref<2x32x32xf32, #tpu.memory_space<vmem>>, vector<1x32x32xf32>
    %104 = vector.shape_cast %103 : vector<1x32x32xf32> to vector<32x32xf32>
    %cst_95 = arith.constant dense<0.000000e+00> : vector<16x32xf32>
    %105 = tpu.matmul %98, %104, %cst_95 {dimension_numbers = #tpu.dot_dimension_numbers<[1], [0], [0], [1], [0, 0, 1, 1], [], []>} : vector<16x32xf32>, vector<32x32xf32>, vector<16x32xf32> -> vector<16x32xf32>
    %c0_96 = arith.constant 0 : index
    %c0_97 = arith.constant 0 : index
    %c0_98 = arith.constant 0 : index
    %106 = vector.load %arg31[%c0_96, %c0_97, %c0_98] : memref<2x1x32xf32, #tpu.memory_space<vmem>>, vector<1x1x32xf32>
    %107 = vector.shape_cast %106 : vector<1x1x32xf32> to vector<1x32xf32>
    %108 = vector.broadcast %107 : vector<1x32xf32> to vector<16x32xf32>
    %109 = arith.addf %105, %108 : vector<16x32xf32>
    %c0_99 = arith.constant 0 : index
    %c0_100 = arith.constant 0 : index
    %c0_101 = arith.constant 0 : index
    %110 = vector.load %arg32[%c0_99, %c0_100, %c0_101] : memref<2x32x32xf32, #tpu.memory_space<vmem>>, vector<1x32x32xf32>
    %111 = vector.shape_cast %110 : vector<1x32x32xf32> to vector<32x32xf32>
    %cst_102 = arith.constant dense<0.000000e+00> : vector<16x32xf32>
    %112 = tpu.matmul %98, %111, %cst_102 {dimension_numbers = #tpu.dot_dimension_numbers<[1], [0], [0], [1], [0, 0, 1, 1], [], []>} : vector<16x32xf32>, vector<32x32xf32>, vector<16x32xf32> -> vector<16x32xf32>
    %c0_103 = arith.constant 0 : index
    %c0_104 = arith.constant 0 : index
    %c0_105 = arith.constant 0 : index
    %113 = vector.load %arg33[%c0_103, %c0_104, %c0_105] : memref<2x1x32xf32, #tpu.memory_space<vmem>>, vector<1x1x32xf32>
    %114 = vector.shape_cast %113 : vector<1x1x32xf32> to vector<1x32xf32>
    %115 = vector.broadcast %114 : vector<1x32xf32> to vector<16x32xf32>
    %116 = arith.addf %112, %115 : vector<16x32xf32>
    %c0_106 = arith.constant 0 : index
    %c0_107 = arith.constant 0 : index
    %c0_108 = arith.constant 0 : index
    %117 = vector.load %arg34[%c0_106, %c0_107, %c0_108] : memref<2x32x32xf32, #tpu.memory_space<vmem>>, vector<1x32x32xf32>
    %118 = vector.shape_cast %117 : vector<1x32x32xf32> to vector<32x32xf32>
    %cst_109 = arith.constant dense<0.000000e+00> : vector<16x32xf32>
    %119 = tpu.matmul %98, %118, %cst_109 {dimension_numbers = #tpu.dot_dimension_numbers<[1], [0], [0], [1], [0, 0, 1, 1], [], []>} : vector<16x32xf32>, vector<32x32xf32>, vector<16x32xf32> -> vector<16x32xf32>
    %c0_110 = arith.constant 0 : index
    %c0_111 = arith.constant 0 : index
    %c0_112 = arith.constant 0 : index
    %120 = vector.load %arg35[%c0_110, %c0_111, %c0_112] : memref<2x1x32xf32, #tpu.memory_space<vmem>>, vector<1x1x32xf32>
    %121 = vector.shape_cast %120 : vector<1x1x32xf32> to vector<1x32xf32>
    %122 = vector.broadcast %121 : vector<1x32xf32> to vector<16x32xf32>
    %123 = arith.addf %119, %122 : vector<16x32xf32>
    %cst_113 = arith.constant dense<0.000000e+00> : vector<64x32xf32>
    %124 = tpu.matmul %99, %109, %cst_113 {dimension_numbers = #tpu.dot_dimension_numbers<[1], [0], [0], [1], [0, 0, 1, 1], [], []>} : vector<64x16xf32>, vector<16x32xf32>, vector<64x32xf32> -> vector<64x32xf32>
    %125 = arith.mulf %124, %100 : vector<64x32xf32>
    %cst_114 = arith.constant dense<0.000000e+00> : vector<64x16xf32>
    %126 = tpu.matmul %125, %116, %cst_114 {dimension_numbers = #tpu.dot_dimension_numbers<[1], [1], [0], [0], [0, 0, 1, 0], [], []>} : vector<64x32xf32>, vector<16x32xf32>, vector<64x16xf32> -> vector<64x16xf32>
    %cst_115 = arith.constant 0.353553385 : f32
    %127 = vector.broadcast %cst_115 : f32 to vector<64x16xf32>
    %128 = arith.mulf %126, %127 : vector<64x16xf32>
    %129 = arith.addf %128, %101 : vector<64x16xf32>
    %cst_116 = arith.constant dense<0xFF800000> : vector<64xf32>
    %130 = vector.multi_reduction <maximumf>, %129, %cst_116 [1] : vector<64x16xf32> to vector<64xf32>
    %131 = vector.shape_cast %130 : vector<64xf32> to vector<64x1xf32>
    %132 = vector.broadcast %131 : vector<64x1xf32> to vector<64x16xf32>
    %133 = arith.subf %129, %132 : vector<64x16xf32>
    %134 = math.exp %133 : vector<64x16xf32>
    %cst_117 = arith.constant dense<0.000000e+00> : vector<64xf32>
    %135 = vector.multi_reduction <add>, %134, %cst_117 [1] : vector<64x16xf32> to vector<64xf32>
    %136 = vector.shape_cast %135 : vector<64xf32> to vector<64x1xf32>
    %137 = vector.broadcast %136 : vector<64x1xf32> to vector<64x16xf32>
    %138 = arith.divf %134, %137 : vector<64x16xf32>
    %cst_118 = arith.constant dense<0.000000e+00> : vector<64x32xf32>
    %139 = tpu.matmul %138, %123, %cst_118 {dimension_numbers = #tpu.dot_dimension_numbers<[1], [0], [0], [1], [0, 0, 1, 1], [], []>} : vector<64x16xf32>, vector<16x32xf32>, vector<64x32xf32> -> vector<64x32xf32>
    %140 = arith.mulf %139, %100 : vector<64x32xf32>
    %cst_119 = arith.constant dense<0.000000e+00> : vector<16x32xf32>
    %141 = tpu.matmul %102, %140, %cst_119 {dimension_numbers = #tpu.dot_dimension_numbers<[1], [0], [0], [1], [0, 0, 1, 1], [], []>} : vector<16x64xf32>, vector<64x32xf32>, vector<16x32xf32> -> vector<16x32xf32>
    %c0_120 = arith.constant 0 : index
    %c0_121 = arith.constant 0 : index
    %c0_122 = arith.constant 0 : index
    %142 = vector.load %arg36[%c0_120, %c0_121, %c0_122] : memref<2x32x32xf32, #tpu.memory_space<vmem>>, vector<1x32x32xf32>
    %143 = vector.shape_cast %142 : vector<1x32x32xf32> to vector<32x32xf32>
    %cst_123 = arith.constant dense<0.000000e+00> : vector<16x32xf32>
    %144 = tpu.matmul %141, %143, %cst_123 {dimension_numbers = #tpu.dot_dimension_numbers<[1], [0], [0], [1], [0, 0, 1, 1], [], []>} : vector<16x32xf32>, vector<32x32xf32>, vector<16x32xf32> -> vector<16x32xf32>
    %c0_124 = arith.constant 0 : index
    %c0_125 = arith.constant 0 : index
    %c0_126 = arith.constant 0 : index
    %145 = vector.load %arg37[%c0_124, %c0_125, %c0_126] : memref<2x1x32xf32, #tpu.memory_space<vmem>>, vector<1x1x32xf32>
    %146 = vector.shape_cast %145 : vector<1x1x32xf32> to vector<1x32xf32>
    %147 = vector.broadcast %146 : vector<1x32xf32> to vector<16x32xf32>
    %148 = arith.addf %144, %147 : vector<16x32xf32>
    %149 = arith.addf %98, %148 : vector<16x32xf32>
    %c0_127 = arith.constant 0 : index
    %c0_128 = arith.constant 0 : index
    %c0_129 = arith.constant 0 : index
    %c0_130 = arith.constant 0 : index
    %150 = vector.load %arg46[%c0_127, %c0_128, %c0_129, %c0_130] : memref<2x3x1x32xf32, #tpu.memory_space<vmem>>, vector<1x1x1x32xf32>
    %151 = vector.shape_cast %150 : vector<1x1x1x32xf32> to vector<1x32xf32>
    %c0_131 = arith.constant 0 : index
    %c0_132 = arith.constant 0 : index
    %c0_133 = arith.constant 0 : index
    %c0_134 = arith.constant 0 : index
    %152 = vector.load %arg47[%c0_131, %c0_132, %c0_133, %c0_134] : memref<2x3x1x32xf32, #tpu.memory_space<vmem>>, vector<1x1x1x32xf32>
    %153 = vector.shape_cast %152 : vector<1x1x1x32xf32> to vector<1x32xf32>
    %cst_135 = arith.constant dense<0.000000e+00> : vector<16xf32>
    %154 = vector.multi_reduction <add>, %149, %cst_135 [1] : vector<16x32xf32> to vector<16xf32>
    %155 = vector.shape_cast %154 : vector<16xf32> to vector<16x1xf32>
    %cst_136 = arith.constant 3.200000e+01 : f32
    %156 = vector.broadcast %cst_136 : f32 to vector<16x1xf32>
    %157 = arith.divf %155, %156 : vector<16x1xf32>
    %158 = vector.broadcast %157 : vector<16x1xf32> to vector<16x32xf32>
    %159 = arith.subf %149, %158 : vector<16x32xf32>
    %160 = arith.mulf %159, %159 : vector<16x32xf32>
    %cst_137 = arith.constant dense<0.000000e+00> : vector<16xf32>
    %161 = vector.multi_reduction <add>, %160, %cst_137 [1] : vector<16x32xf32> to vector<16xf32>
    %162 = vector.shape_cast %161 : vector<16xf32> to vector<16x1xf32>
    %cst_138 = arith.constant 3.200000e+01 : f32
    %163 = vector.broadcast %cst_138 : f32 to vector<16x1xf32>
    %164 = arith.divf %162, %163 : vector<16x1xf32>
    %cst_139 = arith.constant 9.99999974E-6 : f32
    %165 = vector.broadcast %cst_139 : f32 to vector<16x1xf32>
    %166 = arith.addf %164, %165 : vector<16x1xf32>
    %167 = math.rsqrt %166 : vector<16x1xf32>
    %168 = vector.broadcast %167 : vector<16x1xf32> to vector<16x32xf32>
    %169 = arith.mulf %159, %168 : vector<16x32xf32>
    %170 = vector.broadcast %151 : vector<1x32xf32> to vector<16x32xf32>
    %171 = arith.mulf %169, %170 : vector<16x32xf32>
    %172 = vector.broadcast %153 : vector<1x32xf32> to vector<16x32xf32>
    %173 = arith.addf %171, %172 : vector<16x32xf32>
    %c0_140 = arith.constant 0 : index
    %c0_141 = arith.constant 0 : index
    %c0_142 = arith.constant 0 : index
    %174 = vector.load %arg38[%c0_140, %c0_141, %c0_142] : memref<2x32x32xf32, #tpu.memory_space<vmem>>, vector<1x32x32xf32>
    %175 = vector.shape_cast %174 : vector<1x32x32xf32> to vector<32x32xf32>
    %cst_143 = arith.constant dense<0.000000e+00> : vector<16x32xf32>
    %176 = tpu.matmul %72, %175, %cst_143 {dimension_numbers = #tpu.dot_dimension_numbers<[1], [0], [0], [1], [0, 0, 1, 1], [], []>} : vector<16x32xf32>, vector<32x32xf32>, vector<16x32xf32> -> vector<16x32xf32>
    %c0_144 = arith.constant 0 : index
    %c0_145 = arith.constant 0 : index
    %c0_146 = arith.constant 0 : index
    %177 = vector.load %arg39[%c0_144, %c0_145, %c0_146] : memref<2x1x32xf32, #tpu.memory_space<vmem>>, vector<1x1x32xf32>
    %178 = vector.shape_cast %177 : vector<1x1x32xf32> to vector<1x32xf32>
    %179 = vector.broadcast %178 : vector<1x32xf32> to vector<16x32xf32>
    %180 = arith.addf %176, %179 : vector<16x32xf32>
    %c0_147 = arith.constant 0 : index
    %c0_148 = arith.constant 0 : index
    %c0_149 = arith.constant 0 : index
    %181 = vector.load %arg40[%c0_147, %c0_148, %c0_149] : memref<2x32x32xf32, #tpu.memory_space<vmem>>, vector<1x32x32xf32>
    %182 = vector.shape_cast %181 : vector<1x32x32xf32> to vector<32x32xf32>
    %cst_150 = arith.constant dense<0.000000e+00> : vector<16x32xf32>
    %183 = tpu.matmul %180, %182, %cst_150 {dimension_numbers = #tpu.dot_dimension_numbers<[1], [0], [0], [1], [0, 0, 1, 1], [], []>} : vector<16x32xf32>, vector<32x32xf32>, vector<16x32xf32> -> vector<16x32xf32>
    %c0_151 = arith.constant 0 : index
    %c0_152 = arith.constant 0 : index
    %c0_153 = arith.constant 0 : index
    %184 = vector.load %arg41[%c0_151, %c0_152, %c0_153] : memref<2x1x32xf32, #tpu.memory_space<vmem>>, vector<1x1x32xf32>
    %185 = vector.shape_cast %184 : vector<1x1x32xf32> to vector<1x32xf32>
    %186 = vector.broadcast %185 : vector<1x32xf32> to vector<16x32xf32>
    %187 = arith.addf %183, %186 : vector<16x32xf32>
    %188 = arith.addf %173, %187 : vector<16x32xf32>
    %c0_154 = arith.constant 0 : index
    %c1_155 = arith.constant 1 : index
    %c0_156 = arith.constant 0 : index
    %c0_157 = arith.constant 0 : index
    %189 = vector.load %arg46[%c0_154, %c1_155, %c0_156, %c0_157] : memref<2x3x1x32xf32, #tpu.memory_space<vmem>>, vector<1x1x1x32xf32>
    %190 = vector.shape_cast %189 : vector<1x1x1x32xf32> to vector<1x32xf32>
    %c0_158 = arith.constant 0 : index
    %c1_159 = arith.constant 1 : index
    %c0_160 = arith.constant 0 : index
    %c0_161 = arith.constant 0 : index
    %191 = vector.load %arg47[%c0_158, %c1_159, %c0_160, %c0_161] : memref<2x3x1x32xf32, #tpu.memory_space<vmem>>, vector<1x1x1x32xf32>
    %192 = vector.shape_cast %191 : vector<1x1x1x32xf32> to vector<1x32xf32>
    %cst_162 = arith.constant dense<0.000000e+00> : vector<16xf32>
    %193 = vector.multi_reduction <add>, %188, %cst_162 [1] : vector<16x32xf32> to vector<16xf32>
    %194 = vector.shape_cast %193 : vector<16xf32> to vector<16x1xf32>
    %cst_163 = arith.constant 3.200000e+01 : f32
    %195 = vector.broadcast %cst_163 : f32 to vector<16x1xf32>
    %196 = arith.divf %194, %195 : vector<16x1xf32>
    %197 = vector.broadcast %196 : vector<16x1xf32> to vector<16x32xf32>
    %198 = arith.subf %188, %197 : vector<16x32xf32>
    %199 = arith.mulf %198, %198 : vector<16x32xf32>
    %cst_164 = arith.constant dense<0.000000e+00> : vector<16xf32>
    %200 = vector.multi_reduction <add>, %199, %cst_164 [1] : vector<16x32xf32> to vector<16xf32>
    %201 = vector.shape_cast %200 : vector<16xf32> to vector<16x1xf32>
    %cst_165 = arith.constant 3.200000e+01 : f32
    %202 = vector.broadcast %cst_165 : f32 to vector<16x1xf32>
    %203 = arith.divf %201, %202 : vector<16x1xf32>
    %cst_166 = arith.constant 9.99999974E-6 : f32
    %204 = vector.broadcast %cst_166 : f32 to vector<16x1xf32>
    %205 = arith.addf %203, %204 : vector<16x1xf32>
    %206 = math.rsqrt %205 : vector<16x1xf32>
    %207 = vector.broadcast %206 : vector<16x1xf32> to vector<16x32xf32>
    %208 = arith.mulf %198, %207 : vector<16x32xf32>
    %209 = vector.broadcast %190 : vector<1x32xf32> to vector<16x32xf32>
    %210 = arith.mulf %208, %209 : vector<16x32xf32>
    %211 = vector.broadcast %192 : vector<1x32xf32> to vector<16x32xf32>
    %212 = arith.addf %210, %211 : vector<16x32xf32>
    %c0_167 = arith.constant 0 : index
    %c0_168 = arith.constant 0 : index
    %c0_169 = arith.constant 0 : index
    %213 = vector.load %arg42[%c0_167, %c0_168, %c0_169] : memref<2x32x64xf32, #tpu.memory_space<vmem>>, vector<1x32x64xf32>
    %214 = vector.shape_cast %213 : vector<1x32x64xf32> to vector<32x64xf32>
    %cst_170 = arith.constant dense<0.000000e+00> : vector<16x64xf32>
    %215 = tpu.matmul %212, %214, %cst_170 {dimension_numbers = #tpu.dot_dimension_numbers<[1], [0], [0], [1], [0, 0, 1, 1], [], []>} : vector<16x32xf32>, vector<32x64xf32>, vector<16x64xf32> -> vector<16x64xf32>
    %c0_171 = arith.constant 0 : index
    %c0_172 = arith.constant 0 : index
    %c0_173 = arith.constant 0 : index
    %216 = vector.load %arg43[%c0_171, %c0_172, %c0_173] : memref<2x1x64xf32, #tpu.memory_space<vmem>>, vector<1x1x64xf32>
    %217 = vector.shape_cast %216 : vector<1x1x64xf32> to vector<1x64xf32>
    %218 = vector.broadcast %217 : vector<1x64xf32> to vector<16x64xf32>
    %219 = arith.addf %215, %218 : vector<16x64xf32>
    %cst_174 = arith.constant 0.000000e+00 : f32
    %220 = vector.broadcast %cst_174 : f32 to vector<16x64xf32>
    %221 = arith.maximumf %219, %220 : vector<16x64xf32>
    %c0_175 = arith.constant 0 : index
    %c0_176 = arith.constant 0 : index
    %c0_177 = arith.constant 0 : index
    %222 = vector.load %arg44[%c0_175, %c0_176, %c0_177] : memref<2x64x32xf32, #tpu.memory_space<vmem>>, vector<1x64x32xf32>
    %223 = vector.shape_cast %222 : vector<1x64x32xf32> to vector<64x32xf32>
    %cst_178 = arith.constant dense<0.000000e+00> : vector<16x32xf32>
    %224 = tpu.matmul %221, %223, %cst_178 {dimension_numbers = #tpu.dot_dimension_numbers<[1], [0], [0], [1], [0, 0, 1, 1], [], []>} : vector<16x64xf32>, vector<64x32xf32>, vector<16x32xf32> -> vector<16x32xf32>
    %c0_179 = arith.constant 0 : index
    %c0_180 = arith.constant 0 : index
    %c0_181 = arith.constant 0 : index
    %225 = vector.load %arg45[%c0_179, %c0_180, %c0_181] : memref<2x1x32xf32, #tpu.memory_space<vmem>>, vector<1x1x32xf32>
    %226 = vector.shape_cast %225 : vector<1x1x32xf32> to vector<1x32xf32>
    %227 = vector.broadcast %226 : vector<1x32xf32> to vector<16x32xf32>
    %228 = arith.addf %224, %227 : vector<16x32xf32>
    %229 = arith.addf %212, %228 : vector<16x32xf32>
    %c0_182 = arith.constant 0 : index
    %c2 = arith.constant 2 : index
    %c0_183 = arith.constant 0 : index
    %c0_184 = arith.constant 0 : index
    %230 = vector.load %arg46[%c0_182, %c2, %c0_183, %c0_184] : memref<2x3x1x32xf32, #tpu.memory_space<vmem>>, vector<1x1x1x32xf32>
    %231 = vector.shape_cast %230 : vector<1x1x1x32xf32> to vector<1x32xf32>
    %c0_185 = arith.constant 0 : index
    %c2_186 = arith.constant 2 : index
    %c0_187 = arith.constant 0 : index
    %c0_188 = arith.constant 0 : index
    %232 = vector.load %arg47[%c0_185, %c2_186, %c0_187, %c0_188] : memref<2x3x1x32xf32, #tpu.memory_space<vmem>>, vector<1x1x1x32xf32>
    %233 = vector.shape_cast %232 : vector<1x1x1x32xf32> to vector<1x32xf32>
    %cst_189 = arith.constant dense<0.000000e+00> : vector<16xf32>
    %234 = vector.multi_reduction <add>, %229, %cst_189 [1] : vector<16x32xf32> to vector<16xf32>
    %235 = vector.shape_cast %234 : vector<16xf32> to vector<16x1xf32>
    %cst_190 = arith.constant 3.200000e+01 : f32
    %236 = vector.broadcast %cst_190 : f32 to vector<16x1xf32>
    %237 = arith.divf %235, %236 : vector<16x1xf32>
    %238 = vector.broadcast %237 : vector<16x1xf32> to vector<16x32xf32>
    %239 = arith.subf %229, %238 : vector<16x32xf32>
    %240 = arith.mulf %239, %239 : vector<16x32xf32>
    %cst_191 = arith.constant dense<0.000000e+00> : vector<16xf32>
    %241 = vector.multi_reduction <add>, %240, %cst_191 [1] : vector<16x32xf32> to vector<16xf32>
    %242 = vector.shape_cast %241 : vector<16xf32> to vector<16x1xf32>
    %cst_192 = arith.constant 3.200000e+01 : f32
    %243 = vector.broadcast %cst_192 : f32 to vector<16x1xf32>
    %244 = arith.divf %242, %243 : vector<16x1xf32>
    %cst_193 = arith.constant 9.99999974E-6 : f32
    %245 = vector.broadcast %cst_193 : f32 to vector<16x1xf32>
    %246 = arith.addf %244, %245 : vector<16x1xf32>
    %247 = math.rsqrt %246 : vector<16x1xf32>
    %248 = vector.broadcast %247 : vector<16x1xf32> to vector<16x32xf32>
    %249 = arith.mulf %239, %248 : vector<16x32xf32>
    %250 = vector.broadcast %231 : vector<1x32xf32> to vector<16x32xf32>
    %251 = arith.mulf %249, %250 : vector<16x32xf32>
    %252 = vector.broadcast %233 : vector<1x32xf32> to vector<16x32xf32>
    %253 = arith.addf %251, %252 : vector<16x32xf32>
    %c1_194 = arith.constant 1 : index
    %c0_195 = arith.constant 0 : index
    %c0_196 = arith.constant 0 : index
    %254 = vector.load %arg30[%c1_194, %c0_195, %c0_196] : memref<2x32x32xf32, #tpu.memory_space<vmem>>, vector<1x32x32xf32>
    %255 = vector.shape_cast %254 : vector<1x32x32xf32> to vector<32x32xf32>
    %cst_197 = arith.constant dense<0.000000e+00> : vector<16x32xf32>
    %256 = tpu.matmul %253, %255, %cst_197 {dimension_numbers = #tpu.dot_dimension_numbers<[1], [0], [0], [1], [0, 0, 1, 1], [], []>} : vector<16x32xf32>, vector<32x32xf32>, vector<16x32xf32> -> vector<16x32xf32>
    %c1_198 = arith.constant 1 : index
    %c0_199 = arith.constant 0 : index
    %c0_200 = arith.constant 0 : index
    %257 = vector.load %arg31[%c1_198, %c0_199, %c0_200] : memref<2x1x32xf32, #tpu.memory_space<vmem>>, vector<1x1x32xf32>
    %258 = vector.shape_cast %257 : vector<1x1x32xf32> to vector<1x32xf32>
    %259 = vector.broadcast %258 : vector<1x32xf32> to vector<16x32xf32>
    %260 = arith.addf %256, %259 : vector<16x32xf32>
    %c1_201 = arith.constant 1 : index
    %c0_202 = arith.constant 0 : index
    %c0_203 = arith.constant 0 : index
    %261 = vector.load %arg32[%c1_201, %c0_202, %c0_203] : memref<2x32x32xf32, #tpu.memory_space<vmem>>, vector<1x32x32xf32>
    %262 = vector.shape_cast %261 : vector<1x32x32xf32> to vector<32x32xf32>
    %cst_204 = arith.constant dense<0.000000e+00> : vector<16x32xf32>
    %263 = tpu.matmul %253, %262, %cst_204 {dimension_numbers = #tpu.dot_dimension_numbers<[1], [0], [0], [1], [0, 0, 1, 1], [], []>} : vector<16x32xf32>, vector<32x32xf32>, vector<16x32xf32> -> vector<16x32xf32>
    %c1_205 = arith.constant 1 : index
    %c0_206 = arith.constant 0 : index
    %c0_207 = arith.constant 0 : index
    %264 = vector.load %arg33[%c1_205, %c0_206, %c0_207] : memref<2x1x32xf32, #tpu.memory_space<vmem>>, vector<1x1x32xf32>
    %265 = vector.shape_cast %264 : vector<1x1x32xf32> to vector<1x32xf32>
    %266 = vector.broadcast %265 : vector<1x32xf32> to vector<16x32xf32>
    %267 = arith.addf %263, %266 : vector<16x32xf32>
    %c1_208 = arith.constant 1 : index
    %c0_209 = arith.constant 0 : index
    %c0_210 = arith.constant 0 : index
    %268 = vector.load %arg34[%c1_208, %c0_209, %c0_210] : memref<2x32x32xf32, #tpu.memory_space<vmem>>, vector<1x32x32xf32>
    %269 = vector.shape_cast %268 : vector<1x32x32xf32> to vector<32x32xf32>
    %cst_211 = arith.constant dense<0.000000e+00> : vector<16x32xf32>
    %270 = tpu.matmul %253, %269, %cst_211 {dimension_numbers = #tpu.dot_dimension_numbers<[1], [0], [0], [1], [0, 0, 1, 1], [], []>} : vector<16x32xf32>, vector<32x32xf32>, vector<16x32xf32> -> vector<16x32xf32>
    %c1_212 = arith.constant 1 : index
    %c0_213 = arith.constant 0 : index
    %c0_214 = arith.constant 0 : index
    %271 = vector.load %arg35[%c1_212, %c0_213, %c0_214] : memref<2x1x32xf32, #tpu.memory_space<vmem>>, vector<1x1x32xf32>
    %272 = vector.shape_cast %271 : vector<1x1x32xf32> to vector<1x32xf32>
    %273 = vector.broadcast %272 : vector<1x32xf32> to vector<16x32xf32>
    %274 = arith.addf %270, %273 : vector<16x32xf32>
    %cst_215 = arith.constant dense<0.000000e+00> : vector<64x32xf32>
    %275 = tpu.matmul %99, %260, %cst_215 {dimension_numbers = #tpu.dot_dimension_numbers<[1], [0], [0], [1], [0, 0, 1, 1], [], []>} : vector<64x16xf32>, vector<16x32xf32>, vector<64x32xf32> -> vector<64x32xf32>
    %276 = arith.mulf %275, %100 : vector<64x32xf32>
    %cst_216 = arith.constant dense<0.000000e+00> : vector<64x16xf32>
    %277 = tpu.matmul %276, %267, %cst_216 {dimension_numbers = #tpu.dot_dimension_numbers<[1], [1], [0], [0], [0, 0, 1, 0], [], []>} : vector<64x32xf32>, vector<16x32xf32>, vector<64x16xf32> -> vector<64x16xf32>
    %cst_217 = arith.constant 0.353553385 : f32
    %278 = vector.broadcast %cst_217 : f32 to vector<64x16xf32>
    %279 = arith.mulf %277, %278 : vector<64x16xf32>
    %280 = arith.addf %279, %101 : vector<64x16xf32>
    %cst_218 = arith.constant dense<0xFF800000> : vector<64xf32>
    %281 = vector.multi_reduction <maximumf>, %280, %cst_218 [1] : vector<64x16xf32> to vector<64xf32>
    %282 = vector.shape_cast %281 : vector<64xf32> to vector<64x1xf32>
    %283 = vector.broadcast %282 : vector<64x1xf32> to vector<64x16xf32>
    %284 = arith.subf %280, %283 : vector<64x16xf32>
    %285 = math.exp %284 : vector<64x16xf32>
    %cst_219 = arith.constant dense<0.000000e+00> : vector<64xf32>
    %286 = vector.multi_reduction <add>, %285, %cst_219 [1] : vector<64x16xf32> to vector<64xf32>
    %287 = vector.shape_cast %286 : vector<64xf32> to vector<64x1xf32>
    %288 = vector.broadcast %287 : vector<64x1xf32> to vector<64x16xf32>
    %289 = arith.divf %285, %288 : vector<64x16xf32>
    %cst_220 = arith.constant dense<0.000000e+00> : vector<64x32xf32>
    %290 = tpu.matmul %289, %274, %cst_220 {dimension_numbers = #tpu.dot_dimension_numbers<[1], [0], [0], [1], [0, 0, 1, 1], [], []>} : vector<64x16xf32>, vector<16x32xf32>, vector<64x32xf32> -> vector<64x32xf32>
    %291 = arith.mulf %290, %100 : vector<64x32xf32>
    %cst_221 = arith.constant dense<0.000000e+00> : vector<16x32xf32>
    %292 = tpu.matmul %102, %291, %cst_221 {dimension_numbers = #tpu.dot_dimension_numbers<[1], [0], [0], [1], [0, 0, 1, 1], [], []>} : vector<16x64xf32>, vector<64x32xf32>, vector<16x32xf32> -> vector<16x32xf32>
    %c1_222 = arith.constant 1 : index
    %c0_223 = arith.constant 0 : index
    %c0_224 = arith.constant 0 : index
    %293 = vector.load %arg36[%c1_222, %c0_223, %c0_224] : memref<2x32x32xf32, #tpu.memory_space<vmem>>, vector<1x32x32xf32>
    %294 = vector.shape_cast %293 : vector<1x32x32xf32> to vector<32x32xf32>
    %cst_225 = arith.constant dense<0.000000e+00> : vector<16x32xf32>
    %295 = tpu.matmul %292, %294, %cst_225 {dimension_numbers = #tpu.dot_dimension_numbers<[1], [0], [0], [1], [0, 0, 1, 1], [], []>} : vector<16x32xf32>, vector<32x32xf32>, vector<16x32xf32> -> vector<16x32xf32>
    %c1_226 = arith.constant 1 : index
    %c0_227 = arith.constant 0 : index
    %c0_228 = arith.constant 0 : index
    %296 = vector.load %arg37[%c1_226, %c0_227, %c0_228] : memref<2x1x32xf32, #tpu.memory_space<vmem>>, vector<1x1x32xf32>
    %297 = vector.shape_cast %296 : vector<1x1x32xf32> to vector<1x32xf32>
    %298 = vector.broadcast %297 : vector<1x32xf32> to vector<16x32xf32>
    %299 = arith.addf %295, %298 : vector<16x32xf32>
    %300 = arith.addf %253, %299 : vector<16x32xf32>
    %c1_229 = arith.constant 1 : index
    %c0_230 = arith.constant 0 : index
    %c0_231 = arith.constant 0 : index
    %c0_232 = arith.constant 0 : index
    %301 = vector.load %arg46[%c1_229, %c0_230, %c0_231, %c0_232] : memref<2x3x1x32xf32, #tpu.memory_space<vmem>>, vector<1x1x1x32xf32>
    %302 = vector.shape_cast %301 : vector<1x1x1x32xf32> to vector<1x32xf32>
    %c1_233 = arith.constant 1 : index
    %c0_234 = arith.constant 0 : index
    %c0_235 = arith.constant 0 : index
    %c0_236 = arith.constant 0 : index
    %303 = vector.load %arg47[%c1_233, %c0_234, %c0_235, %c0_236] : memref<2x3x1x32xf32, #tpu.memory_space<vmem>>, vector<1x1x1x32xf32>
    %304 = vector.shape_cast %303 : vector<1x1x1x32xf32> to vector<1x32xf32>
    %cst_237 = arith.constant dense<0.000000e+00> : vector<16xf32>
    %305 = vector.multi_reduction <add>, %300, %cst_237 [1] : vector<16x32xf32> to vector<16xf32>
    %306 = vector.shape_cast %305 : vector<16xf32> to vector<16x1xf32>
    %cst_238 = arith.constant 3.200000e+01 : f32
    %307 = vector.broadcast %cst_238 : f32 to vector<16x1xf32>
    %308 = arith.divf %306, %307 : vector<16x1xf32>
    %309 = vector.broadcast %308 : vector<16x1xf32> to vector<16x32xf32>
    %310 = arith.subf %300, %309 : vector<16x32xf32>
    %311 = arith.mulf %310, %310 : vector<16x32xf32>
    %cst_239 = arith.constant dense<0.000000e+00> : vector<16xf32>
    %312 = vector.multi_reduction <add>, %311, %cst_239 [1] : vector<16x32xf32> to vector<16xf32>
    %313 = vector.shape_cast %312 : vector<16xf32> to vector<16x1xf32>
    %cst_240 = arith.constant 3.200000e+01 : f32
    %314 = vector.broadcast %cst_240 : f32 to vector<16x1xf32>
    %315 = arith.divf %313, %314 : vector<16x1xf32>
    %cst_241 = arith.constant 9.99999974E-6 : f32
    %316 = vector.broadcast %cst_241 : f32 to vector<16x1xf32>
    %317 = arith.addf %315, %316 : vector<16x1xf32>
    %318 = math.rsqrt %317 : vector<16x1xf32>
    %319 = vector.broadcast %318 : vector<16x1xf32> to vector<16x32xf32>
    %320 = arith.mulf %310, %319 : vector<16x32xf32>
    %321 = vector.broadcast %302 : vector<1x32xf32> to vector<16x32xf32>
    %322 = arith.mulf %320, %321 : vector<16x32xf32>
    %323 = vector.broadcast %304 : vector<1x32xf32> to vector<16x32xf32>
    %324 = arith.addf %322, %323 : vector<16x32xf32>
    %c1_242 = arith.constant 1 : index
    %c0_243 = arith.constant 0 : index
    %c0_244 = arith.constant 0 : index
    %325 = vector.load %arg38[%c1_242, %c0_243, %c0_244] : memref<2x32x32xf32, #tpu.memory_space<vmem>>, vector<1x32x32xf32>
    %326 = vector.shape_cast %325 : vector<1x32x32xf32> to vector<32x32xf32>
    %cst_245 = arith.constant dense<0.000000e+00> : vector<16x32xf32>
    %327 = tpu.matmul %72, %326, %cst_245 {dimension_numbers = #tpu.dot_dimension_numbers<[1], [0], [0], [1], [0, 0, 1, 1], [], []>} : vector<16x32xf32>, vector<32x32xf32>, vector<16x32xf32> -> vector<16x32xf32>
    %c1_246 = arith.constant 1 : index
    %c0_247 = arith.constant 0 : index
    %c0_248 = arith.constant 0 : index
    %328 = vector.load %arg39[%c1_246, %c0_247, %c0_248] : memref<2x1x32xf32, #tpu.memory_space<vmem>>, vector<1x1x32xf32>
    %329 = vector.shape_cast %328 : vector<1x1x32xf32> to vector<1x32xf32>
    %330 = vector.broadcast %329 : vector<1x32xf32> to vector<16x32xf32>
    %331 = arith.addf %327, %330 : vector<16x32xf32>
    %c1_249 = arith.constant 1 : index
    %c0_250 = arith.constant 0 : index
    %c0_251 = arith.constant 0 : index
    %332 = vector.load %arg40[%c1_249, %c0_250, %c0_251] : memref<2x32x32xf32, #tpu.memory_space<vmem>>, vector<1x32x32xf32>
    %333 = vector.shape_cast %332 : vector<1x32x32xf32> to vector<32x32xf32>
    %cst_252 = arith.constant dense<0.000000e+00> : vector<16x32xf32>
    %334 = tpu.matmul %331, %333, %cst_252 {dimension_numbers = #tpu.dot_dimension_numbers<[1], [0], [0], [1], [0, 0, 1, 1], [], []>} : vector<16x32xf32>, vector<32x32xf32>, vector<16x32xf32> -> vector<16x32xf32>
    %c1_253 = arith.constant 1 : index
    %c0_254 = arith.constant 0 : index
    %c0_255 = arith.constant 0 : index
    %335 = vector.load %arg41[%c1_253, %c0_254, %c0_255] : memref<2x1x32xf32, #tpu.memory_space<vmem>>, vector<1x1x32xf32>
    %336 = vector.shape_cast %335 : vector<1x1x32xf32> to vector<1x32xf32>
    %337 = vector.broadcast %336 : vector<1x32xf32> to vector<16x32xf32>
    %338 = arith.addf %334, %337 : vector<16x32xf32>
    %339 = arith.addf %324, %338 : vector<16x32xf32>
    %c1_256 = arith.constant 1 : index
    %c1_257 = arith.constant 1 : index
    %c0_258 = arith.constant 0 : index
    %c0_259 = arith.constant 0 : index
    %340 = vector.load %arg46[%c1_256, %c1_257, %c0_258, %c0_259] : memref<2x3x1x32xf32, #tpu.memory_space<vmem>>, vector<1x1x1x32xf32>
    %341 = vector.shape_cast %340 : vector<1x1x1x32xf32> to vector<1x32xf32>
    %c1_260 = arith.constant 1 : index
    %c1_261 = arith.constant 1 : index
    %c0_262 = arith.constant 0 : index
    %c0_263 = arith.constant 0 : index
    %342 = vector.load %arg47[%c1_260, %c1_261, %c0_262, %c0_263] : memref<2x3x1x32xf32, #tpu.memory_space<vmem>>, vector<1x1x1x32xf32>
    %343 = vector.shape_cast %342 : vector<1x1x1x32xf32> to vector<1x32xf32>
    %cst_264 = arith.constant dense<0.000000e+00> : vector<16xf32>
    %344 = vector.multi_reduction <add>, %339, %cst_264 [1] : vector<16x32xf32> to vector<16xf32>
    %345 = vector.shape_cast %344 : vector<16xf32> to vector<16x1xf32>
    %cst_265 = arith.constant 3.200000e+01 : f32
    %346 = vector.broadcast %cst_265 : f32 to vector<16x1xf32>
    %347 = arith.divf %345, %346 : vector<16x1xf32>
    %348 = vector.broadcast %347 : vector<16x1xf32> to vector<16x32xf32>
    %349 = arith.subf %339, %348 : vector<16x32xf32>
    %350 = arith.mulf %349, %349 : vector<16x32xf32>
    %cst_266 = arith.constant dense<0.000000e+00> : vector<16xf32>
    %351 = vector.multi_reduction <add>, %350, %cst_266 [1] : vector<16x32xf32> to vector<16xf32>
    %352 = vector.shape_cast %351 : vector<16xf32> to vector<16x1xf32>
    %cst_267 = arith.constant 3.200000e+01 : f32
    %353 = vector.broadcast %cst_267 : f32 to vector<16x1xf32>
    %354 = arith.divf %352, %353 : vector<16x1xf32>
    %cst_268 = arith.constant 9.99999974E-6 : f32
    %355 = vector.broadcast %cst_268 : f32 to vector<16x1xf32>
    %356 = arith.addf %354, %355 : vector<16x1xf32>
    %357 = math.rsqrt %356 : vector<16x1xf32>
    %358 = vector.broadcast %357 : vector<16x1xf32> to vector<16x32xf32>
    %359 = arith.mulf %349, %358 : vector<16x32xf32>
    %360 = vector.broadcast %341 : vector<1x32xf32> to vector<16x32xf32>
    %361 = arith.mulf %359, %360 : vector<16x32xf32>
    %362 = vector.broadcast %343 : vector<1x32xf32> to vector<16x32xf32>
    %363 = arith.addf %361, %362 : vector<16x32xf32>
    %c1_269 = arith.constant 1 : index
    %c0_270 = arith.constant 0 : index
    %c0_271 = arith.constant 0 : index
    %364 = vector.load %arg42[%c1_269, %c0_270, %c0_271] : memref<2x32x64xf32, #tpu.memory_space<vmem>>, vector<1x32x64xf32>
    %365 = vector.shape_cast %364 : vector<1x32x64xf32> to vector<32x64xf32>
    %cst_272 = arith.constant dense<0.000000e+00> : vector<16x64xf32>
    %366 = tpu.matmul %363, %365, %cst_272 {dimension_numbers = #tpu.dot_dimension_numbers<[1], [0], [0], [1], [0, 0, 1, 1], [], []>} : vector<16x32xf32>, vector<32x64xf32>, vector<16x64xf32> -> vector<16x64xf32>
    %c1_273 = arith.constant 1 : index
    %c0_274 = arith.constant 0 : index
    %c0_275 = arith.constant 0 : index
    %367 = vector.load %arg43[%c1_273, %c0_274, %c0_275] : memref<2x1x64xf32, #tpu.memory_space<vmem>>, vector<1x1x64xf32>
    %368 = vector.shape_cast %367 : vector<1x1x64xf32> to vector<1x64xf32>
    %369 = vector.broadcast %368 : vector<1x64xf32> to vector<16x64xf32>
    %370 = arith.addf %366, %369 : vector<16x64xf32>
    %cst_276 = arith.constant 0.000000e+00 : f32
    %371 = vector.broadcast %cst_276 : f32 to vector<16x64xf32>
    %372 = arith.maximumf %370, %371 : vector<16x64xf32>
    %c1_277 = arith.constant 1 : index
    %c0_278 = arith.constant 0 : index
    %c0_279 = arith.constant 0 : index
    %373 = vector.load %arg44[%c1_277, %c0_278, %c0_279] : memref<2x64x32xf32, #tpu.memory_space<vmem>>, vector<1x64x32xf32>
    %374 = vector.shape_cast %373 : vector<1x64x32xf32> to vector<64x32xf32>
    %cst_280 = arith.constant dense<0.000000e+00> : vector<16x32xf32>
    %375 = tpu.matmul %372, %374, %cst_280 {dimension_numbers = #tpu.dot_dimension_numbers<[1], [0], [0], [1], [0, 0, 1, 1], [], []>} : vector<16x64xf32>, vector<64x32xf32>, vector<16x32xf32> -> vector<16x32xf32>
    %c1_281 = arith.constant 1 : index
    %c0_282 = arith.constant 0 : index
    %c0_283 = arith.constant 0 : index
    %376 = vector.load %arg45[%c1_281, %c0_282, %c0_283] : memref<2x1x32xf32, #tpu.memory_space<vmem>>, vector<1x1x32xf32>
    %377 = vector.shape_cast %376 : vector<1x1x32xf32> to vector<1x32xf32>
    %378 = vector.broadcast %377 : vector<1x32xf32> to vector<16x32xf32>
    %379 = arith.addf %375, %378 : vector<16x32xf32>
    %380 = arith.addf %363, %379 : vector<16x32xf32>
    %c1_284 = arith.constant 1 : index
    %c2_285 = arith.constant 2 : index
    %c0_286 = arith.constant 0 : index
    %c0_287 = arith.constant 0 : index
    %381 = vector.load %arg46[%c1_284, %c2_285, %c0_286, %c0_287] : memref<2x3x1x32xf32, #tpu.memory_space<vmem>>, vector<1x1x1x32xf32>
    %382 = vector.shape_cast %381 : vector<1x1x1x32xf32> to vector<1x32xf32>
    %c1_288 = arith.constant 1 : index
    %c2_289 = arith.constant 2 : index
    %c0_290 = arith.constant 0 : index
    %c0_291 = arith.constant 0 : index
    %383 = vector.load %arg47[%c1_288, %c2_289, %c0_290, %c0_291] : memref<2x3x1x32xf32, #tpu.memory_space<vmem>>, vector<1x1x1x32xf32>
    %384 = vector.shape_cast %383 : vector<1x1x1x32xf32> to vector<1x32xf32>
    %cst_292 = arith.constant dense<0.000000e+00> : vector<16xf32>
    %385 = vector.multi_reduction <add>, %380, %cst_292 [1] : vector<16x32xf32> to vector<16xf32>
    %386 = vector.shape_cast %385 : vector<16xf32> to vector<16x1xf32>
    %cst_293 = arith.constant 3.200000e+01 : f32
    %387 = vector.broadcast %cst_293 : f32 to vector<16x1xf32>
    %388 = arith.divf %386, %387 : vector<16x1xf32>
    %389 = vector.broadcast %388 : vector<16x1xf32> to vector<16x32xf32>
    %390 = arith.subf %380, %389 : vector<16x32xf32>
    %391 = arith.mulf %390, %390 : vector<16x32xf32>
    %cst_294 = arith.constant dense<0.000000e+00> : vector<16xf32>
    %392 = vector.multi_reduction <add>, %391, %cst_294 [1] : vector<16x32xf32> to vector<16xf32>
    %393 = vector.shape_cast %392 : vector<16xf32> to vector<16x1xf32>
    %cst_295 = arith.constant 3.200000e+01 : f32
    %394 = vector.broadcast %cst_295 : f32 to vector<16x1xf32>
    %395 = arith.divf %393, %394 : vector<16x1xf32>
    %cst_296 = arith.constant 9.99999974E-6 : f32
    %396 = vector.broadcast %cst_296 : f32 to vector<16x1xf32>
    %397 = arith.addf %395, %396 : vector<16x1xf32>
    %398 = math.rsqrt %397 : vector<16x1xf32>
    %399 = vector.broadcast %398 : vector<16x1xf32> to vector<16x32xf32>
    %400 = arith.mulf %390, %399 : vector<16x32xf32>
    %401 = vector.broadcast %382 : vector<1x32xf32> to vector<16x32xf32>
    %402 = arith.mulf %400, %401 : vector<16x32xf32>
    %403 = vector.broadcast %384 : vector<1x32xf32> to vector<16x32xf32>
    %404 = arith.addf %402, %403 : vector<16x32xf32>
    %c0_297 = arith.constant 0 : index
    %c0_298 = arith.constant 0 : index
    %405 = vector.load %arg48[%c0_297, %c0_298] : memref<32x24xf32, #tpu.memory_space<vmem>>, vector<32x24xf32>
    %cst_299 = arith.constant dense<0.000000e+00> : vector<16x24xf32>
    %406 = tpu.matmul %404, %405, %cst_299 {dimension_numbers = #tpu.dot_dimension_numbers<[1], [0], [0], [1], [0, 0, 1, 1], [], []>} : vector<16x32xf32>, vector<32x24xf32>, vector<16x24xf32> -> vector<16x24xf32>
    %c0_300 = arith.constant 0 : index
    %c0_301 = arith.constant 0 : index
    %407 = vector.load %arg49[%c0_300, %c0_301] : memref<1x24xf32, #tpu.memory_space<vmem>>, vector<1x24xf32>
    %408 = vector.broadcast %407 : vector<1x24xf32> to vector<16x24xf32>
    %409 = arith.addf %406, %408 : vector<16x24xf32>
    %410 = arith.subf %409, %80 : vector<16x24xf32>
    %411 = arith.mulf %410, %410 : vector<16x24xf32>
    %412 = arith.mulf %411, %87 : vector<16x24xf32>
    %cst_302 = arith.constant dense<0.000000e+00> : vector<16xf32>
    %413 = vector.multi_reduction <add>, %412, %cst_302 [1] : vector<16x24xf32> to vector<16xf32>
    %414 = vector.shape_cast %413 : vector<16xf32> to vector<16x1xf32>
    %cst_303 = arith.constant dense<0.000000e+00> : vector<16xf32>
    %415 = vector.multi_reduction <add>, %87, %cst_303 [1] : vector<16x24xf32> to vector<16xf32>
    %416 = vector.shape_cast %415 : vector<16xf32> to vector<16x1xf32>
    %c0_304 = arith.constant 0 : index
    %c0_305 = arith.constant 0 : index
    %417 = vector.load %arg10[%c0_304, %c0_305] : memref<2x16xf32, #tpu.memory_space<vmem>>, vector<2x16xf32>
    %cst_306 = arith.constant dense<0.000000e+00> : vector<2x1xf32>
    %418 = tpu.matmul %417, %414, %cst_306 {dimension_numbers = #tpu.dot_dimension_numbers<[1], [0], [0], [1], [0, 0, 1, 1], [], []>} : vector<2x16xf32>, vector<16x1xf32>, vector<2x1xf32> -> vector<2x1xf32>
    %cst_307 = arith.constant dense<0.000000e+00> : vector<2x1xf32>
    %419 = tpu.matmul %417, %416, %cst_307 {dimension_numbers = #tpu.dot_dimension_numbers<[1], [0], [0], [1], [0, 0, 1, 1], [], []>} : vector<2x16xf32>, vector<16x1xf32>, vector<2x1xf32> -> vector<2x1xf32>
    %cst_308 = arith.constant 8.000000e+00 : f32
    %420 = vector.broadcast %cst_308 : f32 to vector<2x1xf32>
    %421 = arith.mulf %419, %420 : vector<2x1xf32>
    %422 = arith.divf %418, %421 : vector<2x1xf32>
    %cst_309 = arith.constant dense<0.000000e+00> : vector<1xf32>
    %423 = vector.multi_reduction <add>, %422, %cst_309 [0] : vector<2x1xf32> to vector<1xf32>
    %424 = vector.shape_cast %423 : vector<1xf32> to vector<1x1xf32>
    %cst_310 = arith.constant 5.000000e-01 : f32
    %425 = vector.broadcast %cst_310 : f32 to vector<1x1xf32>
    %426 = arith.mulf %424, %425 : vector<1x1xf32>
    %c0_311 = arith.constant 0 : index
    %c0_312 = arith.constant 0 : index
    %427 = vector.load %arg50[%c0_311, %c0_312] : memref<1x1xf32, #tpu.memory_space<vmem>>, vector<1x1xf32>
    tpu.vector_store %arg50[%c0_311, %c0_312], %44 {strides = array<i32>} : memref<1x1xf32, #tpu.memory_space<vmem>>, vector<1x1xf32>,
    %c0_313 = arith.constant 0 : index
    %c0_314 = arith.constant 0 : index
    %428 = vector.load %arg51[%c0_313, %c0_314] : memref<1x1xf32, #tpu.memory_space<vmem>>, vector<1x1xf32>
    tpu.vector_store %arg51[%c0_313, %c0_314], %426 {strides = array<i32>} : memref<1x1xf32, #tpu.memory_space<vmem>>, vector<1x1xf32>,
    %429 = arith.addf %426, %44 : vector<1x1xf32>
    %c0_315 = arith.constant 0 : index
    %c0_316 = arith.constant 0 : index
    %430 = vector.load %arg52[%c0_315, %c0_316] : memref<1x1xf32, #tpu.memory_space<vmem>>, vector<1x1xf32>
    tpu.vector_store %arg52[%c0_315, %c0_316], %429 {strides = array<i32>} : memref<1x1xf32, #tpu.memory_space<vmem>>, vector<1x1xf32>,
    return
  }
}

</mosaic_0001>

<llo_original>
// kernel: forward.1
$region0: #{forward.1}
  #allocation0 [shape = 'u32[]', space=smem, size = 0x4, offset = 0x4, fixed_abs, tag = 'smem constant byte address 0x4 - core index']
  #allocation1 [shape = 'u32[72,128]{1,0:T(1,128)}', space=vmem, size = 0x9000, scoped, tag = 'internal scratch']
  %s0 = inlined_call_operand.smem [shape: u32[53], index: -1, kind: input, shape index: {}]
  %s1 = sld [smem:[%s0]]
  %s2 = scalar_lea.smem %s0, 1
  %s3 = sld [smem:[%s2]]
  %s4 = scalar_lea.smem %s0, 2
  %s5 = sld [smem:[%s4]]
  %s6 = scalar_lea.smem %s0, 3
  %s7 = sld [smem:[%s6]]
  %s8 = scalar_lea.smem %s0, 4
  %s9 = sld [smem:[%s8]]
  %s10 = scalar_lea.smem %s0, 5
  %s11 = sld [smem:[%s10]]
  %s12 = scalar_lea.smem %s0, 6
  %s13 = sld [smem:[%s12]]
  %s14 = scalar_lea.smem %s0, 7
  %s15 = sld [smem:[%s14]]
  %s16 = scalar_lea.smem %s0, 8
  %s17 = sld [smem:[%s16]]
  %s18 = scalar_lea.smem %s0, 9
  %s19 = sld [smem:[%s18]]
  %s20 = scalar_lea.smem %s0, 10
  %s21 = sld [smem:[%s20]]
  %s22 = scalar_lea.smem %s0, 11
  %s23 = sld [smem:[%s22]]
  %s24 = scalar_lea.smem %s0, 12
  %s25 = sld [smem:[%s24]]
  %s26 = scalar_lea.smem %s0, 13
  %s27 = sld [smem:[%s26]]
  %s28 = scalar_lea.smem %s0, 14
  %s29 = sld [smem:[%s28]]
  %s30 = scalar_lea.smem %s0, 15
  %s31 = sld [smem:[%s30]]
  %s32 = scalar_lea.smem %s0, 16
  %s33 = sld [smem:[%s32]]
  %s34 = scalar_lea.smem %s0, 17
  %s35 = sld [smem:[%s34]]
  %s36 = scalar_lea.smem %s0, 18
  %s37 = sld [smem:[%s36]]
  %s38 = scalar_lea.smem %s0, 19
  %s39 = sld [smem:[%s38]]
  %s40 = scalar_lea.smem %s0, 20
  %s41 = sld [smem:[%s40]]
  %s42 = scalar_lea.smem %s0, 21
  %s43 = sld [smem:[%s42]]
  %s44 = scalar_lea.smem %s0, 22
  %s45 = sld [smem:[%s44]]
  %s46 = scalar_lea.smem %s0, 23
  %s47 = sld [smem:[%s46]]
  %s48 = scalar_lea.smem %s0, 24
  %s49 = sld [smem:[%s48]]
  %s50 = scalar_lea.smem %s0, 25
  %s51 = sld [smem:[%s50]]
  %s52 = scalar_lea.smem %s0, 26
  %s53 = sld [smem:[%s52]]
  %s54 = scalar_lea.smem %s0, 27
  %s55 = sld [smem:[%s54]]
  %s56 = scalar_lea.smem %s0, 28
  %s57 = sld [smem:[%s56]]
  %s58 = scalar_lea.smem %s0, 29
  %s59 = sld [smem:[%s58]]
  %s60 = scalar_lea.smem %s0, 30
  %s61 = sld [smem:[%s60]]
  %s62 = scalar_lea.smem %s0, 31
  %s63 = sld [smem:[%s62]]
  %s64 = scalar_lea.smem %s0, 32
  %s65 = sld [smem:[%s64]]
  %s66 = scalar_lea.smem %s0, 33
  %s67 = sld [smem:[%s66]]
  %s68 = scalar_lea.smem %s0, 34
  %s69 = sld [smem:[%s68]]
  %s70 = scalar_lea.smem %s0, 35
  %s71 = sld [smem:[%s70]]
  %s72 = scalar_lea.smem %s0, 36
  %s73 = sld [smem:[%s72]]
  %s74 = scalar_lea.smem %s0, 37
  %s75 = sld [smem:[%s74]]
  %s76 = scalar_lea.smem %s0, 38
  %s77 = sld [smem:[%s76]]
  %s78 = scalar_lea.smem %s0, 39
  %s79 = sld [smem:[%s78]]
  %s80 = scalar_lea.smem %s0, 40
  %s81 = sld [smem:[%s80]]
  %s82 = scalar_lea.smem %s0, 41
  %s83 = sld [smem:[%s82]]
  %s84 = scalar_lea.smem %s0, 42
  %s85 = sld [smem:[%s84]]
  %s86 = scalar_lea.smem %s0, 43
  %s87 = sld [smem:[%s86]]
  %s88 = scalar_lea.smem %s0, 44
  %s89 = sld [smem:[%s88]]
  %s90 = scalar_lea.smem %s0, 45
  %s91 = sld [smem:[%s90]]
  %s92 = scalar_lea.smem %s0, 46
  %s93 = sld [smem:[%s92]]
  %s94 = scalar_lea.smem %s0, 47
  %s95 = sld [smem:[%s94]]
  %s96 = scalar_lea.smem %s0, 48
  %s97 = sld [smem:[%s96]]
  %s98 = scalar_lea.smem %s0, 49
  %s99 = sld [smem:[%s98]]
  %s100 = scalar_lea.smem %s0, 50
  %s101 = sld [smem:[%s100]]
  %s102 = scalar_lea.smem %s0, 51
  %s103 = sld [smem:[%s102]]
  %s104 = scalar_lea.smem %s0, 52
  %s105 = sld [smem:[%s104]]
  %106 = xla_tuple %s101, %s103, %s105
  %s107 = sld [smem:[#allocation0]]
  $region330: #{forward.1} parent=0
    _
  %s109 = ssub.s32 1, %s107
  %s110 = scalar_select 0, %s109, %s107
  $region1: #{forward.1} parent=0
    #allocation2 [shape = 'u8[32768]{0}', space=vmem, size = 0x8000, scoped, tag = 'input window, operand 4, single buffered']
    #allocation3 [shape = 's32[1]{0}', space=sflag, size = 0x4, scoped, tag = 'scoped memory for forward.1']
    #allocation4 [shape = 's32[1]{0}', space=sflag, size = 0x4, scoped, tag = 'scoped memory for forward.1']
    #allocation5 [shape = 'u8[32768]{0}', space=vmem, size = 0x8000, scoped, tag = 'input window, operand 5, single buffered']
    #allocation6 [shape = 's32[1]{0}', space=sflag, size = 0x4, scoped, tag = 'scoped memory for forward.1']
    #allocation7 [shape = 'u8[32768]{0}', space=vmem, size = 0x8000, scoped, tag = 'input window, operand 6, single buffered']
    #allocation8 [shape = 'u8[8192]{0}', space=vmem, size = 0x2000, scoped, tag = 'input window, operand 7, single buffered']
    #allocation9 [shape = 's32[1]{0}', space=sflag, size = 0x4, scoped, tag = 'scoped memory for forward.1']
    #allocation10 [shape = 'u8[8192]{0}', space=vmem, size = 0x2000, scoped, tag = 'input window, operand 8, single buffered']
    #allocation11 [shape = 'u8[8192]{0}', space=vmem, size = 0x2000, scoped, tag = 'input window, operand 9, single buffered']
    #allocation12 [shape = 's32[1]{0}', space=sflag, size = 0x4, scoped, tag = 'scoped memory for forward.1']
    #allocation13 [shape = 'u8[1024]{0}', space=vmem, size = 0x400, scoped, tag = 'input window, operand 10, single buffered']
    #allocation14 [shape = 'u8[4096]{0}', space=vmem, size = 0x1000, scoped, tag = 'input window, operand 11, single buffered']
    #allocation15 [shape = 's32[1]{0}', space=sflag, size = 0x4, scoped, tag = 'scoped memory for forward.1']
    #allocation16 [shape = 'u8[8192]{0}', space=vmem, size = 0x2000, scoped, tag = 'input window, operand 12, single buffered']
    #allocation17 [shape = 'u8[65536]{0}', space=vmem, size = 0x10000, scoped, tag = 'input window, operand 13, single buffered']
    #allocation18 [shape = 's32[1]{0}', space=sflag, size = 0x4, scoped, tag = 'scoped memory for forward.1']
    #allocation19 [shape = 'u8[8192]{0}', space=vmem, size = 0x2000, scoped, tag = 'input window, operand 14, single buffered']
    #allocation20 [shape = 'u8[65536]{0}', space=vmem, size = 0x10000, scoped, tag = 'input window, operand 15, single buffered']
    #allocation21 [shape = 's32[1]{0}', space=sflag, size = 0x4, scoped, tag = 'scoped memory for forward.1']
    #allocation22 [shape = 'u8[262144]{0}', space=vmem, size = 0x40000, scoped, tag = 'input window, operand 17, single buffered']
    #allocation23 [shape = 'u8[4096]{0}', space=vmem, size = 0x1000, scoped, tag = 'input window, operand 19, single buffered']
    #allocation24 [shape = 's32[1]{0}', space=sflag, size = 0x4, scoped, tag = 'scoped memory for forward.1']
    #allocation25 [shape = 'u8[32768]{0}', space=vmem, size = 0x8000, scoped, tag = 'input window, operand 20, single buffered']
    #allocation26 [shape = 'u8[16384]{0}', space=vmem, size = 0x4000, scoped, tag = 'input window, operand 21, single buffered']
    #allocation27 [shape = 's32[1]{0}', space=sflag, size = 0x4, scoped, tag = 'scoped memory for forward.1']
    #allocation28 [shape = 'u8[262144]{0}', space=vmem, size = 0x40000, scoped, tag = 'input window, operand 23, single buffered']
    #allocation29 [shape = 'u8[4096]{0}', space=vmem, size = 0x1000, scoped, tag = 'input window, operand 25, single buffered']
    #allocation30 [shape = 's32[1]{0}', space=sflag, size = 0x4, scoped, tag = 'scoped memory for forward.1']
    #allocation31 [shape = 'u8[8192]{0}', space=vmem, size = 0x2000, scoped, tag = 'input window, operand 26, single buffered']
    #allocation32 [shape = 'u8[12288]{0}', space=vmem, size = 0x3000, scoped, tag = 'input window, operand 28, single buffered']
    #allocation33 [shape = 's32[1]{0}', space=sflag, size = 0x4, scoped, tag = 'scoped memory for forward.1']
    #allocation34 [shape = 'u8[32768]{0}', space=vmem, size = 0x8000, scoped, tag = 'input window, operand 30, single buffered']
    #allocation35 [shape = 'u8[32768]{0}', space=vmem, size = 0x8000, scoped, tag = 'input window, operand 32, single buffered']
    #allocation36 [shape = 's32[1]{0}', space=sflag, size = 0x4, scoped, tag = 'scoped memory for forward.1']
    #allocation37 [shape = 'u8[32768]{0}', space=vmem, size = 0x8000, scoped, tag = 'input window, operand 34, single buffered']
    #allocation38 [shape = 'u8[32768]{0}', space=vmem, size = 0x8000, scoped, tag = 'input window, operand 36, single buffered']
    #allocation39 [shape = 's32[1]{0}', space=sflag, size = 0x4, scoped, tag = 'scoped memory for forward.1']
    #allocation40 [shape = 'u8[32768]{0}', space=vmem, size = 0x8000, scoped, tag = 'input window, operand 38, single buffered']
    #allocation41 [shape = 'u8[32768]{0}', space=vmem, size = 0x8000, scoped, tag = 'input window, operand 40, single buffered']
    #allocation42 [shape = 's32[1]{0}', space=sflag, size = 0x4, scoped, tag = 'scoped memory for forward.1']
    #allocation43 [shape = 'u8[512]{0}', space=vmem, size = 0x400, scoped, tag = 'output window, operand 0, single buffered']
    #allocation44 [shape = 'u8[512]{0}', space=vmem, size = 0x400, scoped, tag = 'output window, operand 1, single buffered']
    #allocation45 [shape = 's32[1]{0}', space=sflag, size = 0x4, scoped, tag = 'scoped memory for forward.1']
    #allocation46 [shape = 'u8[512]{0}', space=vmem, size = 0x400, scoped, tag = 'output window, operand 2, single buffered']
    %111 = vsyncpa [#allocation3], 0
    %112 = vsyncpa [#allocation6], 0
    %113 = vsyncpa [#allocation9], 0
    %114 = vsyncpa [#allocation12], 0
    %115 = vsyncpa [#allocation15], 0
    %116 = vsyncpa [#allocation18], 0
    %117 = vsyncpa [#allocation21], 0
    %118 = vsyncpa [#allocation24], 0
    %119 = vsyncpa [#allocation27], 0
    %120 = vsyncpa [#allocation30], 0
    %121 = vsyncpa [#allocation33], 0
    %122 = vsyncpa [#allocation36], 0
    %123 = vsyncpa [#allocation39], 0
    %124 = vsyncpa [#allocation42], 0
    %125 = vsyncpa [#allocation4], 0
    %126 = vsyncpa [#allocation45], 0
    // Predicated region
    $region2: #{forward.1} parent=1 // pred_check
      _
    $region3: #{forward.1} parent=1 // pred_check_branch
      %128 = sbr.rel (0) target = $region5
    $region4: #{forward.1} parent=1 // pred_region
      _
    $region5: #{forward.1} parent=1 // pred_fallthru
      _
    // Predicated region
    $region6: #{forward.1} parent=1 // pred_check
      _
    $region7: #{forward.1} parent=1 // pred_check_branch
      %130 = sbr.rel (0) target = $region9
    $region8: #{forward.1} parent=1 // pred_region
      _
    $region9: #{forward.1} parent=1 // pred_fallthru
      _
    // Predicated region
    $region10: #{forward.1} parent=1 // pred_check
      _
    $region11: #{forward.1} parent=1 // pred_check_branch
      %132 = sbr.rel (0) target = $region13
    $region12: #{forward.1} parent=1 // pred_region
      _
    $region13: #{forward.1} parent=1 // pred_fallthru
      _
    // Predicated region
    $region14: #{forward.1} parent=1 // pred_check
      _
    $region15: #{forward.1} parent=1 // pred_check_branch
      %134 = sbr.rel (0) target = $region17
    $region16: #{forward.1} parent=1 // pred_region
      _
    $region17: #{forward.1} parent=1 // pred_fallthru
      _
    // Predicated region
    $region18: #{forward.1} parent=1 // pred_check
      _
    $region19: #{forward.1} parent=1 // pred_check_branch
      %136 = sbr.rel (0) target = $region21
    $region20: #{forward.1} parent=1 // pred_region
      %138 = vsyncadd [#allocation3], 0
      %s139 = sshll.u32 %s9, 4
      %s140 = int_to_ptr.hbm [resolvable:$true] %s139
      %s141 = sshll.u32 [#allocation2], 4
      %s142 = int_to_ptr.vmem [resolvable:$true] %s141
      %147 = dma.hbm_to_vmem [thread:$0]  %s140, 1024, %s142, [#allocation3], 128, 128, 8
    $region21: #{forward.1} parent=1 // pred_fallthru
      _
    // Predicated region
    $region22: #{forward.1} parent=1 // pred_check
      _
    $region23: #{forward.1} parent=1 // pred_check_branch
      %149 = sbr.rel (0) target = $region25
    $region24: #{forward.1} parent=1 // pred_region
      %151 = vsyncadd [#allocation6], 0
      %s152 = sshll.u32 %s11, 4
      %s153 = int_to_ptr.hbm [resolvable:$true] %s152
      %s154 = sshll.u32 [#allocation5], 4
      %s155 = int_to_ptr.vmem [resolvable:$true] %s154
      %160 = dma.hbm_to_vmem [thread:$0]  %s153, 1024, %s155, [#allocation6], 128, 128, 8
    $region25: #{forward.1} parent=1 // pred_fallthru
      _
    // Predicated region
    $region26: #{forward.1} parent=1 // pred_check
      _
    $region27: #{forward.1} parent=1 // pred_check_branch
      %162 = sbr.rel (0) target = $region29
    $region28: #{forward.1} parent=1 // pred_region
      %164 = vsyncadd [#allocation6], 0
      %s165 = sshll.u32 %s13, 4
      %s166 = int_to_ptr.hbm [resolvable:$true] %s165
      %s167 = sshll.u32 [#allocation7], 4
      %s168 = int_to_ptr.vmem [resolvable:$true] %s167
      %173 = dma.hbm_to_vmem [thread:$0]  %s166, 1024, %s168, [#allocation6], 128, 128, 8
    $region29: #{forward.1} parent=1 // pred_fallthru
      _
    // Predicated region
    $region30: #{forward.1} parent=1 // pred_check
      _
    $region31: #{forward.1} parent=1 // pred_check_branch
      %175 = sbr.rel (0) target = $region33
    $region32: #{forward.1} parent=1 // pred_region
      %177 = vsyncadd [#allocation9], 0
      %s178 = sshll.u32 %s15, 4
      %s179 = int_to_ptr.hbm [resolvable:$true] %s178
      %s180 = sshll.u32 [#allocation8], 4
      %s181 = int_to_ptr.vmem [resolvable:$true] %s180
      %186 = dma.hbm_to_vmem [thread:$0]  %s179, 256, %s181, [#allocation9], 128, 128, 8
    $region33: #{forward.1} parent=1 // pred_fallthru
      _
    // Predicated region
    $region34: #{forward.1} parent=1 // pred_check
      _
    $region35: #{forward.1} parent=1 // pred_check_branch
      %188 = sbr.rel (0) target = $region37
    $region36: #{forward.1} parent=1 // pred_region
      %190 = vsyncadd [#allocation9], 0
      %s191 = sshll.u32 %s17, 4
      %s192 = int_to_ptr.hbm [resolvable:$true] %s191
      %s193 = sshll.u32 [#allocation10], 4
      %s194 = int_to_ptr.vmem [resolvable:$true] %s193
      %199 = dma.hbm_to_vmem [thread:$0]  %s192, 256, %s194, [#allocation9], 128, 128, 8
    $region37: #{forward.1} parent=1 // pred_fallthru
      _
    // Predicated region
    $region38: #{forward.1} parent=1 // pred_check
      _
    $region39: #{forward.1} parent=1 // pred_check_branch
      %201 = sbr.rel (0) target = $region41
    $region40: #{forward.1} parent=1 // pred_region
      %203 = vsyncadd [#allocation12], 0
      %s204 = sshll.u32 %s19, 4
      %s205 = int_to_ptr.hbm [resolvable:$true] %s204
      %s206 = sshll.u32 [#allocation11], 4
      %s207 = int_to_ptr.vmem [resolvable:$true] %s206
      %212 = dma.hbm_to_vmem [thread:$0]  %s205, 256, %s207, [#allocation12], 128, 128, 8
    $region41: #{forward.1} parent=1 // pred_fallthru
      _
    // Predicated region
    $region42: #{forward.1} parent=1 // pred_check
      _
    $region43: #{forward.1} parent=1 // pred_check_branch
      %214 = sbr.rel (0) target = $region45
    $region44: #{forward.1} parent=1 // pred_region
      %216 = vsyncadd [#allocation12], 0
      %s218 = sshll.u32 %s21, 4
      %s219 = int_to_ptr.hbm [resolvable:$true] %s218
      %s220 = sshll.u32 [#allocation13], 4
      %s221 = int_to_ptr.vmem [resolvable:$true] %s220
      %223 = dma.hbm_to_vmem [thread:$0]  %s219, 32, %s221, [#allocation12]
    $region45: #{forward.1} parent=1 // pred_fallthru
      _
    // Predicated region
    $region46: #{forward.1} parent=1 // pred_check
      _
    $region47: #{forward.1} parent=1 // pred_check_branch
      %225 = sbr.rel (0) target = $region49
    $region48: #{forward.1} parent=1 // pred_region
      %227 = vsyncadd [#allocation15], 0
      %s229 = sshll.u32 %s23, 4
      %s230 = int_to_ptr.hbm [resolvable:$true] %s229
      %s231 = sshll.u32 [#allocation14], 4
      %s232 = int_to_ptr.vmem [resolvable:$true] %s231
      %234 = dma.hbm_to_vmem [thread:$0]  %s230, 128, %s232, [#allocation15]
    $region49: #{forward.1} parent=1 // pred_fallthru
      _
    // Predicated region
    $region50: #{forward.1} parent=1 // pred_check
      _
    $region51: #{forward.1} parent=1 // pred_check_branch
      %236 = sbr.rel (0) target = $region53
    $region52: #{forward.1} parent=1 // pred_region
      %238 = vsyncadd [#allocation15], 0
      %s239 = sshll.u32 %s25, 4
      %s240 = int_to_ptr.hbm [resolvable:$true] %s239
      %s241 = sshll.u32 [#allocation16], 4
      %s242 = int_to_ptr.vmem [resolvable:$true] %s241
      %247 = dma.hbm_to_vmem [thread:$0]  %s240, 256, %s242, [#allocation15], 128, 128, 8
    $region53: #{forward.1} parent=1 // pred_fallthru
      _
    // Predicated region
    $region54: #{forward.1} parent=1 // pred_check
      _
    $region55: #{forward.1} parent=1 // pred_check_branch
      %249 = sbr.rel (0) target = $region57
    $region56: #{forward.1} parent=1 // pred_region
      %251 = vsyncadd [#allocation18], 0
      %s252 = sshll.u32 %s27, 4
      %s253 = int_to_ptr.hbm [resolvable:$true] %s252
      %s254 = sshll.u32 [#allocation17], 4
      %s255 = int_to_ptr.vmem [resolvable:$true] %s254
      %260 = dma.hbm_to_vmem [thread:$0]  %s253, 2048, %s255, [#allocation18], 128, 128, 8
    $region57: #{forward.1} parent=1 // pred_fallthru
      _
    // Predicated region
    $region58: #{forward.1} parent=1 // pred_check
      _
    $region59: #{forward.1} parent=1 // pred_check_branch
      %262 = sbr.rel (0) target = $region61
    $region60: #{forward.1} parent=1 // pred_region
      %264 = vsyncadd [#allocation18], 0
      %s265 = sshll.u32 %s29, 4
      %s266 = int_to_ptr.hbm [resolvable:$true] %s265
      %s267 = sshll.u32 [#allocation19], 4
      %s268 = int_to_ptr.vmem [resolvable:$true] %s267
      %273 = dma.hbm_to_vmem [thread:$0]  %s266, 256, %s268, [#allocation18], 128, 128, 8
    $region61: #{forward.1} parent=1 // pred_fallthru
      _
    // Predicated region
    $region62: #{forward.1} parent=1 // pred_check
      _
    $region63: #{forward.1} parent=1 // pred_check_branch
      %275 = sbr.rel (0) target = $region65
    $region64: #{forward.1} parent=1 // pred_region
      %277 = vsyncadd [#allocation21], 0
      %s278 = sshll.u32 %s31, 4
      %s279 = int_to_ptr.hbm [resolvable:$true] %s278
      %s280 = sshll.u32 [#allocation20], 4
      %s281 = int_to_ptr.vmem [resolvable:$true] %s280
      %286 = dma.hbm_to_vmem [thread:$0]  %s279, 2048, %s281, [#allocation21], 512, 512, 32
    $region65: #{forward.1} parent=1 // pred_fallthru
      _
    // Predicated region
    $region66: #{forward.1} parent=1 // pred_check
      _
    $region67: #{forward.1} parent=1 // pred_check_branch
      %288 = sbr.rel (0) target = $region69
    $region68: #{forward.1} parent=1 // pred_region
      _
    $region69: #{forward.1} parent=1 // pred_fallthru
      _
    // Predicated region
    $region70: #{forward.1} parent=1 // pred_check
      _
    $region71: #{forward.1} parent=1 // pred_check_branch
      %290 = sbr.rel (0) target = $region73
    $region72: #{forward.1} parent=1 // pred_region
      %292 = vsyncadd [#allocation21], 0
      %s293 = sshll.u32 %s35, 4
      %s294 = int_to_ptr.hbm [resolvable:$true] %s293
      %s295 = sshll.u32 [#allocation22], 4
      %s296 = int_to_ptr.vmem [resolvable:$true] %s295
      %301 = dma.hbm_to_vmem [thread:$0]  %s294, 8192, %s296, [#allocation21], 128, 128, 8
    $region73: #{forward.1} parent=1 // pred_fallthru
      _
    // Predicated region
    $region74: #{forward.1} parent=1 // pred_check
      _
    $region75: #{forward.1} parent=1 // pred_check_branch
      %303 = sbr.rel (0) target = $region77
    $region76: #{forward.1} parent=1 // pred_region
      _
    $region77: #{forward.1} parent=1 // pred_fallthru
      _
    // Predicated region
    $region78: #{forward.1} parent=1 // pred_check
      _
    $region79: #{forward.1} parent=1 // pred_check_branch
      %305 = sbr.rel (0) target = $region81
    $region80: #{forward.1} parent=1 // pred_region
      %307 = vsyncadd [#allocation24], 0
      %s309 = sshll.u32 %s39, 4
      %s310 = int_to_ptr.hbm [resolvable:$true] %s309
      %s311 = sshll.u32 [#allocation23], 4
      %s312 = int_to_ptr.vmem [resolvable:$true] %s311
      %314 = dma.hbm_to_vmem [thread:$0]  %s310, 128, %s312, [#allocation24]
    $region81: #{forward.1} parent=1 // pred_fallthru
      _
    // Predicated region
    $region82: #{forward.1} parent=1 // pred_check
      _
    $region83: #{forward.1} parent=1 // pred_check_branch
      %316 = sbr.rel (0) target = $region85
    $region84: #{forward.1} parent=1 // pred_region
      %318 = vsyncadd [#allocation24], 0
      %s319 = sshll.u32 %s41, 4
      %s320 = int_to_ptr.hbm [resolvable:$true] %s319
      %s321 = sshll.u32 [#allocation25], 4
      %s322 = int_to_ptr.vmem [resolvable:$true] %s321
      %327 = dma.hbm_to_vmem [thread:$0]  %s320, 1024, %s322, [#allocation24], 512, 512, 32
    $region85: #{forward.1} parent=1 // pred_fallthru
      _
    // Predicated region
    $region86: #{forward.1} parent=1 // pred_check
      _
    $region87: #{forward.1} parent=1 // pred_check_branch
      %329 = sbr.rel (0) target = $region89
    $region88: #{forward.1} parent=1 // pred_region
      %331 = vsyncadd [#allocation27], 0
      %s333 = sshll.u32 %s43, 4
      %s334 = int_to_ptr.hbm [resolvable:$true] %s333
      %s335 = sshll.u32 [#allocation26], 4
      %s336 = int_to_ptr.vmem [resolvable:$true] %s335
      %338 = dma.hbm_to_vmem [thread:$0]  %s334, 512, %s336, [#allocation27]
    $region89: #{forward.1} parent=1 // pred_fallthru
      _
    // Predicated region
    $region90: #{forward.1} parent=1 // pred_check
      _
    $region91: #{forward.1} parent=1 // pred_check_branch
      %340 = sbr.rel (0) target = $region93
    $region92: #{forward.1} parent=1 // pred_region
      _
    $region93: #{forward.1} parent=1 // pred_fallthru
      _
    // Predicated region
    $region94: #{forward.1} parent=1 // pred_check
      _
    $region95: #{forward.1} parent=1 // pred_check_branch
      %342 = sbr.rel (0) target = $region97
    $region96: #{forward.1} parent=1 // pred_region
      %344 = vsyncadd [#allocation27], 0
      %s345 = sshll.u32 %s47, 4
      %s346 = int_to_ptr.hbm [resolvable:$true] %s345
      %s347 = sshll.u32 [#allocation28], 4
      %s348 = int_to_ptr.vmem [resolvable:$true] %s347
      %353 = dma.hbm_to_vmem [thread:$0]  %s346, 8192, %s348, [#allocation27], 128, 128, 8
    $region97: #{forward.1} parent=1 // pred_fallthru
      _
    // Predicated region
    $region98: #{forward.1} parent=1 // pred_check
      _
    $region99: #{forward.1} parent=1 // pred_check_branch
      %355 = sbr.rel (0) target = $region101
    $region100: #{forward.1} parent=1 // pred_region
      _
    $region101: #{forward.1} parent=1 // pred_fallthru
      _
    // Predicated region
    $region102: #{forward.1} parent=1 // pred_check
      _
    $region103: #{forward.1} parent=1 // pred_check_branch
      %357 = sbr.rel (0) target = $region105
    $region104: #{forward.1} parent=1 // pred_region
      %359 = vsyncadd [#allocation30], 0
      %s361 = sshll.u32 %s51, 4
      %s362 = int_to_ptr.hbm [resolvable:$true] %s361
      %s363 = sshll.u32 [#allocation29], 4
      %s364 = int_to_ptr.vmem [resolvable:$true] %s363
      %366 = dma.hbm_to_vmem [thread:$0]  %s362, 128, %s364, [#allocation30]
    $region105: #{forward.1} parent=1 // pred_fallthru
      _
    // Predicated region
    $region106: #{forward.1} parent=1 // pred_check
      _
    $region107: #{forward.1} parent=1 // pred_check_branch
      %368 = sbr.rel (0) target = $region109
    $region108: #{forward.1} parent=1 // pred_region
      %370 = vsyncadd [#allocation30], 0
      %s371 = sshll.u32 %s53, 4
      %s372 = int_to_ptr.hbm [resolvable:$true] %s371
      %s373 = sshll.u32 [#allocation31], 4
      %s374 = int_to_ptr.vmem [resolvable:$true] %s373
      %379 = dma.hbm_to_vmem [thread:$0]  %s372, 256, %s374, [#allocation30], 128, 128, 8
    $region109: #{forward.1} parent=1 // pred_fallthru
      _
    // Predicated region
    $region110: #{forward.1} parent=1 // pred_check
      _
    $region111: #{forward.1} parent=1 // pred_check_branch
      %381 = sbr.rel (0) target = $region113
    $region112: #{forward.1} parent=1 // pred_region
      _
    $region113: #{forward.1} parent=1 // pred_fallthru
      _
    // Predicated region
    $region114: #{forward.1} parent=1 // pred_check
      _
    $region115: #{forward.1} parent=1 // pred_check_branch
      %383 = sbr.rel (0) target = $region117
    $region116: #{forward.1} parent=1 // pred_region
      %385 = vsyncadd [#allocation33], 0
      %s386 = sshll.u32 %s57, 4
      %s387 = int_to_ptr.hbm [resolvable:$true] %s386
      %s388 = sshll.u32 [#allocation32], 4
      %s389 = int_to_ptr.vmem [resolvable:$true] %s388
      %394 = dma.hbm_to_vmem [thread:$0]  %s387, 384, %s389, [#allocation33], 128, 128, 8
    $region117: #{forward.1} parent=1 // pred_fallthru
      _
    // Predicated region
    $region118: #{forward.1} parent=1 // pred_check
      _
    $region119: #{forward.1} parent=1 // pred_check_branch
      %396 = sbr.rel (0) target = $region121
    $region120: #{forward.1} parent=1 // pred_region
      _
    $region121: #{forward.1} parent=1 // pred_fallthru
      _
    // Predicated region
    $region122: #{forward.1} parent=1 // pred_check
      _
    $region123: #{forward.1} parent=1 // pred_check_branch
      %398 = sbr.rel (0) target = $region125
    $region124: #{forward.1} parent=1 // pred_region
      %400 = vsyncadd [#allocation33], 0
      %s401 = sshll.u32 %s61, 4
      %s402 = int_to_ptr.hbm [resolvable:$true] %s401
      %s403 = sshll.u32 [#allocation34], 4
      %s404 = int_to_ptr.vmem [resolvable:$true] %s403
      %409 = dma.hbm_to_vmem [thread:$0]  %s402, 1024, %s404, [#allocation33], 128, 128, 8
    $region125: #{forward.1} parent=1 // pred_fallthru
      _
    // Predicated region
    $region126: #{forward.1} parent=1 // pred_check
      _
    $region127: #{forward.1} parent=1 // pred_check_branch
      %411 = sbr.rel (0) target = $region129
    $region128: #{forward.1} parent=1 // pred_region
      _
    $region129: #{forward.1} parent=1 // pred_fallthru
      _
    // Predicated region
    $region130: #{forward.1} parent=1 // pred_check
      _
    $region131: #{forward.1} parent=1 // pred_check_branch
      %413 = sbr.rel (0) target = $region133
    $region132: #{forward.1} parent=1 // pred_region
      %415 = vsyncadd [#allocation36], 0
      %s416 = sshll.u32 %s65, 4
      %s417 = int_to_ptr.hbm [resolvable:$true] %s416
      %s418 = sshll.u32 [#allocation35], 4
      %s419 = int_to_ptr.vmem [resolvable:$true] %s418
      %424 = dma.hbm_to_vmem [thread:$0]  %s417, 1024, %s419, [#allocation36], 128, 128, 8
    $region133: #{forward.1} parent=1 // pred_fallthru
      _
    // Predicated region
    $region134: #{forward.1} parent=1 // pred_check
      _
    $region135: #{forward.1} parent=1 // pred_check_branch
      %426 = sbr.rel (0) target = $region137
    $region136: #{forward.1} parent=1 // pred_region
      _
    $region137: #{forward.1} parent=1 // pred_fallthru
      _
    // Predicated region
    $region138: #{forward.1} parent=1 // pred_check
      _
    $region139: #{forward.1} parent=1 // pred_check_branch
      %428 = sbr.rel (0) target = $region141
    $region140: #{forward.1} parent=1 // pred_region
      %430 = vsyncadd [#allocation36], 0
      %s431 = sshll.u32 %s69, 4
      %s432 = int_to_ptr.hbm [resolvable:$true] %s431
      %s433 = sshll.u32 [#allocation37], 4
      %s434 = int_to_ptr.vmem [resolvable:$true] %s433
      %439 = dma.hbm_to_vmem [thread:$0]  %s432, 1024, %s434, [#allocation36], 128, 128, 8
    $region141: #{forward.1} parent=1 // pred_fallthru
      _
    // Predicated region
    $region142: #{forward.1} parent=1 // pred_check
      _
    $region143: #{forward.1} parent=1 // pred_check_branch
      %441 = sbr.rel (0) target = $region145
    $region144: #{forward.1} parent=1 // pred_region
      _
    $region145: #{forward.1} parent=1 // pred_fallthru
      _
    // Predicated region
    $region146: #{forward.1} parent=1 // pred_check
      _
    $region147: #{forward.1} parent=1 // pred_check_branch
      %443 = sbr.rel (0) target = $region149
    $region148: #{forward.1} parent=1 // pred_region
      %445 = vsyncadd [#allocation39], 0
      %s446 = sshll.u32 %s73, 4
      %s447 = int_to_ptr.hbm [resolvable:$true] %s446
      %s448 = sshll.u32 [#allocation38], 4
      %s449 = int_to_ptr.vmem [resolvable:$true] %s448
      %454 = dma.hbm_to_vmem [thread:$0]  %s447, 1024, %s449, [#allocation39], 128, 128, 8
    $region149: #{forward.1} parent=1 // pred_fallthru
      _
    // Predicated region
    $region150: #{forward.1} parent=1 // pred_check
      _
    $region151: #{forward.1} parent=1 // pred_check_branch
      %456 = sbr.rel (0) target = $region153
    $region152: #{forward.1} parent=1 // pred_region
      _
    $region153: #{forward.1} parent=1 // pred_fallthru
      _
    // Predicated region
    $region154: #{forward.1} parent=1 // pred_check
      _
    $region155: #{forward.1} parent=1 // pred_check_branch
      %458 = sbr.rel (0) target = $region157
    $region156: #{forward.1} parent=1 // pred_region
      %460 = vsyncadd [#allocation39], 0
      %s461 = sshll.u32 %s77, 4
      %s462 = int_to_ptr.hbm [resolvable:$true] %s461
      %s463 = sshll.u32 [#allocation40], 4
      %s464 = int_to_ptr.vmem [resolvable:$true] %s463
      %469 = dma.hbm_to_vmem [thread:$0]  %s462, 1024, %s464, [#allocation39], 128, 128, 8
    $region157: #{forward.1} parent=1 // pred_fallthru
      _
    // Predicated region
    $region158: #{forward.1} parent=1 // pred_check
      _
    $region159: #{forward.1} parent=1 // pred_check_branch
      %471 = sbr.rel (0) target = $region161
    $region160: #{forward.1} parent=1 // pred_region
      _
    $region161: #{forward.1} parent=1 // pred_fallthru
      _
    // Predicated region
    $region162: #{forward.1} parent=1 // pred_check
      _
    $region163: #{forward.1} parent=1 // pred_check_branch
      %473 = sbr.rel (0) target = $region165
    $region164: #{forward.1} parent=1 // pred_region
      %475 = vsyncadd [#allocation42], 0
      %s476 = sshll.u32 %s81, 4
      %s477 = int_to_ptr.hbm [resolvable:$true] %s476
      %s478 = sshll.u32 [#allocation41], 4
      %s479 = int_to_ptr.vmem [resolvable:$true] %s478
      %484 = dma.hbm_to_vmem [thread:$0]  %s477, 1024, %s479, [#allocation42], 128, 128, 8
    $region165: #{forward.1} parent=1 // pred_fallthru
      _
    // Predicated region
    $region166: #{forward.1} parent=1 // pred_check
      _
    $region167: #{forward.1} parent=1 // pred_check_branch
      %486 = sbr.rel (0) target = $region169
    $region168: #{forward.1} parent=1 // pred_region
      _
    $region169: #{forward.1} parent=1 // pred_fallthru
      _
    // Predicated region
    $region170: #{forward.1} parent=1 // pred_check
      _
    $region171: #{forward.1} parent=1 // pred_check_branch
      %488 = sbr.rel (0) target = $region173
    $region172: #{forward.1} parent=1 // pred_region
      _
    $region173: #{forward.1} parent=1 // pred_fallthru
      _
    // Predicated region
    $region174: #{forward.1} parent=1 // pred_check
      _
    $region175: #{forward.1} parent=1 // pred_check_branch
      %490 = sbr.rel (0) target = $region177
    $region176: #{forward.1} parent=1 // pred_region
      _
    $region177: #{forward.1} parent=1 // pred_fallthru
      _
    // Predicated region
    $region178: #{forward.1} parent=1 // pred_check
      _
    $region179: #{forward.1} parent=1 // pred_check_branch
      %492 = sbr.rel (0) target = $region181
    $region180: #{forward.1} parent=1 // pred_region
      _
    $region181: #{forward.1} parent=1 // pred_fallthru
      _
    // Predicated region
    $region182: #{forward.1} parent=1 // pred_check
      _
    $region183: #{forward.1} parent=1 // pred_check_branch
      %494 = sbr.rel (0) target = $region185
    $region184: #{forward.1} parent=1 // pred_region
      _
    $region185: #{forward.1} parent=1 // pred_fallthru
      _
    // Predicated region
    $region186: #{forward.1} parent=1 // pred_check
      _
    $region187: #{forward.1} parent=1 // pred_check_branch
      %496 = sbr.rel (0) target = $region189
    $region188: #{forward.1} parent=1 // pred_region
      _
    $region189: #{forward.1} parent=1 // pred_fallthru
      _
    // Predicated region
    $region190: #{forward.1} parent=1 // pred_check
      _
    $region191: #{forward.1} parent=1 // pred_check_branch
      %498 = sbr.rel (0) target = $region193
    $region192: #{forward.1} parent=1 // pred_region
      _
    $region193: #{forward.1} parent=1 // pred_fallthru
      _
    // Predicated region
    $region194: #{forward.1} parent=1 // pred_check
      _
    $region195: #{forward.1} parent=1 // pred_check_branch
      %500 = sbr.rel (0) target = $region197
    $region196: #{forward.1} parent=1 // pred_region
      _
    $region197: #{forward.1} parent=1 // pred_fallthru
      _
    // Predicated region
    $region198: #{forward.1} parent=1 // pred_check
      _
    $region199: #{forward.1} parent=1 // pred_check_branch
      %502 = sbr.rel (0) target = $region201
    $region200: #{forward.1} parent=1 // pred_region
      _
    $region201: #{forward.1} parent=1 // pred_fallthru
      _
    // Predicated region
    $region202: #{forward.1} parent=1 // pred_check
      _
    $region203: #{forward.1} parent=1 // pred_check_branch
      %504 = sbr.rel (0) target = $region205
    $region204: #{forward.1} parent=1 // pred_region
      %506 = dma.done [#allocation3], 1024
    $region205: #{forward.1} parent=1 // pred_fallthru
      _
    // Predicated region
    $region206: #{forward.1} parent=1 // pred_check
      _
    $region207: #{forward.1} parent=1 // pred_check_branch
      %508 = sbr.rel (0) target = $region209
    $region208: #{forward.1} parent=1 // pred_region
      %510 = dma.done [#allocation6], 1024
    $region209: #{forward.1} parent=1 // pred_fallthru
      _
    // Predicated region
    $region210: #{forward.1} parent=1 // pred_check
      _
    $region211: #{forward.1} parent=1 // pred_check_branch
      %512 = sbr.rel (0) target = $region213
    $region212: #{forward.1} parent=1 // pred_region
      %514 = dma.done [#allocation6], 1024
    $region213: #{forward.1} parent=1 // pred_fallthru
      _
    // Predicated region
    $region214: #{forward.1} parent=1 // pred_check
      _
    $region215: #{forward.1} parent=1 // pred_check_branch
      %516 = sbr.rel (0) target = $region217
    $region216: #{forward.1} parent=1 // pred_region
      %518 = dma.done [#allocation9], 256
    $region217: #{forward.1} parent=1 // pred_fallthru
      _
    // Predicated region
    $region218: #{forward.1} parent=1 // pred_check
      _
    $region219: #{forward.1} parent=1 // pred_check_branch
      %520 = sbr.rel (0) target = $region221
    $region220: #{forward.1} parent=1 // pred_region
      %522 = dma.done [#allocation9], 256
    $region221: #{forward.1} parent=1 // pred_fallthru
      _
    // Predicated region
    $region222: #{forward.1} parent=1 // pred_check
      _
    $region223: #{forward.1} parent=1 // pred_check_branch
      %524 = sbr.rel (0) target = $region225
    $region224: #{forward.1} parent=1 // pred_region
      %526 = dma.done [#allocation12], 256
    $region225: #{forward.1} parent=1 // pred_fallthru
      _
    // Predicated region
    $region226: #{forward.1} parent=1 // pred_check
      _
    $region227: #{forward.1} parent=1 // pred_check_branch
      %528 = sbr.rel (0) target = $region229
    $region228: #{forward.1} parent=1 // pred_region
      %530 = dma.done [#allocation12], 32
    $region229: #{forward.1} parent=1 // pred_fallthru
      _
    // Predicated region
    $region230: #{forward.1} parent=1 // pred_check
      _
    $region231: #{forward.1} parent=1 // pred_check_branch
      %532 = sbr.rel (0) target = $region233
    $region232: #{forward.1} parent=1 // pred_region
      %534 = dma.done [#allocation15], 128
    $region233: #{forward.1} parent=1 // pred_fallthru
      _
    // Predicated region
    $region234: #{forward.1} parent=1 // pred_check
      _
    $region235: #{forward.1} parent=1 // pred_check_branch
      %536 = sbr.rel (0) target = $region237
    $region236: #{forward.1} parent=1 // pred_region
      %538 = dma.done [#allocation15], 256
    $region237: #{forward.1} parent=1 // pred_fallthru
      _
    // Predicated region
    $region238: #{forward.1} parent=1 // pred_check
      _
    $region239: #{forward.1} parent=1 // pred_check_branch
      %540 = sbr.rel (0) target = $region241
    $region240: #{forward.1} parent=1 // pred_region
      %542 = dma.done [#allocation18], 2048
    $region241: #{forward.1} parent=1 // pred_fallthru
      _
    // Predicated region
    $region242: #{forward.1} parent=1 // pred_check
      _
    $region243: #{forward.1} parent=1 // pred_check_branch
      %544 = sbr.rel (0) target = $region245
    $region244: #{forward.1} parent=1 // pred_region
      %546 = dma.done [#allocation18], 256
    $region245: #{forward.1} parent=1 // pred_fallthru
      _
    // Predicated region
    $region246: #{forward.1} parent=1 // pred_check
      _
    $region247: #{forward.1} parent=1 // pred_check_branch
      %548 = sbr.rel (0) target = $region249
    $region248: #{forward.1} parent=1 // pred_region
      %550 = dma.done [#allocation21], 2048
    $region249: #{forward.1} parent=1 // pred_fallthru
      _
    // Predicated region
    $region250: #{forward.1} parent=1 // pred_check
      _
    $region251: #{forward.1} parent=1 // pred_check_branch
      %552 = sbr.rel (0) target = $region253
    $region252: #{forward.1} parent=1 // pred_region
      %554 = dma.done [#allocation21], 8192
    $region253: #{forward.1} parent=1 // pred_fallthru
      _
    // Predicated region
    $region254: #{forward.1} parent=1 // pred_check
      _
    $region255: #{forward.1} parent=1 // pred_check_branch
      %556 = sbr.rel (0) target = $region257
    $region256: #{forward.1} parent=1 // pred_region
      %558 = dma.done [#allocation24], 128
    $region257: #{forward.1} parent=1 // pred_fallthru
      _
    // Predicated region
    $region258: #{forward.1} parent=1 // pred_check
      _
    $region259: #{forward.1} parent=1 // pred_check_branch
      %560 = sbr.rel (0) target = $region261
    $region260: #{forward.1} parent=1 // pred_region
      %562 = dma.done [#allocation24], 1024
    $region261: #{forward.1} parent=1 // pred_fallthru
      _
    // Predicated region
    $region262: #{forward.1} parent=1 // pred_check
      _
    $region263: #{forward.1} parent=1 // pred_check_branch
      %564 = sbr.rel (0) target = $region265
    $region264: #{forward.1} parent=1 // pred_region
      %566 = dma.done [#allocation27], 512
    $region265: #{forward.1} parent=1 // pred_fallthru
      _
    // Predicated region
    $region266: #{forward.1} parent=1 // pred_check
      _
    $region267: #{forward.1} parent=1 // pred_check_branch
      %568 = sbr.rel (0) target = $region269
    $region268: #{forward.1} parent=1 // pred_region
      %570 = dma.done [#allocation27], 8192
    $region269: #{forward.1} parent=1 // pred_fallthru
      _
    // Predicated region
    $region270: #{forward.1} parent=1 // pred_check
      _
    $region271: #{forward.1} parent=1 // pred_check_branch
      %572 = sbr.rel (0) target = $region273
    $region272: #{forward.1} parent=1 // pred_region
      %574 = dma.done [#allocation30], 128
    $region273: #{forward.1} parent=1 // pred_fallthru
      _
    // Predicated region
    $region274: #{forward.1} parent=1 // pred_check
      _
    $region275: #{forward.1} parent=1 // pred_check_branch
      %576 = sbr.rel (0) target = $region277
    $region276: #{forward.1} parent=1 // pred_region
      %578 = dma.done [#allocation30], 256
    $region277: #{forward.1} parent=1 // pred_fallthru
      _
    // Predicated region
    $region278: #{forward.1} parent=1 // pred_check
      _
    $region279: #{forward.1} parent=1 // pred_check_branch
      %580 = sbr.rel (0) target = $region281
    $region280: #{forward.1} parent=1 // pred_region
      %582 = dma.done [#allocation33], 384
    $region281: #{forward.1} parent=1 // pred_fallthru
      _
    // Predicated region
    $region282: #{forward.1} parent=1 // pred_check
      _
    $region283: #{forward.1} parent=1 // pred_check_branch
      %584 = sbr.rel (0) target = $region285
    $region284: #{forward.1} parent=1 // pred_region
      %586 = dma.done [#allocation33], 1024
    $region285: #{forward.1} parent=1 // pred_fallthru
      _
    // Predicated region
    $region286: #{forward.1} parent=1 // pred_check
      _
    $region287: #{forward.1} parent=1 // pred_check_branch
      %588 = sbr.rel (0) target = $region289
    $region288: #{forward.1} parent=1 // pred_region
      %590 = dma.done [#allocation36], 1024
    $region289: #{forward.1} parent=1 // pred_fallthru
      _
    // Predicated region
    $region290: #{forward.1} parent=1 // pred_check
      _
    $region291: #{forward.1} parent=1 // pred_check_branch
      %592 = sbr.rel (0) target = $region293
    $region292: #{forward.1} parent=1 // pred_region
      %594 = dma.done [#allocation36], 1024
    $region293: #{forward.1} parent=1 // pred_fallthru
      _
    // Predicated region
    $region294: #{forward.1} parent=1 // pred_check
      _
    $region295: #{forward.1} parent=1 // pred_check_branch
      %596 = sbr.rel (0) target = $region297
    $region296: #{forward.1} parent=1 // pred_region
      %598 = dma.done [#allocation39], 1024
    $region297: #{forward.1} parent=1 // pred_fallthru
      _
    // Predicated region
    $region298: #{forward.1} parent=1 // pred_check
      _
    $region299: #{forward.1} parent=1 // pred_check_branch
      %600 = sbr.rel (0) target = $region301
    $region300: #{forward.1} parent=1 // pred_region
      %602 = dma.done [#allocation39], 1024
    $region301: #{forward.1} parent=1 // pred_fallthru
      _
    // Predicated region
    $region302: #{forward.1} parent=1 // pred_check
      _
    $region303: #{forward.1} parent=1 // pred_check_branch
      %604 = sbr.rel (0) target = $region305
    $region304: #{forward.1} parent=1 // pred_region
      %606 = dma.done [#allocation42], 1024
    $region305: #{forward.1} parent=1 // pred_fallthru
      _
    %v607 = vld [vmem:[%s1] sm:$0x3]
    %v608 = vld [vmem:[%s3] sm:$0x3]
    %v609 = vld [vmem:[#allocation20] sm:$0xff]
    %v610 = vld [vmem:[#allocation20 + $0x8] sm:$0xff]
    %v611 = vld [vmem:[#allocation20 + $0x10] sm:$0xff]
    %v612 = vld [vmem:[#allocation20 + $0x18] sm:$0xff]
    %v613 = vld [vmem:[#allocation20 + $0x20] sm:$0xff]
    %v614 = vld [vmem:[#allocation20 + $0x28] sm:$0xff]
    %v615 = vld [vmem:[#allocation20 + $0x30] sm:$0xff]
    %v616 = vld [vmem:[#allocation20 + $0x38] sm:$0xff]
    %v617 = vld [vmem:[#allocation20 + $0x40] sm:$0xff]
    %v618 = vld [vmem:[#allocation20 + $0x48] sm:$0xff]
    %v619 = vld [vmem:[#allocation20 + $0x50] sm:$0xff]
    %v620 = vld [vmem:[#allocation20 + $0x58] sm:$0xff]
    %v621 = vld [vmem:[#allocation20 + $0x60] sm:$0xff]
    %v622 = vld [vmem:[#allocation20 + $0x68] sm:$0xff]
    %v623 = vld [vmem:[#allocation20 + $0x70] sm:$0xff]
    %v624 = vld [vmem:[#allocation20 + $0x78] sm:$0xff]
    %v625 = vld [vmem:[%s33] sm:$0xf]
    %v627 = vperm.slane %v625, 0
    %v628 = vperm.slane %v625, 1
    %v629 = vperm.slane %v625, 2
    %v630 = vperm.slane %v625, 3
    %vm635 = vcmask 261120
    %v637 = vsel %vm635, %v607, 0
    %639 = vmatpush.msra.mxu0 0.0
    %640 = vmatpush.msra.mxu0 0.0
    %641 = vmatpush.msra.mxu0 0.0
    %642 = vmatpush.msra.mxu0 0.0
    %643 = vmatpush.msra.mxu0 0.0
    %644 = vmatpush.msra.mxu0 0.0
    %645 = vmatpush.msra.mxu0 0.0
    %646 = vmatpush.msra.mxu0 0.0
    %647 = vmatpush.msra.mxu0 0.0
    %648 = vmatpush.msra.mxu0 0.0
    %649 = vmatpush.msra.mxu0 0.0
    %650 = vmatpush.msra.mxu0 0.0
    %651 = vmatpush.msra.mxu0 %v621
    %652 = vmatpush.msra.mxu0 %v617
    %653 = vmatpush.msra.mxu0 %v613
    %654 = vmatpush.msra.mxu0 %v609
    %655 = vmatmul.f32.gmra.mxu0 %v637
    %v656 = vpop.f32.mrf.mxu0
    %v657 = vadd.f32 %v627, %v656
    %658 = vdwg.mxu0
    %659 = vmatpush.msra.mxu0 0.0
    %660 = vmatpush.msra.mxu0 0.0
    %661 = vmatpush.msra.mxu0 0.0
    %662 = vmatpush.msra.mxu0 0.0
    %663 = vmatpush.msra.mxu0 0.0
    %664 = vmatpush.msra.mxu0 0.0
    %665 = vmatpush.msra.mxu0 0.0
    %666 = vmatpush.msra.mxu0 0.0
    %667 = vmatpush.msra.mxu0 0.0
    %668 = vmatpush.msra.mxu0 0.0
    %669 = vmatpush.msra.mxu0 0.0
    %670 = vmatpush.msra.mxu0 0.0
    %671 = vmatpush.msra.mxu0 %v622
    %672 = vmatpush.msra.mxu0 %v618
    %673 = vmatpush.msra.mxu0 %v614
    %674 = vmatpush.msra.mxu0 %v610
    %675 = vmatmul.f32.gmra.mxu0 %v637
    %v676 = vpop.f32.mrf.mxu0
    %v677 = vadd.f32 %v628, %v676
    %678 = vdwg.mxu0
    %679 = vmatpush.msra.mxu0 0.0
    %680 = vmatpush.msra.mxu0 0.0
    %681 = vmatpush.msra.mxu0 0.0
    %682 = vmatpush.msra.mxu0 0.0
    %683 = vmatpush.msra.mxu0 0.0
    %684 = vmatpush.msra.mxu0 0.0
    %685 = vmatpush.msra.mxu0 0.0
    %686 = vmatpush.msra.mxu0 0.0
    %687 = vmatpush.msra.mxu0 0.0
    %688 = vmatpush.msra.mxu0 0.0
    %689 = vmatpush.msra.mxu0 0.0
    %690 = vmatpush.msra.mxu0 0.0
    %691 = vmatpush.msra.mxu0 %v623
    %692 = vmatpush.msra.mxu0 %v619
    %693 = vmatpush.msra.mxu0 %v615
    %694 = vmatpush.msra.mxu0 %v611
    %695 = vmatmul.f32.gmra.mxu0 %v637
    %v696 = vpop.f32.mrf.mxu0
    %v697 = vadd.f32 %v629, %v696
    %698 = vdwg.mxu0
    %699 = vmatpush.msra.mxu0 0.0
    %700 = vmatpush.msra.mxu0 0.0
    %701 = vmatpush.msra.mxu0 0.0
    %702 = vmatpush.msra.mxu0 0.0
    %703 = vmatpush.msra.mxu0 0.0
    %704 = vmatpush.msra.mxu0 0.0
    %705 = vmatpush.msra.mxu0 0.0
    %706 = vmatpush.msra.mxu0 0.0
    %707 = vmatpush.msra.mxu0 0.0
    %708 = vmatpush.msra.mxu0 0.0
    %709 = vmatpush.msra.mxu0 0.0
    %710 = vmatpush.msra.mxu0 0.0
    %711 = vmatpush.msra.mxu0 %v624
    %712 = vmatpush.msra.mxu0 %v620
    %713 = vmatpush.msra.mxu0 %v616
    %714 = vmatpush.msra.mxu0 %v612
    %715 = vmatmul.f32.gmra.mxu0 %v637
    %v716 = vpop.f32.mrf.mxu0
    %v717 = vadd.f32 %v630, %v716
    %718 = vdwg.mxu0
    %v719 = vmax.f32 %v657, 0.0
    %v720 = vmax.f32 %v677, 0.0
    %v721 = vmax.f32 %v697, 0.0
    %v722 = vmax.f32 %v717, 0.0
    %v723 = vld [vmem:[#allocation22] sm:$0xff]
    %v724 = vld [vmem:[#allocation22 + $0x8] sm:$0xff]
    %v725 = vld [vmem:[#allocation22 + $0x10] sm:$0xff]
    %v726 = vld [vmem:[#allocation22 + $0x18] sm:$0xff]
    %v727 = vld [vmem:[#allocation22 + $0x20] sm:$0xff]
    %v728 = vld [vmem:[#allocation22 + $0x28] sm:$0xff]
    %v729 = vld [vmem:[#allocation22 + $0x30] sm:$0xff]
    %v730 = vld [vmem:[#allocation22 + $0x38] sm:$0xff]
    %v731 = vld [vmem:[#allocation22 + $0x40] sm:$0xff]
    %v732 = vld [vmem:[#allocation22 + $0x48] sm:$0xff]
    %v733 = vld [vmem:[#allocation22 + $0x50] sm:$0xff]
    %v734 = vld [vmem:[#allocation22 + $0x58] sm:$0xff]
    %v735 = vld [vmem:[#allocation22 + $0x60] sm:$0xff]
    %v736 = vld [vmem:[#allocation22 + $0x68] sm:$0xff]
    %v737 = vld [vmem:[#allocation22 + $0x70] sm:$0xff]
    %v738 = vld [vmem:[#allocation22 + $0x78] sm:$0xff]
    %v739 = vld [vmem:[#allocation22 + $0x80] sm:$0xff]
    %v740 = vld [vmem:[#allocation22 + $0x88] sm:$0xff]
    %v741 = vld [vmem:[#allocation22 + $0x90] sm:$0xff]
    %v742 = vld [vmem:[#allocation22 + $0x98] sm:$0xff]
    %v743 = vld [vmem:[#allocation22 + $0xa0] sm:$0xff]
    %v744 = vld [vmem:[#allocation22 + $0xa8] sm:$0xff]
    %v745 = vld [vmem:[#allocation22 + $0xb0] sm:$0xff]
    %v746 = vld [vmem:[#allocation22 + $0xb8] sm:$0xff]
    %v747 = vld [vmem:[#allocation22 + $0xc0] sm:$0xff]
    %v748 = vld [vmem:[#allocation22 + $0xc8] sm:$0xff]
    %v749 = vld [vmem:[#allocation22 + $0xd0] sm:$0xff]
    %v750 = vld [vmem:[#allocation22 + $0xd8] sm:$0xff]
    %v751 = vld [vmem:[#allocation22 + $0xe0] sm:$0xff]
    %v752 = vld [vmem:[#allocation22 + $0xe8] sm:$0xff]
    %v753 = vld [vmem:[#allocation22 + $0xf0] sm:$0xff]
    %v754 = vld [vmem:[#allocation22 + $0xf8] sm:$0xff]
    %v755 = vld [vmem:[#allocation22 + $0x100] sm:$0xff]
    %v756 = vld [vmem:[#allocation22 + $0x108] sm:$0xff]
    %v757 = vld [vmem:[#allocation22 + $0x110] sm:$0xff]
    %v758 = vld [vmem:[#allocation22 + $0x118] sm:$0xff]
    %v759 = vld [vmem:[#allocation22 + $0x120] sm:$0xff]
    %v760 = vld [vmem:[#allocation22 + $0x128] sm:$0xff]
    %v761 = vld [vmem:[#allocation22 + $0x130] sm:$0xff]
    %v762 = vld [vmem:[#allocation22 + $0x138] sm:$0xff]
    %v763 = vld [vmem:[#allocation22 + $0x140] sm:$0xff]
    %v764 = vld [vmem:[#allocation22 + $0x148] sm:$0xff]
    %v765 = vld [vmem:[#allocation22 + $0x150] sm:$0xff]
    %v766 = vld [vmem:[#allocation22 + $0x158] sm:$0xff]
    %v767 = vld [vmem:[#allocation22 + $0x160] sm:$0xff]
    %v768 = vld [vmem:[#allocation22 + $0x168] sm:$0xff]
    %v769 = vld [vmem:[#allocation22 + $0x170] sm:$0xff]
    %v770 = vld [vmem:[#allocation22 + $0x178] sm:$0xff]
    %v771 = vld [vmem:[#allocation22 + $0x180] sm:$0xff]
    %v772 = vld [vmem:[#allocation22 + $0x188] sm:$0xff]
    %v773 = vld [vmem:[#allocation22 + $0x190] sm:$0xff]
    %v774 = vld [vmem:[#allocation22 + $0x198] sm:$0xff]
    %v775 = vld [vmem:[#allocation22 + $0x1a0] sm:$0xff]
    %v776 = vld [vmem:[#allocation22 + $0x1a8] sm:$0xff]
    %v777 = vld [vmem:[#allocation22 + $0x1b0] sm:$0xff]
    %v778 = vld [vmem:[#allocation22 + $0x1b8] sm:$0xff]
    %v779 = vld [vmem:[#allocation22 + $0x1c0] sm:$0xff]
    %v780 = vld [vmem:[#allocation22 + $0x1c8] sm:$0xff]
    %v781 = vld [vmem:[#allocation22 + $0x1d0] sm:$0xff]
    %v782 = vld [vmem:[#allocation22 + $0x1d8] sm:$0xff]
    %v783 = vld [vmem:[#allocation22 + $0x1e0] sm:$0xff]
    %v784 = vld [vmem:[#allocation22 + $0x1e8] sm:$0xff]
    %v785 = vld [vmem:[#allocation22 + $0x1f0] sm:$0xff]
    %v786 = vld [vmem:[#allocation22 + $0x1f8] sm:$0xff]
    %v787 = vld [vmem:[%s37] sm:$0x1]
    %v789 = vperm.slane %v787, 0
    %791 = vmatpush.msra.mxu0 %v738
    %792 = vmatpush.msra.mxu0 %v737
    %793 = vmatpush.msra.mxu0 %v736
    %794 = vmatpush.msra.mxu0 %v735
    %795 = vmatpush.msra.mxu0 %v734
    %796 = vmatpush.msra.mxu0 %v733
    %797 = vmatpush.msra.mxu0 %v732
    %798 = vmatpush.msra.mxu0 %v731
    %799 = vmatpush.msra.mxu0 %v730
    %800 = vmatpush.msra.mxu0 %v729
    %801 = vmatpush.msra.mxu0 %v728
    %802 = vmatpush.msra.mxu0 %v727
    %803 = vmatpush.msra.mxu0 %v726
    %804 = vmatpush.msra.mxu0 %v725
    %805 = vmatpush.msra.mxu0 %v724
    %806 = vmatpush.msra.mxu0 %v723
    %807 = vmatmul.f32.gmra.mxu0 %v719
    %v808 = vpop.f32.mrf.mxu0
    %v809 = vadd.f32 %v789, %v808
    %810 = vdwg.mxu0
    %811 = vmatpush.msra.mxu0 %v754
    %812 = vmatpush.msra.mxu0 %v753
    %813 = vmatpush.msra.mxu0 %v752
    %814 = vmatpush.msra.mxu0 %v751
    %815 = vmatpush.msra.mxu0 %v750
    %816 = vmatpush.msra.mxu0 %v749
    %817 = vmatpush.msra.mxu0 %v748
    %818 = vmatpush.msra.mxu0 %v747
    %819 = vmatpush.msra.mxu0 %v746
    %820 = vmatpush.msra.mxu0 %v745
    %821 = vmatpush.msra.mxu0 %v744
    %822 = vmatpush.msra.mxu0 %v743
    %823 = vmatpush.msra.mxu0 %v742
    %824 = vmatpush.msra.mxu0 %v741
    %825 = vmatpush.msra.mxu0 %v740
    %826 = vmatpush.msra.mxu0 %v739
    %827 = vmatmul.f32.gmra.mxu0 %v720
    %v828 = vpop.f32.mrf.mxu0
    %v829 = vadd.f32 %v809, %v828
    %830 = vdwg.mxu0
    %831 = vmatpush.msra.mxu0 %v770
    %832 = vmatpush.msra.mxu0 %v769
    %833 = vmatpush.msra.mxu0 %v768
    %834 = vmatpush.msra.mxu0 %v767
    %835 = vmatpush.msra.mxu0 %v766
    %836 = vmatpush.msra.mxu0 %v765
    %837 = vmatpush.msra.mxu0 %v764
    %838 = vmatpush.msra.mxu0 %v763
    %839 = vmatpush.msra.mxu0 %v762
    %840 = vmatpush.msra.mxu0 %v761
    %841 = vmatpush.msra.mxu0 %v760
    %842 = vmatpush.msra.mxu0 %v759
    %843 = vmatpush.msra.mxu0 %v758
    %844 = vmatpush.msra.mxu0 %v757
    %845 = vmatpush.msra.mxu0 %v756
    %846 = vmatpush.msra.mxu0 %v755
    %847 = vmatmul.f32.gmra.mxu0 %v721
    %v848 = vpop.f32.mrf.mxu0
    %v849 = vadd.f32 %v829, %v848
    %850 = vdwg.mxu0
    %851 = vmatpush.msra.mxu0 %v786
    %852 = vmatpush.msra.mxu0 %v785
    %853 = vmatpush.msra.mxu0 %v784
    %854 = vmatpush.msra.mxu0 %v783
    %855 = vmatpush.msra.mxu0 %v782
    %856 = vmatpush.msra.mxu0 %v781
    %857 = vmatpush.msra.mxu0 %v780
    %858 = vmatpush.msra.mxu0 %v779
    %859 = vmatpush.msra.mxu0 %v778
    %860 = vmatpush.msra.mxu0 %v777
    %861 = vmatpush.msra.mxu0 %v776
    %862 = vmatpush.msra.mxu0 %v775
    %863 = vmatpush.msra.mxu0 %v774
    %864 = vmatpush.msra.mxu0 %v773
    %865 = vmatpush.msra.mxu0 %v772
    %866 = vmatpush.msra.mxu0 %v771
    %867 = vmatmul.f32.gmra.mxu0 %v722
    %v868 = vpop.f32.mrf.mxu0
    %v869 = vadd.f32 %v849, %v868
    %870 = vdwg.mxu0
    %v871 = vld [vmem:[#allocation23] sm:$0xff]
    %vm872 = vcmask 130048
    %v874 = vsel %vm872, %v869, 0
    %v877 = vsel %vm872, %v871, 0
    %879 = vmatpush.xpose.msra.mxu0 0.0
    %880 = vmatpush.xpose.msra.mxu0 0.0
    %881 = vmatpush.xpose.msra.mxu0 0.0
    %882 = vmatpush.xpose.msra.mxu0 0.0
    %883 = vmatpush.xpose.msra.mxu0 0.0
    %884 = vmatpush.xpose.msra.mxu0 0.0
    %885 = vmatpush.xpose.msra.mxu0 0.0
    %886 = vmatpush.xpose.msra.mxu0 0.0
    %887 = vmatpush.xpose.msra.mxu0 0.0
    %888 = vmatpush.xpose.msra.mxu0 0.0
    %889 = vmatpush.xpose.msra.mxu0 0.0
    %890 = vmatpush.xpose.msra.mxu0 0.0
    %891 = vmatpush.xpose.msra.mxu0 0.0
    %892 = vmatpush.xpose.msra.mxu0 0.0
    %893 = vmatpush.xpose.msra.mxu0 0.0
    %894 = vmatpush.xpose.msra.mxu0 %v877
    %895 = vmatmul.f32.gmra.mxu0 %v874
    %v896 = vpop.f32.mrf.mxu0
    %v897 = vadd.f32 0.0, %v896
    %898 = vdwg.mxu0
    %v899 = vmul.f32 %v871, %v871
    %v901 = vsel %vm872, 1.0, 0
    %v904 = vsel %vm872, %v899, 0
    %906 = vmatpush.xpose.msra.mxu0 0.0
    %907 = vmatpush.xpose.msra.mxu0 0.0
    %908 = vmatpush.xpose.msra.mxu0 0.0
    %909 = vmatpush.xpose.msra.mxu0 0.0
    %910 = vmatpush.xpose.msra.mxu0 0.0
    %911 = vmatpush.xpose.msra.mxu0 0.0
    %912 = vmatpush.xpose.msra.mxu0 0.0
    %913 = vmatpush.xpose.msra.mxu0 0.0
    %914 = vmatpush.xpose.msra.mxu0 0.0
    %915 = vmatpush.xpose.msra.mxu0 0.0
    %916 = vmatpush.xpose.msra.mxu0 0.0
    %917 = vmatpush.xpose.msra.mxu0 0.0
    %918 = vmatpush.xpose.msra.mxu0 0.0
    %919 = vmatpush.xpose.msra.mxu0 0.0
    %920 = vmatpush.xpose.msra.mxu0 0.0
    %921 = vmatpush.xpose.msra.mxu0 %v904
    %922 = vmatmul.f32.gmra.mxu0 %v901
    %v923 = vpop.f32.mrf.mxu0
    %v924 = vadd.f32 0.0, %v923
    %925 = vdwg.mxu0
    %v926 = vmul.f32 %v897, 2.0
    %v927 = vsub.f32 %v924, %v926
    %vm928 = vcmask 58368
    %v929 = vsel %vm928, %v927, inf
    %930 = vmin.xlane.f32.xlu0 %v929
    %v931 = vpop.xlane.xlu0 %930
    %v932 = vlaneseq
    %v933 = vand.u32 %v932, 127
    %v934 = vcvt.s32.f32 %v933
    %vm935 = vcmp.le.f32.partialorder %v927, %v931
    %v936 = vsel %vm935, %v934, 8.0
    %v937 = vsel %vm928, %v936, inf
    %938 = vmin.xlane.f32.xlu0 %v937
    %v939 = vpop.xlane.xlu0 %938
    %vm940 = vcmp.eq.f32.partialorder %v934, %v939
    %v941 = vsel %vm940, 1, 0
    %v942 = vcvt.s32.f32 %v941
    %vm943 = vcmask 64512
    %v945 = vsel %vm943, %v942, 0
    %947 = vmatpush.msra.mxu0 0.0
    %948 = vmatpush.msra.mxu0 0.0
    %949 = vmatpush.msra.mxu0 0.0
    %950 = vmatpush.msra.mxu0 0.0
    %951 = vmatpush.msra.mxu0 0.0
    %952 = vmatpush.msra.mxu0 0.0
    %953 = vmatpush.msra.mxu0 0.0
    %954 = vmatpush.msra.mxu0 0.0
    %955 = vmatpush.msra.mxu0 0.0
    %956 = vmatpush.msra.mxu0 0.0
    %957 = vmatpush.msra.mxu0 0.0
    %958 = vmatpush.msra.mxu0 0.0
    %959 = vmatpush.msra.mxu0 0.0
    %960 = vmatpush.msra.mxu0 0.0
    %961 = vmatpush.msra.mxu0 0.0
    %962 = vmatpush.msra.mxu0 %v871
    %963 = vmatmul.f32.gmra.mxu0 %v945
    %v964 = vpop.f32.mrf.mxu0
    %v965 = vadd.f32 0.0, %v964
    %966 = vdwg.mxu0
    %v967 = vsub.f32 %v965, %v869
    %v968 = vmul.f32 %v967, %v967
    %vm969 = vcmask 123904
    %v970 = vsel %vm969, %v968, 0.0
    %971 = vadd.xlane.f32.xlu0 %v970
    %v972 = vpop.xlane.xlu0 %971
    %vm973 = vcmask 1041408
    %v974 = vsel %vm973, %v972, 0.0
    %v975 = vrot.slane %v974, 4
    %v976 = vadd.f32 %v974, %v975
    %v977 = vrot.slane %v976, 2
    %v978 = vadd.f32 %v976, %v977
    %v979 = vrot.slane %v978, 1
    %v980 = vadd.f32 %v978, %v979
    %v981 = vmul.f32 %v980, 0.0390625
    %v982 = vld [vmem:[#allocation25] sm:$0xff]
    %v983 = vld [vmem:[#allocation25 + $0x8] sm:$0xff]
    %v984 = vld [vmem:[#allocation25 + $0x10] sm:$0xff]
    %v985 = vld [vmem:[#allocation25 + $0x18] sm:$0xff]
    %v986 = vld [vmem:[#allocation25 + $0x20] sm:$0xff]
    %v987 = vld [vmem:[#allocation25 + $0x28] sm:$0xff]
    %v988 = vld [vmem:[#allocation25 + $0x30] sm:$0xff]
    %v989 = vld [vmem:[#allocation25 + $0x38] sm:$0xff]
    %v990 = vld [vmem:[#allocation26] sm:$0xff]
    %v991 = vld [vmem:[#allocation26 + $0x8] sm:$0xff]
    %v992 = vld [vmem:[#allocation26 + $0x10] sm:$0xff]
    %v993 = vld [vmem:[#allocation26 + $0x18] sm:$0xff]
    %v995 = vsel %vm943, %v608, 0
    %997 = vmatpush.msra.mxu0 0.0
    %998 = vmatpush.msra.mxu0 0.0
    %999 = vmatpush.msra.mxu0 0.0
    %1000 = vmatpush.msra.mxu0 0.0
    %1001 = vmatpush.msra.mxu0 0.0
    %1002 = vmatpush.msra.mxu0 0.0
    %1003 = vmatpush.msra.mxu0 0.0
    %1004 = vmatpush.msra.mxu0 0.0
    %1005 = vmatpush.msra.mxu0 0.0
    %1006 = vmatpush.msra.mxu0 0.0
    %1007 = vmatpush.msra.mxu0 0.0
    %1008 = vmatpush.msra.mxu0 0.0
    %1009 = vmatpush.msra.mxu0 0.0
    %1010 = vmatpush.msra.mxu0 0.0
    %1011 = vmatpush.msra.mxu0 0.0
    %1012 = vmatpush.msra.mxu0 %v990
    %1013 = vmatmul.f32.gmra.mxu0 %v995
    %v1014 = vpop.f32.mrf.mxu0
    %v1015 = vadd.f32 0.0, %v1014
    %1016 = vdwg.mxu0
    %1017 = vmatpush.msra.mxu0 0.0
    %1018 = vmatpush.msra.mxu0 0.0
    %1019 = vmatpush.msra.mxu0 0.0
    %1020 = vmatpush.msra.mxu0 0.0
    %1021 = vmatpush.msra.mxu0 0.0
    %1022 = vmatpush.msra.mxu0 0.0
    %1023 = vmatpush.msra.mxu0 0.0
    %1024 = vmatpush.msra.mxu0 0.0
    %1025 = vmatpush.msra.mxu0 0.0
    %1026 = vmatpush.msra.mxu0 0.0
    %1027 = vmatpush.msra.mxu0 0.0
    %1028 = vmatpush.msra.mxu0 0.0
    %1029 = vmatpush.msra.mxu0 0.0
    %1030 = vmatpush.msra.mxu0 0.0
    %1031 = vmatpush.msra.mxu0 0.0
    %1032 = vmatpush.msra.mxu0 %v991
    %1033 = vmatmul.f32.gmra.mxu0 %v995
    %v1034 = vpop.f32.mrf.mxu0
    %v1035 = vadd.f32 0.0, %v1034
    %1036 = vdwg.mxu0
    %1037 = vmatpush.msra.mxu0 0.0
    %1038 = vmatpush.msra.mxu0 0.0
    %1039 = vmatpush.msra.mxu0 0.0
    %1040 = vmatpush.msra.mxu0 0.0
    %1041 = vmatpush.msra.mxu0 0.0
    %1042 = vmatpush.msra.mxu0 0.0
    %1043 = vmatpush.msra.mxu0 0.0
    %1044 = vmatpush.msra.mxu0 0.0
    %1045 = vmatpush.msra.mxu0 0.0
    %1046 = vmatpush.msra.mxu0 0.0
    %1047 = vmatpush.msra.mxu0 0.0
    %1048 = vmatpush.msra.mxu0 0.0
    %1049 = vmatpush.msra.mxu0 0.0
    %1050 = vmatpush.msra.mxu0 0.0
    %1051 = vmatpush.msra.mxu0 0.0
    %1052 = vmatpush.msra.mxu0 %v992
    %1053 = vmatmul.f32.gmra.mxu0 %v995
    %v1054 = vpop.f32.mrf.mxu0
    %v1055 = vadd.f32 0.0, %v1054
    %1056 = vdwg.mxu0
    %1057 = vmatpush.msra.mxu0 0.0
    %1058 = vmatpush.msra.mxu0 0.0
    %1059 = vmatpush.msra.mxu0 0.0
    %1060 = vmatpush.msra.mxu0 0.0
    %1061 = vmatpush.msra.mxu0 0.0
    %1062 = vmatpush.msra.mxu0 0.0
    %1063 = vmatpush.msra.mxu0 0.0
    %1064 = vmatpush.msra.mxu0 0.0
    %1065 = vmatpush.msra.mxu0 0.0
    %1066 = vmatpush.msra.mxu0 0.0
    %1067 = vmatpush.msra.mxu0 0.0
    %1068 = vmatpush.msra.mxu0 0.0
    %1069 = vmatpush.msra.mxu0 0.0
    %1070 = vmatpush.msra.mxu0 0.0
    %1071 = vmatpush.msra.mxu0 0.0
    %1072 = vmatpush.msra.mxu0 %v993
    %1073 = vmatmul.f32.gmra.mxu0 %v995
    %v1074 = vpop.f32.mrf.mxu0
    %v1075 = vadd.f32 0.0, %v1074
    %1076 = vdwg.mxu0
    %v1078 = vsel %vm872, %v965, 0
    %1080 = vmatpush.msra.mxu0 0.0
    %1081 = vmatpush.msra.mxu0 0.0
    %1082 = vmatpush.msra.mxu0 0.0
    %1083 = vmatpush.msra.mxu0 0.0
    %1084 = vmatpush.msra.mxu0 0.0
    %1085 = vmatpush.msra.mxu0 0.0
    %1086 = vmatpush.msra.mxu0 0.0
    %1087 = vmatpush.msra.mxu0 0.0
    %1088 = vmatpush.msra.mxu0 0.0
    %1089 = vmatpush.msra.mxu0 0.0
    %1090 = vmatpush.msra.mxu0 0.0
    %1091 = vmatpush.msra.mxu0 0.0
    %1092 = vmatpush.msra.mxu0 0.0
    %1093 = vmatpush.msra.mxu0 0.0
    %1094 = vmatpush.msra.mxu0 %v986
    %1095 = vmatpush.msra.mxu0 %v982
    %1096 = vmatmul.f32.gmra.mxu0 %v1078
    %v1097 = vpop.f32.mrf.mxu0
    %v1098 = vadd.f32 %v1015, %v1097
    %1099 = vdwg.mxu0
    %1100 = vmatpush.msra.mxu0 0.0
    %1101 = vmatpush.msra.mxu0 0.0
    %1102 = vmatpush.msra.mxu0 0.0
    %1103 = vmatpush.msra.mxu0 0.0
    %1104 = vmatpush.msra.mxu0 0.0
    %1105 = vmatpush.msra.mxu0 0.0
    %1106 = vmatpush.msra.mxu0 0.0
    %1107 = vmatpush.msra.mxu0 0.0
    %1108 = vmatpush.msra.mxu0 0.0
    %1109 = vmatpush.msra.mxu0 0.0
    %1110 = vmatpush.msra.mxu0 0.0
    %1111 = vmatpush.msra.mxu0 0.0
    %1112 = vmatpush.msra.mxu0 0.0
    %1113 = vmatpush.msra.mxu0 0.0
    %1114 = vmatpush.msra.mxu0 %v987
    %1115 = vmatpush.msra.mxu0 %v983
    %1116 = vmatmul.f32.gmra.mxu0 %v1078
    %v1117 = vpop.f32.mrf.mxu0
    %v1118 = vadd.f32 %v1035, %v1117
    %1119 = vdwg.mxu0
    %1120 = vmatpush.msra.mxu0 0.0
    %1121 = vmatpush.msra.mxu0 0.0
    %1122 = vmatpush.msra.mxu0 0.0
    %1123 = vmatpush.msra.mxu0 0.0
    %1124 = vmatpush.msra.mxu0 0.0
    %1125 = vmatpush.msra.mxu0 0.0
    %1126 = vmatpush.msra.mxu0 0.0
    %1127 = vmatpush.msra.mxu0 0.0
    %1128 = vmatpush.msra.mxu0 0.0
    %1129 = vmatpush.msra.mxu0 0.0
    %1130 = vmatpush.msra.mxu0 0.0
    %1131 = vmatpush.msra.mxu0 0.0
    %1132 = vmatpush.msra.mxu0 0.0
    %1133 = vmatpush.msra.mxu0 0.0
    %1134 = vmatpush.msra.mxu0 %v988
    %1135 = vmatpush.msra.mxu0 %v984
    %1136 = vmatmul.f32.gmra.mxu0 %v1078
    %v1137 = vpop.f32.mrf.mxu0
    %v1138 = vadd.f32 %v1055, %v1137
    %1139 = vdwg.mxu0
    %1140 = vmatpush.msra.mxu0 0.0
    %1141 = vmatpush.msra.mxu0 0.0
    %1142 = vmatpush.msra.mxu0 0.0
    %1143 = vmatpush.msra.mxu0 0.0
    %1144 = vmatpush.msra.mxu0 0.0
    %1145 = vmatpush.msra.mxu0 0.0
    %1146 = vmatpush.msra.mxu0 0.0
    %1147 = vmatpush.msra.mxu0 0.0
    %1148 = vmatpush.msra.mxu0 0.0
    %1149 = vmatpush.msra.mxu0 0.0
    %1150 = vmatpush.msra.mxu0 0.0
    %1151 = vmatpush.msra.mxu0 0.0
    %1152 = vmatpush.msra.mxu0 0.0
    %1153 = vmatpush.msra.mxu0 0.0
    %1154 = vmatpush.msra.mxu0 %v989
    %1155 = vmatpush.msra.mxu0 %v985
    %1156 = vmatmul.f32.gmra.mxu0 %v1078
    %v1157 = vpop.f32.mrf.mxu0
    %v1158 = vadd.f32 %v1075, %v1157
    %1159 = vdwg.mxu0
    %v1160 = vld [vmem:[%s45] sm:$0xf]
    %v1162 = vperm.slane %v1160, 0
    %v1163 = vperm.slane %v1160, 1
    %v1164 = vperm.slane %v1160, 2
    %v1165 = vperm.slane %v1160, 3
    %v1170 = vadd.f32 %v1098, %v1162
    %v1171 = vadd.f32 %v1118, %v1163
    %v1172 = vadd.f32 %v1138, %v1164
    %v1173 = vadd.f32 %v1158, %v1165
    %v1174 = vmax.f32 %v1170, 0.0
    %v1175 = vmax.f32 %v1171, 0.0
    %v1176 = vmax.f32 %v1172, 0.0
    %v1177 = vmax.f32 %v1173, 0.0
    %v1178 = vld [vmem:[#allocation28] sm:$0xff]
    %v1179 = vld [vmem:[#allocation28 + $0x8] sm:$0xff]
    %v1180 = vld [vmem:[#allocation28 + $0x10] sm:$0xff]
    %v1181 = vld [vmem:[#allocation28 + $0x18] sm:$0xff]
    %v1182 = vld [vmem:[#allocation28 + $0x20] sm:$0xff]
    %v1183 = vld [vmem:[#allocation28 + $0x28] sm:$0xff]
    %v1184 = vld [vmem:[#allocation28 + $0x30] sm:$0xff]
    %v1185 = vld [vmem:[#allocation28 + $0x38] sm:$0xff]
    %v1186 = vld [vmem:[#allocation28 + $0x40] sm:$0xff]
    %v1187 = vld [vmem:[#allocation28 + $0x48] sm:$0xff]
    %v1188 = vld [vmem:[#allocation28 + $0x50] sm:$0xff]
    %v1189 = vld [vmem:[#allocation28 + $0x58] sm:$0xff]
    %v1190 = vld [vmem:[#allocation28 + $0x60] sm:$0xff]
    %v1191 = vld [vmem:[#allocation28 + $0x68] sm:$0xff]
    %v1192 = vld [vmem:[#allocation28 + $0x70] sm:$0xff]
    %v1193 = vld [vmem:[#allocation28 + $0x78] sm:$0xff]
    %v1194 = vld [vmem:[#allocation28 + $0x80] sm:$0xff]
    %v1195 = vld [vmem:[#allocation28 + $0x88] sm:$0xff]
    %v1196 = vld [vmem:[#allocation28 + $0x90] sm:$0xff]
    %v1197 = vld [vmem:[#allocation28 + $0x98] sm:$0xff]
    %v1198 = vld [vmem:[#allocation28 + $0xa0] sm:$0xff]
    %v1199 = vld [vmem:[#allocation28 + $0xa8] sm:$0xff]
    %v1200 = vld [vmem:[#allocation28 + $0xb0] sm:$0xff]
    %v1201 = vld [vmem:[#allocation28 + $0xb8] sm:$0xff]
    %v1202 = vld [vmem:[#allocation28 + $0xc0] sm:$0xff]
    %v1203 = vld [vmem:[#allocation28 + $0xc8] sm:$0xff]
    %v1204 = vld [vmem:[#allocation28 + $0xd0] sm:$0xff]
    %v1205 = vld [vmem:[#allocation28 + $0xd8] sm:$0xff]
    %v1206 = vld [vmem:[#allocation28 + $0xe0] sm:$0xff]
    %v1207 = vld [vmem:[#allocation28 + $0xe8] sm:$0xff]
    %v1208 = vld [vmem:[#allocation28 + $0xf0] sm:$0xff]
    %v1209 = vld [vmem:[#allocation28 + $0xf8] sm:$0xff]
    %v1210 = vld [vmem:[#allocation28 + $0x100] sm:$0xff]
    %v1211 = vld [vmem:[#allocation28 + $0x108] sm:$0xff]
    %v1212 = vld [vmem:[#allocation28 + $0x110] sm:$0xff]
    %v1213 = vld [vmem:[#allocation28 + $0x118] sm:$0xff]
    %v1214 = vld [vmem:[#allocation28 + $0x120] sm:$0xff]
    %v1215 = vld [vmem:[#allocation28 + $0x128] sm:$0xff]
    %v1216 = vld [vmem:[#allocation28 + $0x130] sm:$0xff]
    %v1217 = vld [vmem:[#allocation28 + $0x138] sm:$0xff]
    %v1218 = vld [vmem:[#allocation28 + $0x140] sm:$0xff]
    %v1219 = vld [vmem:[#allocation28 + $0x148] sm:$0xff]
    %v1220 = vld [vmem:[#allocation28 + $0x150] sm:$0xff]
    %v1221 = vld [vmem:[#allocation28 + $0x158] sm:$0xff]
    %v1222 = vld [vmem:[#allocation28 + $0x160] sm:$0xff]
    %v1223 = vld [vmem:[#allocation28 + $0x168] sm:$0xff]
    %v1224 = vld [vmem:[#allocation28 + $0x170] sm:$0xff]
    %v1225 = vld [vmem:[#allocation28 + $0x178] sm:$0xff]
    %v1226 = vld [vmem:[#allocation28 + $0x180] sm:$0xff]
    %v1227 = vld [vmem:[#allocation28 + $0x188] sm:$0xff]
    %v1228 = vld [vmem:[#allocation28 + $0x190] sm:$0xff]
    %v1229 = vld [vmem:[#allocation28 + $0x198] sm:$0xff]
    %v1230 = vld [vmem:[#allocation28 + $0x1a0] sm:$0xff]
    %v1231 = vld [vmem:[#allocation28 + $0x1a8] sm:$0xff]
    %v1232 = vld [vmem:[#allocation28 + $0x1b0] sm:$0xff]
    %v1233 = vld [vmem:[#allocation28 + $0x1b8] sm:$0xff]
    %v1234 = vld [vmem:[#allocation28 + $0x1c0] sm:$0xff]
    %v1235 = vld [vmem:[#allocation28 + $0x1c8] sm:$0xff]
    %v1236 = vld [vmem:[#allocation28 + $0x1d0] sm:$0xff]
    %v1237 = vld [vmem:[#allocation28 + $0x1d8] sm:$0xff]
    %v1238 = vld [vmem:[#allocation28 + $0x1e0] sm:$0xff]
    %v1239 = vld [vmem:[#allocation28 + $0x1e8] sm:$0xff]
    %v1240 = vld [vmem:[#allocation28 + $0x1f0] sm:$0xff]
    %v1241 = vld [vmem:[#allocation28 + $0x1f8] sm:$0xff]
    %v1242 = vld [vmem:[%s49] sm:$0x1]
    %v1244 = vperm.slane %v1242, 0
    %1246 = vmatpush.msra.mxu0 %v1193
    %1247 = vmatpush.msra.mxu0 %v1192
    %1248 = vmatpush.msra.mxu0 %v1191
    %1249 = vmatpush.msra.mxu0 %v1190
    %1250 = vmatpush.msra.mxu0 %v1189
    %1251 = vmatpush.msra.mxu0 %v1188
    %1252 = vmatpush.msra.mxu0 %v1187
    %1253 = vmatpush.msra.mxu0 %v1186
    %1254 = vmatpush.msra.mxu0 %v1185
    %1255 = vmatpush.msra.mxu0 %v1184
    %1256 = vmatpush.msra.mxu0 %v1183
    %1257 = vmatpush.msra.mxu0 %v1182
    %1258 = vmatpush.msra.mxu0 %v1181
    %1259 = vmatpush.msra.mxu0 %v1180
    %1260 = vmatpush.msra.mxu0 %v1179
    %1261 = vmatpush.msra.mxu0 %v1178
    %1262 = vmatmul.f32.gmra.mxu0 %v1174
    %v1263 = vpop.f32.mrf.mxu0
    %v1264 = vadd.f32 %v1244, %v1263
    %1265 = vdwg.mxu0
    %1266 = vmatpush.msra.mxu0 %v1209
    %1267 = vmatpush.msra.mxu0 %v1208
    %1268 = vmatpush.msra.mxu0 %v1207
    %1269 = vmatpush.msra.mxu0 %v1206
    %1270 = vmatpush.msra.mxu0 %v1205
    %1271 = vmatpush.msra.mxu0 %v1204
    %1272 = vmatpush.msra.mxu0 %v1203
    %1273 = vmatpush.msra.mxu0 %v1202
    %1274 = vmatpush.msra.mxu0 %v1201
    %1275 = vmatpush.msra.mxu0 %v1200
    %1276 = vmatpush.msra.mxu0 %v1199
    %1277 = vmatpush.msra.mxu0 %v1198
    %1278 = vmatpush.msra.mxu0 %v1197
    %1279 = vmatpush.msra.mxu0 %v1196
    %1280 = vmatpush.msra.mxu0 %v1195
    %1281 = vmatpush.msra.mxu0 %v1194
    %1282 = vmatmul.f32.gmra.mxu0 %v1175
    %v1283 = vpop.f32.mrf.mxu0
    %v1284 = vadd.f32 %v1264, %v1283
    %1285 = vdwg.mxu0
    %1286 = vmatpush.msra.mxu0 %v1225
    %1287 = vmatpush.msra.mxu0 %v1224
    %1288 = vmatpush.msra.mxu0 %v1223
    %1289 = vmatpush.msra.mxu0 %v1222
    %1290 = vmatpush.msra.mxu0 %v1221
    %1291 = vmatpush.msra.mxu0 %v1220
    %1292 = vmatpush.msra.mxu0 %v1219
    %1293 = vmatpush.msra.mxu0 %v1218
    %1294 = vmatpush.msra.mxu0 %v1217
    %1295 = vmatpush.msra.mxu0 %v1216
    %1296 = vmatpush.msra.mxu0 %v1215
    %1297 = vmatpush.msra.mxu0 %v1214
    %1298 = vmatpush.msra.mxu0 %v1213
    %1299 = vmatpush.msra.mxu0 %v1212
    %1300 = vmatpush.msra.mxu0 %v1211
    %1301 = vmatpush.msra.mxu0 %v1210
    %1302 = vmatmul.f32.gmra.mxu0 %v1176
    %v1303 = vpop.f32.mrf.mxu0
    %v1304 = vadd.f32 %v1284, %v1303
    %1305 = vdwg.mxu0
    %1306 = vmatpush.msra.mxu0 %v1241
    %1307 = vmatpush.msra.mxu0 %v1240
    %1308 = vmatpush.msra.mxu0 %v1239
    %1309 = vmatpush.msra.mxu0 %v1238
    %1310 = vmatpush.msra.mxu0 %v1237
    %1311 = vmatpush.msra.mxu0 %v1236
    %1312 = vmatpush.msra.mxu0 %v1235
    %1313 = vmatpush.msra.mxu0 %v1234
    %1314 = vmatpush.msra.mxu0 %v1233
    %1315 = vmatpush.msra.mxu0 %v1232
    %1316 = vmatpush.msra.mxu0 %v1231
    %1317 = vmatpush.msra.mxu0 %v1230
    %1318 = vmatpush.msra.mxu0 %v1229
    %1319 = vmatpush.msra.mxu0 %v1228
    %1320 = vmatpush.msra.mxu0 %v1227
    %1321 = vmatpush.msra.mxu0 %v1226
    %1322 = vmatmul.f32.gmra.mxu0 %v1177
    %v1323 = vpop.f32.mrf.mxu0
    %v1324 = vadd.f32 %v1304, %v1323
    %1325 = vdwg.mxu0
    %v1326 = vld [vmem:[#allocation29] sm:$0xff]
    %1327 = vmatpush.msra.mxu0 0.0
    %1328 = vmatpush.msra.mxu0 0.0
    %1329 = vmatpush.msra.mxu0 0.0
    %1330 = vmatpush.msra.mxu0 0.0
    %1331 = vmatpush.msra.mxu0 0.0
    %1332 = vmatpush.msra.mxu0 0.0
    %1333 = vmatpush.msra.mxu0 0.0
    %1334 = vmatpush.msra.mxu0 0.0
    %1335 = vmatpush.msra.mxu0 0.0
    %1336 = vmatpush.msra.mxu0 0.0
    %1337 = vmatpush.msra.mxu0 0.0
    %1338 = vmatpush.msra.mxu0 0.0
    %1339 = vmatpush.msra.mxu0 0.0
    %1340 = vmatpush.msra.mxu0 0.0
    %1341 = vmatpush.msra.mxu0 0.0
    %1342 = vmatpush.msra.mxu0 %v1326
    %1343 = vmatmul.f32.gmra.mxu0 %v995
    %v1344 = vpop.f32.mrf.mxu0
    %v1345 = vadd.f32 0.0, %v1344
    %1346 = vdwg.mxu0
    %v1347 = vld [vmem:[#allocation11] sm:$0xff]
    %v1348 = vld [vmem:[#allocation11 + $0x8] sm:$0xff]
    %vm1349 = vcmask 15360
    %v1351 = vsel %vm1349, %v1347, 0
    %v1354 = vsel %vm1349, %v1348, 0
    %v1357 = vsel %vm973, %v1324, 0
    %1359 = vmatpush.msra.mxu0 0.0
    %1360 = vmatpush.msra.mxu0 0.0
    %1361 = vmatpush.msra.mxu0 0.0
    %1362 = vmatpush.msra.mxu0 0.0
    %1363 = vmatpush.msra.mxu0 0.0
    %1364 = vmatpush.msra.mxu0 0.0
    %1365 = vmatpush.msra.mxu0 0.0
    %1366 = vmatpush.msra.mxu0 0.0
    %1367 = vmatpush.msra.mxu0 0.0
    %1368 = vmatpush.msra.mxu0 0.0
    %1369 = vmatpush.msra.mxu0 0.0
    %1370 = vmatpush.msra.mxu0 0.0
    %1371 = vmatpush.msra.mxu0 0.0
    %1372 = vmatpush.msra.mxu0 0.0
    %1373 = vmatpush.msra.mxu0 0.0
    %1374 = vmatpush.msra.mxu0 %v1357
    %1375 = vmatmul.f32.gmra.mxu0 %v1351
    %v1376 = vpop.f32.mrf.mxu0
    %v1377 = vadd.f32 0.0, %v1376
    %1378 = vmatmul.f32.gmra.mxu0 %v1354
    %v1379 = vpop.f32.mrf.mxu0
    %v1380 = vadd.f32 0.0, %v1379
    %1381 = vdwg.mxu0
    %v1382 = vld [vmem:[#allocation16] sm:$0xff]
    %v1383 = vld [vmem:[#allocation16 + $0x8] sm:$0xff]
    %v1384 = vmul.f32 %v1377, %v1382
    %v1385 = vmul.f32 %v1380, %v1383
    %v1386 = vld [vmem:[#allocation17] sm:$0xff]
    %v1387 = vld [vmem:[#allocation17 + $0x8] sm:$0xff]
    %v1388 = vld [vmem:[#allocation17 + $0x10] sm:$0xff]
    %v1389 = vld [vmem:[#allocation17 + $0x18] sm:$0xff]
    %v1390 = vld [vmem:[#allocation17 + $0x20] sm:$0xff]
    %v1391 = vld [vmem:[#allocation17 + $0x28] sm:$0xff]
    %v1392 = vld [vmem:[#allocation17 + $0x30] sm:$0xff]
    %v1393 = vld [vmem:[#allocation17 + $0x38] sm:$0xff]
    %v1394 = vld [vmem:[#allocation17 + $0x40] sm:$0xff]
    %v1395 = vld [vmem:[#allocation17 + $0x48] sm:$0xff]
    %v1396 = vld [vmem:[#allocation17 + $0x50] sm:$0xff]
    %v1397 = vld [vmem:[#allocation17 + $0x58] sm:$0xff]
    %v1398 = vld [vmem:[#allocation17 + $0x60] sm:$0xff]
    %v1399 = vld [vmem:[#allocation17 + $0x68] sm:$0xff]
    %v1400 = vld [vmem:[#allocation17 + $0x70] sm:$0xff]
    %v1401 = vld [vmem:[#allocation17 + $0x78] sm:$0xff]
    %1402 = vmatpush.msra.mxu0 %v1401
    %1403 = vmatpush.msra.mxu0 %v1400
    %1404 = vmatpush.msra.mxu0 %v1399
    %1405 = vmatpush.msra.mxu0 %v1398
    %1406 = vmatpush.msra.mxu0 %v1397
    %1407 = vmatpush.msra.mxu0 %v1396
    %1408 = vmatpush.msra.mxu0 %v1395
    %1409 = vmatpush.msra.mxu0 %v1394
    %1410 = vmatpush.msra.mxu0 %v1393
    %1411 = vmatpush.msra.mxu0 %v1392
    %1412 = vmatpush.msra.mxu0 %v1391
    %1413 = vmatpush.msra.mxu0 %v1390
    %1414 = vmatpush.msra.mxu0 %v1389
    %1415 = vmatpush.msra.mxu0 %v1388
    %1416 = vmatpush.msra.mxu0 %v1387
    %1417 = vmatpush.msra.mxu0 %v1386
    %1418 = vmatmul.f32.gmra.mxu0 %v1384
    %v1419 = vpop.f32.mrf.mxu0
    %v1420 = vadd.f32 0.0, %v1419
    %1421 = vmatmul.f32.gmra.mxu0 %v1385
    %v1422 = vpop.f32.mrf.mxu0
    %v1423 = vadd.f32 0.0, %v1422
    %1424 = vdwg.mxu0
    %v1425 = vld [vmem:[#allocation31] sm:$0xff]
    %v1426 = vld [vmem:[#allocation31 + $0x8] sm:$0xff]
    %v1427 = vld [vmem:[%s55] sm:$0x1]
    %v1429 = vperm.slane %v1427, 0
    %v1432 = vsel %vm872, %v1420, 0
    %v1435 = vsel %vm872, %v1423, 0
    %1437 = vmatpush.msra.mxu0 0.0
    %1438 = vmatpush.msra.mxu0 0.0
    %1439 = vmatpush.msra.mxu0 0.0
    %1440 = vmatpush.msra.mxu0 0.0
    %1441 = vmatpush.msra.mxu0 0.0
    %1442 = vmatpush.msra.mxu0 0.0
    %1443 = vmatpush.msra.mxu0 0.0
    %1444 = vmatpush.msra.mxu0 0.0
    %1445 = vmatpush.msra.mxu0 0.0
    %1446 = vmatpush.msra.mxu0 0.0
    %1447 = vmatpush.msra.mxu0 0.0
    %1448 = vmatpush.msra.mxu0 0.0
    %1449 = vmatpush.msra.mxu0 0.0
    %1450 = vmatpush.msra.mxu0 0.0
    %1451 = vmatpush.msra.mxu0 %v1426
    %1452 = vmatpush.msra.mxu0 %v1425
    %1453 = vmatmul.f32.gmra.mxu0 %v1432
    %v1454 = vpop.f32.mrf.mxu0
    %v1455 = vadd.f32 %v1429, %v1454
    %1456 = vmatmul.f32.gmra.mxu0 %v1435
    %v1457 = vpop.f32.mrf.mxu0
    %v1458 = vadd.f32 %v1429, %v1457
    %1459 = vdwg.mxu0
    %v1460 = vld [vmem:[#allocation14] sm:$0xff]
    %v1461 = vld [vmem:[%s5] sm:$0xff]
    %v1462 = vld [vmem:[%s5 + $0x8] sm:$0xff]
    %v1463 = vld [vmem:[%s5 + $0x10] sm:$0xff]
    %v1465 = vsel %vm943, %v1460, 0
    %v1468 = vsel %vm943, %v1461, 0
    %v1471 = vsel %vm943, %v1462, 0
    %v1474 = vsel %vm943, %v1463, 0
    %1476 = vmatpush.xpose.msra.mxu0 0.0
    %1477 = vmatpush.xpose.msra.mxu0 0.0
    %1478 = vmatpush.xpose.msra.mxu0 0.0
    %1479 = vmatpush.xpose.msra.mxu0 0.0
    %1480 = vmatpush.xpose.msra.mxu0 0.0
    %1481 = vmatpush.xpose.msra.mxu0 0.0
    %1482 = vmatpush.xpose.msra.mxu0 0.0
    %1483 = vmatpush.xpose.msra.mxu0 0.0
    %1484 = vmatpush.xpose.msra.mxu0 0.0
    %1485 = vmatpush.xpose.msra.mxu0 0.0
    %1486 = vmatpush.xpose.msra.mxu0 0.0
    %1487 = vmatpush.xpose.msra.mxu0 0.0
    %1488 = vmatpush.xpose.msra.mxu0 0.0
    %1489 = vmatpush.xpose.msra.mxu0 %v1474
    %1490 = vmatpush.xpose.msra.mxu0 %v1471
    %1491 = vmatpush.xpose.msra.mxu0 %v1468
    %1492 = vmatmul.f32.gmra.mxu0 %v1465
    %v1493 = vpop.f32.mrf.mxu0
    %v1494 = vadd.f32 0.0, %v1493
    %1495 = vdwg.mxu0
    %s1496 = scalar_lea.vmem %s5, 24
    %v1497 = vld [vmem:[%s1496] sm:$0xff]
    %v1498 = vld [vmem:[%s1496 + $0x8] sm:$0xff]
    %v1499 = vld [vmem:[%s1496 + $0x10] sm:$0xff]
    %v1501 = vsel %vm943, %v1497, 0
    %v1504 = vsel %vm943, %v1498, 0
    %v1507 = vsel %vm943, %v1499, 0
    %1509 = vmatpush.xpose.msra.mxu0 0.0
    %1510 = vmatpush.xpose.msra.mxu0 0.0
    %1511 = vmatpush.xpose.msra.mxu0 0.0
    %1512 = vmatpush.xpose.msra.mxu0 0.0
    %1513 = vmatpush.xpose.msra.mxu0 0.0
    %1514 = vmatpush.xpose.msra.mxu0 0.0
    %1515 = vmatpush.xpose.msra.mxu0 0.0
    %1516 = vmatpush.xpose.msra.mxu0 0.0
    %1517 = vmatpush.xpose.msra.mxu0 0.0
    %1518 = vmatpush.xpose.msra.mxu0 0.0
    %1519 = vmatpush.xpose.msra.mxu0 0.0
    %1520 = vmatpush.xpose.msra.mxu0 0.0
    %1521 = vmatpush.xpose.msra.mxu0 0.0
    %1522 = vmatpush.xpose.msra.mxu0 %v1507
    %1523 = vmatpush.xpose.msra.mxu0 %v1504
    %1524 = vmatpush.xpose.msra.mxu0 %v1501
    %1525 = vmatmul.f32.gmra.mxu0 %v1465
    %v1526 = vpop.f32.mrf.mxu0
    %v1527 = vadd.f32 0.0, %v1526
    %1528 = vdwg.mxu0
    %v1529 = vld [vmem:[%s7] sm:$0xff]
    %v1530 = vld [vmem:[%s7 + $0x8] sm:$0xff]
    %v1531 = vld [vmem:[%s7 + $0x10] sm:$0xff]
    %v1533 = vsel %vm943, %v1529, 0
    %v1536 = vsel %vm943, %v1530, 0
    %v1539 = vsel %vm943, %v1531, 0
    %1541 = vmatpush.xpose.msra.mxu0 0.0
    %1542 = vmatpush.xpose.msra.mxu0 0.0
    %1543 = vmatpush.xpose.msra.mxu0 0.0
    %1544 = vmatpush.xpose.msra.mxu0 0.0
    %1545 = vmatpush.xpose.msra.mxu0 0.0
    %1546 = vmatpush.xpose.msra.mxu0 0.0
    %1547 = vmatpush.xpose.msra.mxu0 0.0
    %1548 = vmatpush.xpose.msra.mxu0 0.0
    %1549 = vmatpush.xpose.msra.mxu0 0.0
    %1550 = vmatpush.xpose.msra.mxu0 0.0
    %1551 = vmatpush.xpose.msra.mxu0 0.0
    %1552 = vmatpush.xpose.msra.mxu0 0.0
    %1553 = vmatpush.xpose.msra.mxu0 0.0
    %1554 = vmatpush.xpose.msra.mxu0 %v1539
    %1555 = vmatpush.xpose.msra.mxu0 %v1536
    %1556 = vmatpush.xpose.msra.mxu0 %v1533
    %1557 = vmatmul.f32.gmra.mxu0 %v1465
    %v1558 = vpop.f32.mrf.mxu0
    %v1559 = vadd.f32 0.0, %v1558
    %1560 = vdwg.mxu0
    %s1561 = scalar_lea.vmem %s7, 24
    %v1562 = vld [vmem:[%s1561] sm:$0xff]
    %v1563 = vld [vmem:[%s1561 + $0x8] sm:$0xff]
    %v1564 = vld [vmem:[%s1561 + $0x10] sm:$0xff]
    %v1566 = vsel %vm943, %v1562, 0
    %v1569 = vsel %vm943, %v1563, 0
    %v1572 = vsel %vm943, %v1564, 0
    %1574 = vmatpush.xpose.msra.mxu0 0.0
    %1575 = vmatpush.xpose.msra.mxu0 0.0
    %1576 = vmatpush.xpose.msra.mxu0 0.0
    %1577 = vmatpush.xpose.msra.mxu0 0.0
    %1578 = vmatpush.xpose.msra.mxu0 0.0
    %1579 = vmatpush.xpose.msra.mxu0 0.0
    %1580 = vmatpush.xpose.msra.mxu0 0.0
    %1581 = vmatpush.xpose.msra.mxu0 0.0
    %1582 = vmatpush.xpose.msra.mxu0 0.0
    %1583 = vmatpush.xpose.msra.mxu0 0.0
    %1584 = vmatpush.xpose.msra.mxu0 0.0
    %1585 = vmatpush.xpose.msra.mxu0 0.0
    %1586 = vmatpush.xpose.msra.mxu0 0.0
    %1587 = vmatpush.xpose.msra.mxu0 %v1572
    %1588 = vmatpush.xpose.msra.mxu0 %v1569
    %1589 = vmatpush.xpose.msra.mxu0 %v1566
    %1590 = vmatmul.f32.gmra.mxu0 %v1465
    %v1591 = vpop.f32.mrf.mxu0
    %v1592 = vadd.f32 0.0, %v1591
    %1593 = vdwg.mxu0
    %v1594 = vld [vmem:[#allocation10] sm:$0xff]
    %v1595 = vld [vmem:[#allocation10 + $0x8] sm:$0xff]
    %v1596 = vld [vmem:[#allocation32] sm:$0xff]
    %v1597 = vld [vmem:[#allocation32 + $0x8] sm:$0xff]
    %v1598 = vld [vmem:[#allocation32 + $0x10] sm:$0xff]
    %vm1599 = vcmask 195584
    %v1601 = vsel %vm1599, %v1494, 0
    %v1604 = vsel %vm1599, %v1527, 0
    %1606 = vmatpush.msra.mxu0 0.0
    %1607 = vmatpush.msra.mxu0 0.0
    %1608 = vmatpush.msra.mxu0 0.0
    %1609 = vmatpush.msra.mxu0 0.0
    %1610 = vmatpush.msra.mxu0 0.0
    %1611 = vmatpush.msra.mxu0 0.0
    %1612 = vmatpush.msra.mxu0 0.0
    %1613 = vmatpush.msra.mxu0 0.0
    %1614 = vmatpush.msra.mxu0 0.0
    %1615 = vmatpush.msra.mxu0 0.0
    %1616 = vmatpush.msra.mxu0 0.0
    %1617 = vmatpush.msra.mxu0 0.0
    %1618 = vmatpush.msra.mxu0 0.0
    %1619 = vmatpush.msra.mxu0 %v1598
    %1620 = vmatpush.msra.mxu0 %v1597
    %1621 = vmatpush.msra.mxu0 %v1596
    %1622 = vmatmul.f32.gmra.mxu0 %v1601
    %v1623 = vpop.f32.mrf.mxu0
    %v1624 = vadd.f32 0.0, %v1623
    %1625 = vmatmul.f32.gmra.mxu0 %v1604
    %v1626 = vpop.f32.mrf.mxu0
    %v1627 = vadd.f32 0.0, %v1626
    %1628 = vdwg.mxu0
    %v1629 = vld [vmem:[%s59] sm:$0x1]
    %v1631 = vperm.slane %v1629, 0
    %v1634 = vsel %vm872, %v1594, 0
    %v1637 = vsel %vm872, %v1595, 0
    %1639 = vmatpush.msra.mxu0 0.0
    %1640 = vmatpush.msra.mxu0 0.0
    %1641 = vmatpush.msra.mxu0 0.0
    %1642 = vmatpush.msra.mxu0 0.0
    %1643 = vmatpush.msra.mxu0 0.0
    %1644 = vmatpush.msra.mxu0 0.0
    %1645 = vmatpush.msra.mxu0 0.0
    %1646 = vmatpush.msra.mxu0 0.0
    %1647 = vmatpush.msra.mxu0 0.0
    %1648 = vmatpush.msra.mxu0 0.0
    %1649 = vmatpush.msra.mxu0 0.0
    %1650 = vmatpush.msra.mxu0 0.0
    %1651 = vmatpush.msra.mxu0 0.0
    %1652 = vmatpush.msra.mxu0 0.0
    %1653 = vmatpush.msra.mxu0 %v1627
    %1654 = vmatpush.msra.mxu0 %v1624
    %1655 = vmatmul.f32.gmra.mxu0 %v1634
    %v1656 = vpop.f32.mrf.mxu0
    %v1657 = vadd.f32 %v1631, %v1656
    %1658 = vmatmul.f32.gmra.mxu0 %v1637
    %v1659 = vpop.f32.mrf.mxu0
    %v1660 = vadd.f32 %v1631, %v1659
    %1661 = vdwg.mxu0
    %v1663 = vsel %vm973, %v1345, 0
    %1665 = vmatpush.msra.mxu0 0.0
    %1666 = vmatpush.msra.mxu0 0.0
    %1667 = vmatpush.msra.mxu0 0.0
    %1668 = vmatpush.msra.mxu0 0.0
    %1669 = vmatpush.msra.mxu0 0.0
    %1670 = vmatpush.msra.mxu0 0.0
    %1671 = vmatpush.msra.mxu0 0.0
    %1672 = vmatpush.msra.mxu0 0.0
    %1673 = vmatpush.msra.mxu0 0.0
    %1674 = vmatpush.msra.mxu0 0.0
    %1675 = vmatpush.msra.mxu0 0.0
    %1676 = vmatpush.msra.mxu0 0.0
    %1677 = vmatpush.msra.mxu0 0.0
    %1678 = vmatpush.msra.mxu0 0.0
    %1679 = vmatpush.msra.mxu0 0.0
    %1680 = vmatpush.msra.mxu0 %v1663
    %1681 = vmatmul.f32.gmra.mxu0 %v1351
    %v1682 = vpop.f32.mrf.mxu0
    %v1683 = vadd.f32 0.0, %v1682
    %1684 = vmatmul.f32.gmra.mxu0 %v1354
    %v1685 = vpop.f32.mrf.mxu0
    %v1686 = vadd.f32 0.0, %v1685
    %1687 = vdwg.mxu0
    %v1688 = vadd.f32 %v1657, %v1683
    %v1689 = vadd.f32 %v1660, %v1686
    %v1690 = vld [vmem:[#allocation19] sm:$0xff]
    %v1691 = vld [vmem:[#allocation19 + $0x8] sm:$0xff]
    %v1692 = vadd.f32 %v1688, %v1690
    %v1693 = vadd.f32 %v1689, %v1691
    %v1694 = vld [vmem:[#allocation5] sm:$0xff]
    %v1695 = vld [vmem:[#allocation5 + $0x8] sm:$0xff]
    %v1696 = vld [vmem:[#allocation5 + $0x10] sm:$0xff]
    %v1697 = vld [vmem:[#allocation5 + $0x18] sm:$0xff]
    %v1698 = vld [vmem:[#allocation5 + $0x20] sm:$0xff]
    %v1699 = vld [vmem:[#allocation5 + $0x28] sm:$0xff]
    %v1700 = vld [vmem:[#allocation5 + $0x30] sm:$0xff]
    %v1701 = vld [vmem:[#allocation5 + $0x38] sm:$0xff]
    %v1702 = vld [vmem:[#allocation7] sm:$0xff]
    %v1703 = vld [vmem:[#allocation7 + $0x8] sm:$0xff]
    %v1704 = vld [vmem:[#allocation7 + $0x10] sm:$0xff]
    %v1705 = vld [vmem:[#allocation7 + $0x18] sm:$0xff]
    %v1706 = vld [vmem:[#allocation7 + $0x20] sm:$0xff]
    %v1707 = vld [vmem:[#allocation7 + $0x28] sm:$0xff]
    %v1708 = vld [vmem:[#allocation7 + $0x30] sm:$0xff]
    %v1709 = vld [vmem:[#allocation7 + $0x38] sm:$0xff]
    %v1710 = vld [vmem:[#allocation2] sm:$0xff]
    %v1711 = vld [vmem:[#allocation2 + $0x8] sm:$0xff]
    %v1712 = vld [vmem:[#allocation2 + $0x10] sm:$0xff]
    %v1713 = vld [vmem:[#allocation2 + $0x18] sm:$0xff]
    %v1714 = vld [vmem:[#allocation2 + $0x20] sm:$0xff]
    %v1715 = vld [vmem:[#allocation2 + $0x28] sm:$0xff]
    %v1716 = vld [vmem:[#allocation2 + $0x30] sm:$0xff]
    %v1717 = vld [vmem:[#allocation2 + $0x38] sm:$0xff]
    %v1718 = vld [vmem:[#allocation8] sm:$0xff]
    %v1719 = vld [vmem:[#allocation8 + $0x8] sm:$0xff]
    %v1720 = vld [vmem:[#allocation34] sm:$0xff]
    %v1721 = vld [vmem:[#allocation34 + $0x8] sm:$0xff]
    %v1722 = vld [vmem:[#allocation34 + $0x10] sm:$0xff]
    %v1723 = vld [vmem:[#allocation34 + $0x18] sm:$0xff]
    %v1724 = vld [vmem:[%s63] sm:$0x1]
    %v1726 = vperm.slane %v1724, 0
    %v1729 = vsel %vm635, %v1692, 0
    %v1732 = vsel %vm635, %v1693, 0
    %1734 = vmatpush.msra.mxu0 0.0
    %1735 = vmatpush.msra.mxu0 0.0
    %1736 = vmatpush.msra.mxu0 0.0
    %1737 = vmatpush.msra.mxu0 0.0
    %1738 = vmatpush.msra.mxu0 0.0
    %1739 = vmatpush.msra.mxu0 0.0
    %1740 = vmatpush.msra.mxu0 0.0
    %1741 = vmatpush.msra.mxu0 0.0
    %1742 = vmatpush.msra.mxu0 0.0
    %1743 = vmatpush.msra.mxu0 0.0
    %1744 = vmatpush.msra.mxu0 0.0
    %1745 = vmatpush.msra.mxu0 0.0
    %1746 = vmatpush.msra.mxu0 %v1723
    %1747 = vmatpush.msra.mxu0 %v1722
    %1748 = vmatpush.msra.mxu0 %v1721
    %1749 = vmatpush.msra.mxu0 %v1720
    %1750 = vmatmul.f32.gmra.mxu0 %v1729
    %v1751 = vpop.f32.mrf.mxu0
    %v1752 = vadd.f32 %v1726, %v1751
    %1753 = vmatmul.f32.gmra.mxu0 %v1732
    %v1754 = vpop.f32.mrf.mxu0
    %v1755 = vadd.f32 %v1726, %v1754
    %1756 = vdwg.mxu0
    %v1757 = vld [vmem:[#allocation35] sm:$0xff]
    %v1758 = vld [vmem:[#allocation35 + $0x8] sm:$0xff]
    %v1759 = vld [vmem:[#allocation35 + $0x10] sm:$0xff]
    %v1760 = vld [vmem:[#allocation35 + $0x18] sm:$0xff]
    %v1761 = vld [vmem:[%s67] sm:$0x1]
    %v1763 = vperm.slane %v1761, 0
    %1765 = vmatpush.msra.mxu0 0.0
    %1766 = vmatpush.msra.mxu0 0.0
    %1767 = vmatpush.msra.mxu0 0.0
    %1768 = vmatpush.msra.mxu0 0.0
    %1769 = vmatpush.msra.mxu0 0.0
    %1770 = vmatpush.msra.mxu0 0.0
    %1771 = vmatpush.msra.mxu0 0.0
    %1772 = vmatpush.msra.mxu0 0.0
    %1773 = vmatpush.msra.mxu0 0.0
    %1774 = vmatpush.msra.mxu0 0.0
    %1775 = vmatpush.msra.mxu0 0.0
    %1776 = vmatpush.msra.mxu0 0.0
    %1777 = vmatpush.msra.mxu0 %v1760
    %1778 = vmatpush.msra.mxu0 %v1759
    %1779 = vmatpush.msra.mxu0 %v1758
    %1780 = vmatpush.msra.mxu0 %v1757
    %1781 = vmatmul.f32.gmra.mxu0 %v1729
    %v1782 = vpop.f32.mrf.mxu0
    %v1783 = vadd.f32 %v1763, %v1782
    %1784 = vmatmul.f32.gmra.mxu0 %v1732
    %v1785 = vpop.f32.mrf.mxu0
    %v1786 = vadd.f32 %v1763, %v1785
    %1787 = vdwg.mxu0
    %v1788 = vld [vmem:[#allocation37] sm:$0xff]
    %v1789 = vld [vmem:[#allocation37 + $0x8] sm:$0xff]
    %v1790 = vld [vmem:[#allocation37 + $0x10] sm:$0xff]
    %v1791 = vld [vmem:[#allocation37 + $0x18] sm:$0xff]
    %v1792 = vld [vmem:[%s71] sm:$0x1]
    %v1794 = vperm.slane %v1792, 0
    %1796 = vmatpush.msra.mxu0 0.0
    %1797 = vmatpush.msra.mxu0 0.0
    %1798 = vmatpush.msra.mxu0 0.0
    %1799 = vmatpush.msra.mxu0 0.0
    %1800 = vmatpush.msra.mxu0 0.0
    %1801 = vmatpush.msra.mxu0 0.0
    %1802 = vmatpush.msra.mxu0 0.0
    %1803 = vmatpush.msra.mxu0 0.0
    %1804 = vmatpush.msra.mxu0 0.0
    %1805 = vmatpush.msra.mxu0 0.0
    %1806 = vmatpush.msra.mxu0 0.0
    %1807 = vmatpush.msra.mxu0 0.0
    %1808 = vmatpush.msra.mxu0 %v1791
    %1809 = vmatpush.msra.mxu0 %v1790
    %1810 = vmatpush.msra.mxu0 %v1789
    %1811 = vmatpush.msra.mxu0 %v1788
    %1812 = vmatmul.f32.gmra.mxu0 %v1729
    %v1813 = vpop.f32.mrf.mxu0
    %v1814 = vadd.f32 %v1794, %v1813
    %1815 = vmatmul.f32.gmra.mxu0 %v1732
    %v1816 = vpop.f32.mrf.mxu0
    %v1817 = vadd.f32 %v1794, %v1816
    %1818 = vdwg.mxu0
    %v1820 = vsel %vm872, %v1694, 0
    %v1823 = vsel %vm872, %v1695, 0
    %v1826 = vsel %vm872, %v1696, 0
    %v1829 = vsel %vm872, %v1697, 0
    %v1832 = vsel %vm872, %v1698, 0
    %v1835 = vsel %vm872, %v1699, 0
    %v1838 = vsel %vm872, %v1700, 0
    %v1841 = vsel %vm872, %v1701, 0
    %1843 = vmatpush.msra.mxu0 0.0
    %1844 = vmatpush.msra.mxu0 0.0
    %1845 = vmatpush.msra.mxu0 0.0
    %1846 = vmatpush.msra.mxu0 0.0
    %1847 = vmatpush.msra.mxu0 0.0
    %1848 = vmatpush.msra.mxu0 0.0
    %1849 = vmatpush.msra.mxu0 0.0
    %1850 = vmatpush.msra.mxu0 0.0
    %1851 = vmatpush.msra.mxu0 0.0
    %1852 = vmatpush.msra.mxu0 0.0
    %1853 = vmatpush.msra.mxu0 0.0
    %1854 = vmatpush.msra.mxu0 0.0
    %1855 = vmatpush.msra.mxu0 0.0
    %1856 = vmatpush.msra.mxu0 0.0
    %1857 = vmatpush.msra.mxu0 %v1755
    %1858 = vmatpush.msra.mxu0 %v1752
    %1859 = vmatmul.f32.gmra.mxu0 %v1820
    %v1860 = vpop.f32.mrf.mxu0
    %v1861 = vadd.f32 0.0, %v1860
    %1862 = vmatmul.f32.gmra.mxu0 %v1823
    %v1863 = vpop.f32.mrf.mxu0
    %v1864 = vadd.f32 0.0, %v1863
    %1865 = vmatmul.f32.gmra.mxu0 %v1826
    %v1866 = vpop.f32.mrf.mxu0
    %v1867 = vadd.f32 0.0, %v1866
    %1868 = vmatmul.f32.gmra.mxu0 %v1829
    %v1869 = vpop.f32.mrf.mxu0
    %v1870 = vadd.f32 0.0, %v1869
    %1871 = vmatmul.f32.gmra.mxu0 %v1832
    %v1872 = vpop.f32.mrf.mxu0
    %v1873 = vadd.f32 0.0, %v1872
    %1874 = vmatmul.f32.gmra.mxu0 %v1835
    %v1875 = vpop.f32.mrf.mxu0
    %v1876 = vadd.f32 0.0, %v1875
    %1877 = vmatmul.f32.gmra.mxu0 %v1838
    %v1878 = vpop.f32.mrf.mxu0
    %v1879 = vadd.f32 0.0, %v1878
    %1880 = vmatmul.f32.gmra.mxu0 %v1841
    %v1881 = vpop.f32.mrf.mxu0
    %v1882 = vadd.f32 0.0, %v1881
    %1883 = vdwg.mxu0
    %v1884 = vmul.f32 %v1861, %v1702
    %v1885 = vmul.f32 %v1864, %v1703
    %v1886 = vmul.f32 %v1867, %v1704
    %v1887 = vmul.f32 %v1870, %v1705
    %v1888 = vmul.f32 %v1873, %v1706
    %v1889 = vmul.f32 %v1876, %v1707
    %v1890 = vmul.f32 %v1879, %v1708
    %v1891 = vmul.f32 %v1882, %v1709
    %v1893 = vsel %vm635, %v1884, 0
    %v1896 = vsel %vm635, %v1885, 0
    %v1899 = vsel %vm635, %v1886, 0
    %v1902 = vsel %vm635, %v1887, 0
    %v1905 = vsel %vm635, %v1888, 0
    %v1908 = vsel %vm635, %v1889, 0
    %v1911 = vsel %vm635, %v1890, 0
    %v1914 = vsel %vm635, %v1891, 0
    %v1917 = vsel %vm635, %v1783, 0
    %v1920 = vsel %vm635, %v1786, 0
    %1922 = vmatpush.xpose.msra.mxu0 0.0
    %1923 = vmatpush.xpose.msra.mxu0 0.0
    %1924 = vmatpush.xpose.msra.mxu0 0.0
    %1925 = vmatpush.xpose.msra.mxu0 0.0
    %1926 = vmatpush.xpose.msra.mxu0 0.0
    %1927 = vmatpush.xpose.msra.mxu0 0.0
    %1928 = vmatpush.xpose.msra.mxu0 0.0
    %1929 = vmatpush.xpose.msra.mxu0 0.0
    %1930 = vmatpush.xpose.msra.mxu0 0.0
    %1931 = vmatpush.xpose.msra.mxu0 0.0
    %1932 = vmatpush.xpose.msra.mxu0 0.0
    %1933 = vmatpush.xpose.msra.mxu0 0.0
    %1934 = vmatpush.xpose.msra.mxu0 0.0
    %1935 = vmatpush.xpose.msra.mxu0 0.0
    %1936 = vmatpush.xpose.msra.mxu0 %v1920
    %1937 = vmatpush.xpose.msra.mxu0 %v1917
    %1938 = vmatmul.f32.gmra.mxu0 %v1893
    %v1939 = vpop.f32.mrf.mxu0
    %v1940 = vadd.f32 0.0, %v1939
    %1941 = vmatmul.f32.gmra.mxu0 %v1896
    %v1942 = vpop.f32.mrf.mxu0
    %v1943 = vadd.f32 0.0, %v1942
    %1944 = vmatmul.f32.gmra.mxu0 %v1899
    %v1945 = vpop.f32.mrf.mxu0
    %v1946 = vadd.f32 0.0, %v1945
    %1947 = vmatmul.f32.gmra.mxu0 %v1902
    %v1948 = vpop.f32.mrf.mxu0
    %v1949 = vadd.f32 0.0, %v1948
    %1950 = vmatmul.f32.gmra.mxu0 %v1905
    %v1951 = vpop.f32.mrf.mxu0
    %v1952 = vadd.f32 0.0, %v1951
    %1953 = vmatmul.f32.gmra.mxu0 %v1908
    %v1954 = vpop.f32.mrf.mxu0
    %v1955 = vadd.f32 0.0, %v1954
    %1956 = vmatmul.f32.gmra.mxu0 %v1911
    %v1957 = vpop.f32.mrf.mxu0
    %v1958 = vadd.f32 0.0, %v1957
    %1959 = vmatmul.f32.gmra.mxu0 %v1914
    %v1960 = vpop.f32.mrf.mxu0
    %v1961 = vadd.f32 0.0, %v1960
    %1962 = vdwg.mxu0
    %v1963 = vmul.f32 %v1940, 0.35355338
    %v1964 = vmul.f32 %v1943, 0.35355338
    %v1965 = vmul.f32 %v1946, 0.35355338
    %v1966 = vmul.f32 %v1949, 0.35355338
    %v1967 = vmul.f32 %v1952, 0.35355338
    %v1968 = vmul.f32 %v1955, 0.35355338
    %v1969 = vmul.f32 %v1958, 0.35355338
    %v1970 = vmul.f32 %v1961, 0.35355338
    %v1971 = vadd.f32 %v1963, %v1710
    %v1972 = vadd.f32 %v1964, %v1711
    %v1973 = vadd.f32 %v1965, %v1712
    %v1974 = vadd.f32 %v1966, %v1713
    %v1975 = vadd.f32 %v1967, %v1714
    %v1976 = vadd.f32 %v1968, %v1715
    %v1977 = vadd.f32 %v1969, %v1716
    %v1978 = vadd.f32 %v1970, %v1717
    %v1979 = vsel %vm872, %v1971, -inf
    %1980 = vmax.xlane.f32.xlu0 %v1979
    %v1981 = vpop.xlane.xlu0 %1980
    %v1982 = vsel %vm872, %v1972, -inf
    %1983 = vmax.xlane.f32.xlu0 %v1982
    %v1984 = vpop.xlane.xlu0 %1983
    %v1985 = vsel %vm872, %v1973, -inf
    %1986 = vmax.xlane.f32.xlu0 %v1985
    %v1987 = vpop.xlane.xlu0 %1986
    %v1988 = vsel %vm872, %v1974, -inf
    %1989 = vmax.xlane.f32.xlu0 %v1988
    %v1990 = vpop.xlane.xlu0 %1989
    %v1991 = vsel %vm872, %v1975, -inf
    %1992 = vmax.xlane.f32.xlu0 %v1991
    %v1993 = vpop.xlane.xlu0 %1992
    %v1994 = vsel %vm872, %v1976, -inf
    %1995 = vmax.xlane.f32.xlu0 %v1994
    %v1996 = vpop.xlane.xlu0 %1995
    %v1997 = vsel %vm872, %v1977, -inf
    %1998 = vmax.xlane.f32.xlu0 %v1997
    %v1999 = vpop.xlane.xlu0 %1998
    %v2000 = vsel %vm872, %v1978, -inf
    %2001 = vmax.xlane.f32.xlu0 %v2000
    %v2002 = vpop.xlane.xlu0 %2001
    %v2003 = vsub.f32 %v1971, %v1981
    %v2004 = vsub.f32 %v1972, %v1984
    %v2005 = vsub.f32 %v1973, %v1987
    %v2006 = vsub.f32 %v1974, %v1990
    %v2007 = vsub.f32 %v1975, %v1993
    %v2008 = vsub.f32 %v1976, %v1996
    %v2009 = vsub.f32 %v1977, %v1999
    %v2010 = vsub.f32 %v1978, %v2002
    %v2011 = vmul.f32 %v2003, 1.442695
    %v2012 = vpow.pop %v2011
    %v2013 = vmul.f32 %v2004, 1.442695
    %v2014 = vpow.pop %v2013
    %v2015 = vmul.f32 %v2005, 1.442695
    %v2016 = vpow.pop %v2015
    %v2017 = vmul.f32 %v2006, 1.442695
    %v2018 = vpow.pop %v2017
    %v2019 = vmul.f32 %v2007, 1.442695
    %v2020 = vpow.pop %v2019
    %v2021 = vmul.f32 %v2008, 1.442695
    %v2022 = vpow.pop %v2021
    %v2023 = vmul.f32 %v2009, 1.442695
    %v2024 = vpow.pop %v2023
    %v2025 = vmul.f32 %v2010, 1.442695
    %v2026 = vpow.pop %v2025
    %v2027 = vsel %vm872, %v2012, 0.0
    %2028 = vadd.xlane.f32.xlu0 %v2027
    %v2029 = vpop.xlane.xlu0 %2028
    %v2030 = vsel %vm872, %v2014, 0.0
    %2031 = vadd.xlane.f32.xlu0 %v2030
    %v2032 = vpop.xlane.xlu0 %2031
    %v2033 = vsel %vm872, %v2016, 0.0
    %2034 = vadd.xlane.f32.xlu0 %v2033
    %v2035 = vpop.xlane.xlu0 %2034
    %v2036 = vsel %vm872, %v2018, 0.0
    %2037 = vadd.xlane.f32.xlu0 %v2036
    %v2038 = vpop.xlane.xlu0 %2037
    %v2039 = vsel %vm872, %v2020, 0.0
    %2040 = vadd.xlane.f32.xlu0 %v2039
    %v2041 = vpop.xlane.xlu0 %2040
    %v2042 = vsel %vm872, %v2022, 0.0
    %2043 = vadd.xlane.f32.xlu0 %v2042
    %v2044 = vpop.xlane.xlu0 %2043
    %v2045 = vsel %vm872, %v2024, 0.0
    %2046 = vadd.xlane.f32.xlu0 %v2045
    %v2047 = vpop.xlane.xlu0 %2046
    %v2048 = vsel %vm872, %v2026, 0.0
    %2049 = vadd.xlane.f32.xlu0 %v2048
    %v2050 = vpop.xlane.xlu0 %2049
    %v2051 = vrcp.pop %v2029
    %v2052 = vmul.f32 %v2029, %v2051
    %v2053 = vsub.f32 1.0, %v2052
    %v2054 = vmul.f32 %v2051, %v2053
    %v2055 = vadd.f32 %v2051, %v2054
    %vm2056 = vweird.f32 %v2029
    %vm2057 = vweird.f32 %v2051
    %vm2058 = vmor %vm2056, %vm2057
    %v2059 = vsel %vm2058, %v2051, %v2055
    %v2060 = vand.u32 2147483647, %v2029
    %vm2061 = vcmp.eq.f32.partialorder %v2060, 8.507059e+37
    %v2062 = vand.u32 %v2029, 2147483648
    %v2063 = vor.u32 1.1754944e-38, %v2062
    %v2064 = vsel %vm2061, %v2063, %v2059
    %v2065 = vmul.f32 %v2012, %v2064
    %v2066 = vrcp.pop %v2032
    %v2067 = vmul.f32 %v2032, %v2066
    %v2068 = vsub.f32 1.0, %v2067
    %v2069 = vmul.f32 %v2066, %v2068
    %v2070 = vadd.f32 %v2066, %v2069
    %vm2071 = vweird.f32 %v2032
    %vm2072 = vweird.f32 %v2066
    %vm2073 = vmor %vm2071, %vm2072
    %v2074 = vsel %vm2073, %v2066, %v2070
    %v2075 = vand.u32 2147483647, %v2032
    %vm2076 = vcmp.eq.f32.partialorder %v2075, 8.507059e+37
    %v2077 = vand.u32 %v2032, 2147483648
    %v2078 = vor.u32 1.1754944e-38, %v2077
    %v2079 = vsel %vm2076, %v2078, %v2074
    %v2080 = vmul.f32 %v2014, %v2079
    %v2081 = vrcp.pop %v2035
    %v2082 = vmul.f32 %v2035, %v2081
    %v2083 = vsub.f32 1.0, %v2082
    %v2084 = vmul.f32 %v2081, %v2083
    %v2085 = vadd.f32 %v2081, %v2084
    %vm2086 = vweird.f32 %v2035
    %vm2087 = vweird.f32 %v2081
    %vm2088 = vmor %vm2086, %vm2087
    %v2089 = vsel %vm2088, %v2081, %v2085
    %v2090 = vand.u32 2147483647, %v2035
    %vm2091 = vcmp.eq.f32.partialorder %v2090, 8.507059e+37
    %v2092 = vand.u32 %v2035, 2147483648
    %v2093 = vor.u32 1.1754944e-38, %v2092
    %v2094 = vsel %vm2091, %v2093, %v2089
    %v2095 = vmul.f32 %v2016, %v2094
    %v2096 = vrcp.pop %v2038
    %v2097 = vmul.f32 %v2038, %v2096
    %v2098 = vsub.f32 1.0, %v2097
    %v2099 = vmul.f32 %v2096, %v2098
    %v2100 = vadd.f32 %v2096, %v2099
    %vm2101 = vweird.f32 %v2038
    %vm2102 = vweird.f32 %v2096
    %vm2103 = vmor %vm2101, %vm2102
    %v2104 = vsel %vm2103, %v2096, %v2100
    %v2105 = vand.u32 2147483647, %v2038
    %vm2106 = vcmp.eq.f32.partialorder %v2105, 8.507059e+37
    %v2107 = vand.u32 %v2038, 2147483648
    %v2108 = vor.u32 1.1754944e-38, %v2107
    %v2109 = vsel %vm2106, %v2108, %v2104
    %v2110 = vmul.f32 %v2018, %v2109
    %v2111 = vrcp.pop %v2041
    %v2112 = vmul.f32 %v2041, %v2111
    %v2113 = vsub.f32 1.0, %v2112
    %v2114 = vmul.f32 %v2111, %v2113
    %v2115 = vadd.f32 %v2111, %v2114
    %vm2116 = vweird.f32 %v2041
    %vm2117 = vweird.f32 %v2111
    %vm2118 = vmor %vm2116, %vm2117
    %v2119 = vsel %vm2118, %v2111, %v2115
    %v2120 = vand.u32 2147483647, %v2041
    %vm2121 = vcmp.eq.f32.partialorder %v2120, 8.507059e+37
    %v2122 = vand.u32 %v2041, 2147483648
    %v2123 = vor.u32 1.1754944e-38, %v2122
    %v2124 = vsel %vm2121, %v2123, %v2119
    %v2125 = vmul.f32 %v2020, %v2124
    %v2126 = vrcp.pop %v2044
    %v2127 = vmul.f32 %v2044, %v2126
    %v2128 = vsub.f32 1.0, %v2127
    %v2129 = vmul.f32 %v2126, %v2128
    %v2130 = vadd.f32 %v2126, %v2129
    %vm2131 = vweird.f32 %v2044
    %vm2132 = vweird.f32 %v2126
    %vm2133 = vmor %vm2131, %vm2132
    %v2134 = vsel %vm2133, %v2126, %v2130
    %v2135 = vand.u32 2147483647, %v2044
    %vm2136 = vcmp.eq.f32.partialorder %v2135, 8.507059e+37
    %v2137 = vand.u32 %v2044, 2147483648
    %v2138 = vor.u32 1.1754944e-38, %v2137
    %v2139 = vsel %vm2136, %v2138, %v2134
    %v2140 = vmul.f32 %v2022, %v2139
    %v2141 = vrcp.pop %v2047
    %v2142 = vmul.f32 %v2047, %v2141
    %v2143 = vsub.f32 1.0, %v2142
    %v2144 = vmul.f32 %v2141, %v2143
    %v2145 = vadd.f32 %v2141, %v2144
    %vm2146 = vweird.f32 %v2047
    %vm2147 = vweird.f32 %v2141
    %vm2148 = vmor %vm2146, %vm2147
    %v2149 = vsel %vm2148, %v2141, %v2145
    %v2150 = vand.u32 2147483647, %v2047
    %vm2151 = vcmp.eq.f32.partialorder %v2150, 8.507059e+37
    %v2152 = vand.u32 %v2047, 2147483648
    %v2153 = vor.u32 1.1754944e-38, %v2152
    %v2154 = vsel %vm2151, %v2153, %v2149
    %v2155 = vmul.f32 %v2024, %v2154
    %v2156 = vrcp.pop %v2050
    %v2157 = vmul.f32 %v2050, %v2156
    %v2158 = vsub.f32 1.0, %v2157
    %v2159 = vmul.f32 %v2156, %v2158
    %v2160 = vadd.f32 %v2156, %v2159
    %vm2161 = vweird.f32 %v2050
    %vm2162 = vweird.f32 %v2156
    %vm2163 = vmor %vm2161, %vm2162
    %v2164 = vsel %vm2163, %v2156, %v2160
    %v2165 = vand.u32 2147483647, %v2050
    %vm2166 = vcmp.eq.f32.partialorder %v2165, 8.507059e+37
    %v2167 = vand.u32 %v2050, 2147483648
    %v2168 = vor.u32 1.1754944e-38, %v2167
    %v2169 = vsel %vm2166, %v2168, %v2164
    %v2170 = vmul.f32 %v2026, %v2169
    %v2172 = vsel %vm872, %v2065, 0
    %v2175 = vsel %vm872, %v2080, 0
    %v2178 = vsel %vm872, %v2095, 0
    %v2181 = vsel %vm872, %v2110, 0
    %v2184 = vsel %vm872, %v2125, 0
    %v2187 = vsel %vm872, %v2140, 0
    %v2190 = vsel %vm872, %v2155, 0
    %v2193 = vsel %vm872, %v2170, 0
    %2195 = vmatpush.msra.mxu0 0.0
    %2196 = vmatpush.msra.mxu0 0.0
    %2197 = vmatpush.msra.mxu0 0.0
    %2198 = vmatpush.msra.mxu0 0.0
    %2199 = vmatpush.msra.mxu0 0.0
    %2200 = vmatpush.msra.mxu0 0.0
    %2201 = vmatpush.msra.mxu0 0.0
    %2202 = vmatpush.msra.mxu0 0.0
    %2203 = vmatpush.msra.mxu0 0.0
    %2204 = vmatpush.msra.mxu0 0.0
    %2205 = vmatpush.msra.mxu0 0.0
    %2206 = vmatpush.msra.mxu0 0.0
    %2207 = vmatpush.msra.mxu0 0.0
    %2208 = vmatpush.msra.mxu0 0.0
    %2209 = vmatpush.msra.mxu0 %v1817
    %2210 = vmatpush.msra.mxu0 %v1814
    %2211 = vmatmul.f32.gmra.mxu0 %v2172
    %v2212 = vpop.f32.mrf.mxu0
    %v2213 = vadd.f32 0.0, %v2212
    %2214 = vmatmul.f32.gmra.mxu0 %v2175
    %v2215 = vpop.f32.mrf.mxu0
    %v2216 = vadd.f32 0.0, %v2215
    %2217 = vmatmul.f32.gmra.mxu0 %v2178
    %v2218 = vpop.f32.mrf.mxu0
    %v2219 = vadd.f32 0.0, %v2218
    %2220 = vmatmul.f32.gmra.mxu0 %v2181
    %v2221 = vpop.f32.mrf.mxu0
    %v2222 = vadd.f32 0.0, %v2221
    %2223 = vmatmul.f32.gmra.mxu0 %v2184
    %v2224 = vpop.f32.mrf.mxu0
    %v2225 = vadd.f32 0.0, %v2224
    %2226 = vmatmul.f32.gmra.mxu0 %v2187
    %v2227 = vpop.f32.mrf.mxu0
    %v2228 = vadd.f32 0.0, %v2227
    %2229 = vmatmul.f32.gmra.mxu0 %v2190
    %v2230 = vpop.f32.mrf.mxu0
    %v2231 = vadd.f32 0.0, %v2230
    %2232 = vmatmul.f32.gmra.mxu0 %v2193
    %v2233 = vpop.f32.mrf.mxu0
    %v2234 = vadd.f32 0.0, %v2233
    %2235 = vdwg.mxu0
    %v2236 = vmul.f32 %v2213, %v1702
    %v2237 = vmul.f32 %v2216, %v1703
    %v2238 = vmul.f32 %v2219, %v1704
    %v2239 = vmul.f32 %v2222, %v1705
    %v2240 = vmul.f32 %v2225, %v1706
    %v2241 = vmul.f32 %v2228, %v1707
    %v2242 = vmul.f32 %v2231, %v1708
    %v2243 = vmul.f32 %v2234, %v1709
    %vm2244 = vcmask 523264
    %v2246 = vsel %vm2244, %v1718, 0
    %v2249 = vsel %vm2244, %v1719, 0
    %2251 = vmatpush.msra.mxu0 0.0
    %2252 = vmatpush.msra.mxu0 0.0
    %2253 = vmatpush.msra.mxu0 0.0
    %2254 = vmatpush.msra.mxu0 0.0
    %2255 = vmatpush.msra.mxu0 0.0
    %2256 = vmatpush.msra.mxu0 0.0
    %2257 = vmatpush.msra.mxu0 0.0
    %2258 = vmatpush.msra.mxu0 0.0
    %2259 = vmatpush.msra.mxu0 %v2243
    %2260 = vmatpush.msra.mxu0 %v2242
    %2261 = vmatpush.msra.mxu0 %v2241
    %2262 = vmatpush.msra.mxu0 %v2240
    %2263 = vmatpush.msra.mxu0 %v2239
    %2264 = vmatpush.msra.mxu0 %v2238
    %2265 = vmatpush.msra.mxu0 %v2237
    %2266 = vmatpush.msra.mxu0 %v2236
    %2267 = vmatmul.f32.gmra.mxu0 %v2246
    %v2268 = vpop.f32.mrf.mxu0
    %v2269 = vadd.f32 0.0, %v2268
    %2270 = vmatmul.f32.gmra.mxu0 %v2249
    %v2271 = vpop.f32.mrf.mxu0
    %v2272 = vadd.f32 0.0, %v2271
    %2273 = vdwg.mxu0
    %v2274 = vld [vmem:[#allocation38] sm:$0xff]
    %v2275 = vld [vmem:[#allocation38 + $0x8] sm:$0xff]
    %v2276 = vld [vmem:[#allocation38 + $0x10] sm:$0xff]
    %v2277 = vld [vmem:[#allocation38 + $0x18] sm:$0xff]
    %v2278 = vld [vmem:[%s75] sm:$0x1]
    %v2280 = vperm.slane %v2278, 0
    %v2283 = vsel %vm635, %v2269, 0
    %v2286 = vsel %vm635, %v2272, 0
    %2288 = vmatpush.msra.mxu0 0.0
    %2289 = vmatpush.msra.mxu0 0.0
    %2290 = vmatpush.msra.mxu0 0.0
    %2291 = vmatpush.msra.mxu0 0.0
    %2292 = vmatpush.msra.mxu0 0.0
    %2293 = vmatpush.msra.mxu0 0.0
    %2294 = vmatpush.msra.mxu0 0.0
    %2295 = vmatpush.msra.mxu0 0.0
    %2296 = vmatpush.msra.mxu0 0.0
    %2297 = vmatpush.msra.mxu0 0.0
    %2298 = vmatpush.msra.mxu0 0.0
    %2299 = vmatpush.msra.mxu0 0.0
    %2300 = vmatpush.msra.mxu0 %v2277
    %2301 = vmatpush.msra.mxu0 %v2276
    %2302 = vmatpush.msra.mxu0 %v2275
    %2303 = vmatpush.msra.mxu0 %v2274
    %2304 = vmatmul.f32.gmra.mxu0 %v2283
    %v2305 = vpop.f32.mrf.mxu0
    %v2306 = vadd.f32 %v2280, %v2305
    %2307 = vmatmul.f32.gmra.mxu0 %v2286
    %v2308 = vpop.f32.mrf.mxu0
    %v2309 = vadd.f32 %v2280, %v2308
    %2310 = vdwg.mxu0
    %v2311 = vadd.f32 %v1692, %v2306
    %v2312 = vadd.f32 %v1693, %v2309
    %v2313 = vld [vmem:[%s93] sm:$0x1]
    %v2314 = vld [vmem:[%s95] sm:$0x1]
    %v2315 = vsel %vm635, %v2311, 0.0
    %2316 = vadd.xlane.f32.xlu0 %v2315
    %v2317 = vpop.xlane.xlu0 %2316
    %v2318 = vsel %vm635, %v2312, 0.0
    %2319 = vadd.xlane.f32.xlu0 %v2318
    %v2320 = vpop.xlane.xlu0 %2319
    %v2321 = vrcp.pop 32.0
    %v2322 = vmul.f32 32.0, %v2321
    %v2323 = vsub.f32 1.0, %v2322
    %v2324 = vmul.f32 %v2321, %v2323
    %v2325 = vadd.f32 %v2321, %v2324
    %vm2326 = vweird.f32 %v2321
    %v2327 = vsel %vm2326, %v2321, %v2325
    %v2328 = vmul.f32 %v2317, %v2327
    %v2329 = vmul.f32 %v2320, %v2327
    %v2330 = vsub.f32 %v2311, %v2328
    %v2331 = vsub.f32 %v2312, %v2329
    %v2332 = vmul.f32 %v2330, %v2330
    %v2333 = vmul.f32 %v2331, %v2331
    %v2334 = vsel %vm635, %v2332, 0.0
    %2335 = vadd.xlane.f32.xlu0 %v2334
    %v2336 = vpop.xlane.xlu0 %2335
    %v2337 = vsel %vm635, %v2333, 0.0
    %2338 = vadd.xlane.f32.xlu0 %v2337
    %v2339 = vpop.xlane.xlu0 %2338
    %v2340 = vmul.f32 %v2336, %v2327
    %v2341 = vmul.f32 %v2339, %v2327
    %v2342 = vadd.f32 %v2340, 1e-05
    %v2343 = vadd.f32 %v2341, 1e-05
    %v2344 = vrsqrt.pop %v2342
    %v2345 = vmul.f32 %v2344, %v2342
    %v2346 = vmul.f32 %v2345, %v2344
    %v2347 = vmul.f32 0.5, %v2346
    %v2348 = vsub.f32 1.5, %v2347
    %v2349 = vmul.f32 %v2344, %v2348
    %vm2350 = vweird.f32 %v2342
    %vm2351 = vweird.f32 %v2344
    %vm2352 = vmor %vm2350, %vm2351
    %v2353 = vsel %vm2352, %v2344, %v2349
    %v2354 = vrsqrt.pop %v2343
    %v2355 = vmul.f32 %v2354, %v2343
    %v2356 = vmul.f32 %v2355, %v2354
    %v2357 = vmul.f32 0.5, %v2356
    %v2358 = vsub.f32 1.5, %v2357
    %v2359 = vmul.f32 %v2354, %v2358
    %vm2360 = vweird.f32 %v2343
    %vm2361 = vweird.f32 %v2354
    %vm2362 = vmor %vm2360, %vm2361
    %v2363 = vsel %vm2362, %v2354, %v2359
    %v2364 = vmul.f32 %v2330, %v2353
    %v2365 = vmul.f32 %v2331, %v2363
    %v2367 = vperm.slane %v2313, 0
    %v2369 = vmul.f32 %v2364, %v2367
    %v2370 = vmul.f32 %v2365, %v2367
    %v2372 = vperm.slane %v2314, 0
    %v2374 = vadd.f32 %v2369, %v2372
    %v2375 = vadd.f32 %v2370, %v2372
    %v2376 = vld [vmem:[#allocation40] sm:$0xff]
    %v2377 = vld [vmem:[#allocation40 + $0x8] sm:$0xff]
    %v2378 = vld [vmem:[#allocation40 + $0x10] sm:$0xff]
    %v2379 = vld [vmem:[#allocation40 + $0x18] sm:$0xff]
    %v2380 = vld [vmem:[%s79] sm:$0x1]
    %v2382 = vperm.slane %v2380, 0
    %v2385 = vsel %vm635, %v1455, 0
    %v2388 = vsel %vm635, %v1458, 0
    %2390 = vmatpush.msra.mxu0 0.0
    %2391 = vmatpush.msra.mxu0 0.0
    %2392 = vmatpush.msra.mxu0 0.0
    %2393 = vmatpush.msra.mxu0 0.0
    %2394 = vmatpush.msra.mxu0 0.0
    %2395 = vmatpush.msra.mxu0 0.0
    %2396 = vmatpush.msra.mxu0 0.0
    %2397 = vmatpush.msra.mxu0 0.0
    %2398 = vmatpush.msra.mxu0 0.0
    %2399 = vmatpush.msra.mxu0 0.0
    %2400 = vmatpush.msra.mxu0 0.0
    %2401 = vmatpush.msra.mxu0 0.0
    %2402 = vmatpush.msra.mxu0 %v2379
    %2403 = vmatpush.msra.mxu0 %v2378
    %2404 = vmatpush.msra.mxu0 %v2377
    %2405 = vmatpush.msra.mxu0 %v2376
    %2406 = vmatmul.f32.gmra.mxu0 %v2385
    %v2407 = vpop.f32.mrf.mxu0
    %v2408 = vadd.f32 %v2382, %v2407
    %2409 = vmatmul.f32.gmra.mxu0 %v2388
    %v2410 = vpop.f32.mrf.mxu0
    %v2411 = vadd.f32 %v2382, %v2410
    %2412 = vdwg.mxu0
    %v2413 = vld [vmem:[#allocation41] sm:$0xff]
    %v2414 = vld [vmem:[#allocation41 + $0x8] sm:$0xff]
    %v2415 = vld [vmem:[#allocation41 + $0x10] sm:$0xff]
    %v2416 = vld [vmem:[#allocation41 + $0x18] sm:$0xff]
    %v2417 = vld [vmem:[%s83] sm:$0x1]
    %v2419 = vperm.slane %v2417, 0
    %v2422 = vsel %vm635, %v2408, 0
    %v2425 = vsel %vm635, %v2411, 0
    %2427 = vmatpush.msra.mxu0 0.0
    %2428 = vmatpush.msra.mxu0 0.0
    %2429 = vmatpush.msra.mxu0 0.0
    %2430 = vmatpush.msra.mxu0 0.0
    %2431 = vmatpush.msra.mxu0 0.0
    %2432 = vmatpush.msra.mxu0 0.0
    %2433 = vmatpush.msra.mxu0 0.0
    %2434 = vmatpush.msra.mxu0 0.0
    %2435 = vmatpush.msra.mxu0 0.0
    %2436 = vmatpush.msra.mxu0 0.0
    %2437 = vmatpush.msra.mxu0 0.0
    %2438 = vmatpush.msra.mxu0 0.0
    %2439 = vmatpush.msra.mxu0 %v2416
    %2440 = vmatpush.msra.mxu0 %v2415
    %2441 = vmatpush.msra.mxu0 %v2414
    %2442 = vmatpush.msra.mxu0 %v2413
    %2443 = vmatmul.f32.gmra.mxu0 %v2422
    %v2444 = vpop.f32.mrf.mxu0
    %v2445 = vadd.f32 %v2419, %v2444
    %2446 = vmatmul.f32.gmra.mxu0 %v2425
    %v2447 = vpop.f32.mrf.mxu0
    %v2448 = vadd.f32 %v2419, %v2447
    %2449 = vdwg.mxu0
    %v2450 = vadd.f32 %v2374, %v2445
    %v2451 = vadd.f32 %v2375, %v2448
    %s2452 = scalar_lea.vmem %s93, 1
    %v2453 = vld [vmem:[%s2452] sm:$0x1]
    %s2454 = scalar_lea.vmem %s95, 1
    %v2455 = vld [vmem:[%s2454] sm:$0x1]
    %v2456 = vsel %vm635, %v2450, 0.0
    %2457 = vadd.xlane.f32.xlu0 %v2456
    %v2458 = vpop.xlane.xlu0 %2457
    %v2459 = vsel %vm635, %v2451, 0.0
    %2460 = vadd.xlane.f32.xlu0 %v2459
    %v2461 = vpop.xlane.xlu0 %2460
    %v2462 = vmul.f32 %v2458, %v2327
    %v2463 = vmul.f32 %v2461, %v2327
    %v2464 = vsub.f32 %v2450, %v2462
    %v2465 = vsub.f32 %v2451, %v2463
    %v2466 = vmul.f32 %v2464, %v2464
    %v2467 = vmul.f32 %v2465, %v2465
    %v2468 = vsel %vm635, %v2466, 0.0
    %2469 = vadd.xlane.f32.xlu0 %v2468
    %v2470 = vpop.xlane.xlu0 %2469
    %v2471 = vsel %vm635, %v2467, 0.0
    %2472 = vadd.xlane.f32.xlu0 %v2471
    %v2473 = vpop.xlane.xlu0 %2472
    %v2474 = vmul.f32 %v2470, %v2327
    %v2475 = vmul.f32 %v2473, %v2327
    %v2476 = vadd.f32 %v2474, 1e-05
    %v2477 = vadd.f32 %v2475, 1e-05
    %v2478 = vrsqrt.pop %v2476
    %v2479 = vmul.f32 %v2478, %v2476
    %v2480 = vmul.f32 %v2479, %v2478
    %v2481 = vmul.f32 0.5, %v2480
    %v2482 = vsub.f32 1.5, %v2481
    %v2483 = vmul.f32 %v2478, %v2482
    %vm2484 = vweird.f32 %v2476
    %vm2485 = vweird.f32 %v2478
    %vm2486 = vmor %vm2484, %vm2485
    %v2487 = vsel %vm2486, %v2478, %v2483
    %v2488 = vrsqrt.pop %v2477
    %v2489 = vmul.f32 %v2488, %v2477
    %v2490 = vmul.f32 %v2489, %v2488
    %v2491 = vmul.f32 0.5, %v2490
    %v2492 = vsub.f32 1.5, %v2491
    %v2493 = vmul.f32 %v2488, %v2492
    %vm2494 = vweird.f32 %v2477
    %vm2495 = vweird.f32 %v2488
    %vm2496 = vmor %vm2494, %vm2495
    %v2497 = vsel %vm2496, %v2488, %v2493
    %v2498 = vmul.f32 %v2464, %v2487
    %v2499 = vmul.f32 %v2465, %v2497
    %v2501 = vperm.slane %v2453, 0
    %v2503 = vmul.f32 %v2498, %v2501
    %v2504 = vmul.f32 %v2499, %v2501
    %v2506 = vperm.slane %v2455, 0
    %v2508 = vadd.f32 %v2503, %v2506
    %v2509 = vadd.f32 %v2504, %v2506
    %v2510 = vld [vmem:[%s85] sm:$0xff]
    %v2511 = vld [vmem:[%s85 + $0x8] sm:$0xff]
    %v2512 = vld [vmem:[%s85 + $0x10] sm:$0xff]
    %v2513 = vld [vmem:[%s85 + $0x18] sm:$0xff]
    %v2514 = vld [vmem:[%s87] sm:$0x1]
    %v2516 = vperm.slane %v2514, 0
    %v2519 = vsel %vm635, %v2508, 0
    %v2522 = vsel %vm635, %v2509, 0
    %2524 = vmatpush.msra.mxu0 0.0
    %2525 = vmatpush.msra.mxu0 0.0
    %2526 = vmatpush.msra.mxu0 0.0
    %2527 = vmatpush.msra.mxu0 0.0
    %2528 = vmatpush.msra.mxu0 0.0
    %2529 = vmatpush.msra.mxu0 0.0
    %2530 = vmatpush.msra.mxu0 0.0
    %2531 = vmatpush.msra.mxu0 0.0
    %2532 = vmatpush.msra.mxu0 0.0
    %2533 = vmatpush.msra.mxu0 0.0
    %2534 = vmatpush.msra.mxu0 0.0
    %2535 = vmatpush.msra.mxu0 0.0
    %2536 = vmatpush.msra.mxu0 %v2513
    %2537 = vmatpush.msra.mxu0 %v2512
    %2538 = vmatpush.msra.mxu0 %v2511
    %2539 = vmatpush.msra.mxu0 %v2510
    %2540 = vmatmul.f32.gmra.mxu0 %v2519
    %v2541 = vpop.f32.mrf.mxu0
    %v2542 = vadd.f32 %v2516, %v2541
    %2543 = vmatmul.f32.gmra.mxu0 %v2522
    %v2544 = vpop.f32.mrf.mxu0
    %v2545 = vadd.f32 %v2516, %v2544
    %2546 = vdwg.mxu0
    %v2547 = vmax.f32 %v2542, 0.0
    %v2548 = vmax.f32 %v2545, 0.0
    %v2549 = vld [vmem:[%s89] sm:$0xff]
    %v2550 = vld [vmem:[%s89 + $0x8] sm:$0xff]
    %v2551 = vld [vmem:[%s89 + $0x10] sm:$0xff]
    %v2552 = vld [vmem:[%s89 + $0x18] sm:$0xff]
    %v2553 = vld [vmem:[%s89 + $0x20] sm:$0xff]
    %v2554 = vld [vmem:[%s89 + $0x28] sm:$0xff]
    %v2555 = vld [vmem:[%s89 + $0x30] sm:$0xff]
    %v2556 = vld [vmem:[%s89 + $0x38] sm:$0xff]
    %v2557 = vld [vmem:[%s91] sm:$0x1]
    %v2559 = vperm.slane %v2557, 0
    %v2562 = vsel %vm2244, %v2547, 0
    %v2565 = vsel %vm2244, %v2548, 0
    %2567 = vmatpush.msra.mxu0 0.0
    %2568 = vmatpush.msra.mxu0 0.0
    %2569 = vmatpush.msra.mxu0 0.0
    %2570 = vmatpush.msra.mxu0 0.0
    %2571 = vmatpush.msra.mxu0 0.0
    %2572 = vmatpush.msra.mxu0 0.0
    %2573 = vmatpush.msra.mxu0 0.0
    %2574 = vmatpush.msra.mxu0 0.0
    %2575 = vmatpush.msra.mxu0 %v2556
    %2576 = vmatpush.msra.mxu0 %v2555
    %2577 = vmatpush.msra.mxu0 %v2554
    %2578 = vmatpush.msra.mxu0 %v2553
    %2579 = vmatpush.msra.mxu0 %v2552
    %2580 = vmatpush.msra.mxu0 %v2551
    %2581 = vmatpush.msra.mxu0 %v2550
    %2582 = vmatpush.msra.mxu0 %v2549
    %2583 = vmatmul.f32.gmra.mxu0 %v2562
    %v2584 = vpop.f32.mrf.mxu0
    %v2585 = vadd.f32 %v2559, %v2584
    %2586 = vmatmul.f32.gmra.mxu0 %v2565
    %v2587 = vpop.f32.mrf.mxu0
    %v2588 = vadd.f32 %v2559, %v2587
    %2589 = vdwg.mxu0
    %v2590 = vadd.f32 %v2508, %v2585
    %v2591 = vadd.f32 %v2509, %v2588
    %s2592 = scalar_lea.vmem %s93, 2
    %v2593 = vld [vmem:[%s2592] sm:$0x1]
    %s2594 = scalar_lea.vmem %s95, 2
    %v2595 = vld [vmem:[%s2594] sm:$0x1]
    %v2596 = vsel %vm635, %v2590, 0.0
    %2597 = vadd.xlane.f32.xlu0 %v2596
    %v2598 = vpop.xlane.xlu0 %2597
    %v2599 = vsel %vm635, %v2591, 0.0
    %2600 = vadd.xlane.f32.xlu0 %v2599
    %v2601 = vpop.xlane.xlu0 %2600
    %v2602 = vmul.f32 %v2598, %v2327
    %v2603 = vmul.f32 %v2601, %v2327
    %v2604 = vsub.f32 %v2590, %v2602
    %v2605 = vsub.f32 %v2591, %v2603
    %v2606 = vmul.f32 %v2604, %v2604
    %v2607 = vmul.f32 %v2605, %v2605
    %v2608 = vsel %vm635, %v2606, 0.0
    %2609 = vadd.xlane.f32.xlu0 %v2608
    %v2610 = vpop.xlane.xlu0 %2609
    %v2611 = vsel %vm635, %v2607, 0.0
    %2612 = vadd.xlane.f32.xlu0 %v2611
    %v2613 = vpop.xlane.xlu0 %2612
    %v2614 = vmul.f32 %v2610, %v2327
    %v2615 = vmul.f32 %v2613, %v2327
    %v2616 = vadd.f32 %v2614, 1e-05
    %v2617 = vadd.f32 %v2615, 1e-05
    %v2618 = vrsqrt.pop %v2616
    %v2619 = vmul.f32 %v2618, %v2616
    %v2620 = vmul.f32 %v2619, %v2618
    %v2621 = vmul.f32 0.5, %v2620
    %v2622 = vsub.f32 1.5, %v2621
    %v2623 = vmul.f32 %v2618, %v2622
    %vm2624 = vweird.f32 %v2616
    %vm2625 = vweird.f32 %v2618
    %vm2626 = vmor %vm2624, %vm2625
    %v2627 = vsel %vm2626, %v2618, %v2623
    %v2628 = vrsqrt.pop %v2617
    %v2629 = vmul.f32 %v2628, %v2617
    %v2630 = vmul.f32 %v2629, %v2628
    %v2631 = vmul.f32 0.5, %v2630
    %v2632 = vsub.f32 1.5, %v2631
    %v2633 = vmul.f32 %v2628, %v2632
    %vm2634 = vweird.f32 %v2617
    %vm2635 = vweird.f32 %v2628
    %vm2636 = vmor %vm2634, %vm2635
    %v2637 = vsel %vm2636, %v2628, %v2633
    %v2638 = vmul.f32 %v2604, %v2627
    %v2639 = vmul.f32 %v2605, %v2637
    %v2641 = vperm.slane %v2593, 0
    %v2643 = vmul.f32 %v2638, %v2641
    %v2644 = vmul.f32 %v2639, %v2641
    %v2646 = vperm.slane %v2595, 0
    %v2648 = vadd.f32 %v2643, %v2646
    %v2649 = vadd.f32 %v2644, %v2646
    %s2650 = scalar_lea.vmem [#allocation34], 32
    %v2651 = vld [vmem:[%s2650] sm:$0xff]
    %v2652 = vld [vmem:[%s2650 + $0x8] sm:$0xff]
    %v2653 = vld [vmem:[%s2650 + $0x10] sm:$0xff]
    %v2654 = vld [vmem:[%s2650 + $0x18] sm:$0xff]
    %s2655 = scalar_lea.vmem %s63, 1
    %v2656 = vld [vmem:[%s2655] sm:$0x1]
    %v2658 = vperm.slane %v2656, 0
    %v2661 = vsel %vm635, %v2648, 0
    %v2664 = vsel %vm635, %v2649, 0
    %2666 = vmatpush.msra.mxu0 0.0
    %2667 = vmatpush.msra.mxu0 0.0
    %2668 = vmatpush.msra.mxu0 0.0
    %2669 = vmatpush.msra.mxu0 0.0
    %2670 = vmatpush.msra.mxu0 0.0
    %2671 = vmatpush.msra.mxu0 0.0
    %2672 = vmatpush.msra.mxu0 0.0
    %2673 = vmatpush.msra.mxu0 0.0
    %2674 = vmatpush.msra.mxu0 0.0
    %2675 = vmatpush.msra.mxu0 0.0
    %2676 = vmatpush.msra.mxu0 0.0
    %2677 = vmatpush.msra.mxu0 0.0
    %2678 = vmatpush.msra.mxu0 %v2654
    %2679 = vmatpush.msra.mxu0 %v2653
    %2680 = vmatpush.msra.mxu0 %v2652
    %2681 = vmatpush.msra.mxu0 %v2651
    %2682 = vmatmul.f32.gmra.mxu0 %v2661
    %v2683 = vpop.f32.mrf.mxu0
    %v2684 = vadd.f32 %v2658, %v2683
    %2685 = vmatmul.f32.gmra.mxu0 %v2664
    %v2686 = vpop.f32.mrf.mxu0
    %v2687 = vadd.f32 %v2658, %v2686
    %2688 = vdwg.mxu0
    %s2689 = scalar_lea.vmem [#allocation35], 32
    %v2690 = vld [vmem:[%s2689] sm:$0xff]
    %v2691 = vld [vmem:[%s2689 + $0x8] sm:$0xff]
    %v2692 = vld [vmem:[%s2689 + $0x10] sm:$0xff]
    %v2693 = vld [vmem:[%s2689 + $0x18] sm:$0xff]
    %s2694 = scalar_lea.vmem %s67, 1
    %v2695 = vld [vmem:[%s2694] sm:$0x1]
    %v2697 = vperm.slane %v2695, 0
    %2699 = vmatpush.msra.mxu0 0.0
    %2700 = vmatpush.msra.mxu0 0.0
    %2701 = vmatpush.msra.mxu0 0.0
    %2702 = vmatpush.msra.mxu0 0.0
    %2703 = vmatpush.msra.mxu0 0.0
    %2704 = vmatpush.msra.mxu0 0.0
    %2705 = vmatpush.msra.mxu0 0.0
    %2706 = vmatpush.msra.mxu0 0.0
    %2707 = vmatpush.msra.mxu0 0.0
    %2708 = vmatpush.msra.mxu0 0.0
    %2709 = vmatpush.msra.mxu0 0.0
    %2710 = vmatpush.msra.mxu0 0.0
    %2711 = vmatpush.msra.mxu0 %v2693
    %2712 = vmatpush.msra.mxu0 %v2692
    %2713 = vmatpush.msra.mxu0 %v2691
    %2714 = vmatpush.msra.mxu0 %v2690
    %2715 = vmatmul.f32.gmra.mxu0 %v2661
    %v2716 = vpop.f32.mrf.mxu0
    %v2717 = vadd.f32 %v2697, %v2716
    %2718 = vmatmul.f32.gmra.mxu0 %v2664
    %v2719 = vpop.f32.mrf.mxu0
    %v2720 = vadd.f32 %v2697, %v2719
    %2721 = vdwg.mxu0
    %s2722 = scalar_lea.vmem [#allocation37], 32
    %v2723 = vld [vmem:[%s2722] sm:$0xff]
    %v2724 = vld [vmem:[%s2722 + $0x8] sm:$0xff]
    %v2725 = vld [vmem:[%s2722 + $0x10] sm:$0xff]
    %v2726 = vld [vmem:[%s2722 + $0x18] sm:$0xff]
    %s2727 = scalar_lea.vmem %s71, 1
    %v2728 = vld [vmem:[%s2727] sm:$0x1]
    %v2730 = vperm.slane %v2728, 0
    %2732 = vmatpush.msra.mxu0 0.0
    %2733 = vmatpush.msra.mxu0 0.0
    %2734 = vmatpush.msra.mxu0 0.0
    %2735 = vmatpush.msra.mxu0 0.0
    %2736 = vmatpush.msra.mxu0 0.0
    %2737 = vmatpush.msra.mxu0 0.0
    %2738 = vmatpush.msra.mxu0 0.0
    %2739 = vmatpush.msra.mxu0 0.0
    %2740 = vmatpush.msra.mxu0 0.0
    %2741 = vmatpush.msra.mxu0 0.0
    %2742 = vmatpush.msra.mxu0 0.0
    %2743 = vmatpush.msra.mxu0 0.0
    %2744 = vmatpush.msra.mxu0 %v2726
    %2745 = vmatpush.msra.mxu0 %v2725
    %2746 = vmatpush.msra.mxu0 %v2724
    %2747 = vmatpush.msra.mxu0 %v2723
    %2748 = vmatmul.f32.gmra.mxu0 %v2661
    %v2749 = vpop.f32.mrf.mxu0
    %v2750 = vadd.f32 %v2730, %v2749
    %2751 = vmatmul.f32.gmra.mxu0 %v2664
    %v2752 = vpop.f32.mrf.mxu0
    %v2753 = vadd.f32 %v2730, %v2752
    %2754 = vdwg.mxu0
    %2755 = vmatpush.msra.mxu0 0.0
    %2756 = vmatpush.msra.mxu0 0.0
    %2757 = vmatpush.msra.mxu0 0.0
    %2758 = vmatpush.msra.mxu0 0.0
    %2759 = vmatpush.msra.mxu0 0.0
    %2760 = vmatpush.msra.mxu0 0.0
    %2761 = vmatpush.msra.mxu0 0.0
    %2762 = vmatpush.msra.mxu0 0.0
    %2763 = vmatpush.msra.mxu0 0.0
    %2764 = vmatpush.msra.mxu0 0.0
    %2765 = vmatpush.msra.mxu0 0.0
    %2766 = vmatpush.msra.mxu0 0.0
    %2767 = vmatpush.msra.mxu0 0.0
    %2768 = vmatpush.msra.mxu0 0.0
    %2769 = vmatpush.msra.mxu0 %v2687
    %2770 = vmatpush.msra.mxu0 %v2684
    %2771 = vmatmul.f32.gmra.mxu0 %v1820
    %v2772 = vpop.f32.mrf.mxu0
    %v2773 = vadd.f32 0.0, %v2772
    %2774 = vmatmul.f32.gmra.mxu0 %v1823
    %v2775 = vpop.f32.mrf.mxu0
    %v2776 = vadd.f32 0.0, %v2775
    %2777 = vmatmul.f32.gmra.mxu0 %v1826
    %v2778 = vpop.f32.mrf.mxu0
    %v2779 = vadd.f32 0.0, %v2778
    %2780 = vmatmul.f32.gmra.mxu0 %v1829
    %v2781 = vpop.f32.mrf.mxu0
    %v2782 = vadd.f32 0.0, %v2781
    %2783 = vmatmul.f32.gmra.mxu0 %v1832
    %v2784 = vpop.f32.mrf.mxu0
    %v2785 = vadd.f32 0.0, %v2784
    %2786 = vmatmul.f32.gmra.mxu0 %v1835
    %v2787 = vpop.f32.mrf.mxu0
    %v2788 = vadd.f32 0.0, %v2787
    %2789 = vmatmul.f32.gmra.mxu0 %v1838
    %v2790 = vpop.f32.mrf.mxu0
    %v2791 = vadd.f32 0.0, %v2790
    %2792 = vmatmul.f32.gmra.mxu0 %v1841
    %v2793 = vpop.f32.mrf.mxu0
    %v2794 = vadd.f32 0.0, %v2793
    %2795 = vdwg.mxu0
    %v2796 = vmul.f32 %v2773, %v1702
    %v2797 = vmul.f32 %v2776, %v1703
    %v2798 = vmul.f32 %v2779, %v1704
    %v2799 = vmul.f32 %v2782, %v1705
    %v2800 = vmul.f32 %v2785, %v1706
    %v2801 = vmul.f32 %v2788, %v1707
    %v2802 = vmul.f32 %v2791, %v1708
    %v2803 = vmul.f32 %v2794, %v1709
    %v2805 = vsel %vm635, %v2796, 0
    %v2808 = vsel %vm635, %v2797, 0
    %v2811 = vsel %vm635, %v2798, 0
    %v2814 = vsel %vm635, %v2799, 0
    %v2817 = vsel %vm635, %v2800, 0
    %v2820 = vsel %vm635, %v2801, 0
    %v2823 = vsel %vm635, %v2802, 0
    %v2826 = vsel %vm635, %v2803, 0
    %v2829 = vsel %vm635, %v2717, 0
    %v2832 = vsel %vm635, %v2720, 0
    %2834 = vmatpush.xpose.msra.mxu0 0.0
    %2835 = vmatpush.xpose.msra.mxu0 0.0
    %2836 = vmatpush.xpose.msra.mxu0 0.0
    %2837 = vmatpush.xpose.msra.mxu0 0.0
    %2838 = vmatpush.xpose.msra.mxu0 0.0
    %2839 = vmatpush.xpose.msra.mxu0 0.0
    %2840 = vmatpush.xpose.msra.mxu0 0.0
    %2841 = vmatpush.xpose.msra.mxu0 0.0
    %2842 = vmatpush.xpose.msra.mxu0 0.0
    %2843 = vmatpush.xpose.msra.mxu0 0.0
    %2844 = vmatpush.xpose.msra.mxu0 0.0
    %2845 = vmatpush.xpose.msra.mxu0 0.0
    %2846 = vmatpush.xpose.msra.mxu0 0.0
    %2847 = vmatpush.xpose.msra.mxu0 0.0
    %2848 = vmatpush.xpose.msra.mxu0 %v2832
    %2849 = vmatpush.xpose.msra.mxu0 %v2829
    %2850 = vmatmul.f32.gmra.mxu0 %v2805
    %v2851 = vpop.f32.mrf.mxu0
    %v2852 = vadd.f32 0.0, %v2851
    %2853 = vmatmul.f32.gmra.mxu0 %v2808
    %v2854 = vpop.f32.mrf.mxu0
    %v2855 = vadd.f32 0.0, %v2854
    %2856 = vmatmul.f32.gmra.mxu0 %v2811
    %v2857 = vpop.f32.mrf.mxu0
    %v2858 = vadd.f32 0.0, %v2857
    %2859 = vmatmul.f32.gmra.mxu0 %v2814
    %v2860 = vpop.f32.mrf.mxu0
    %v2861 = vadd.f32 0.0, %v2860
    %2862 = vmatmul.f32.gmra.mxu0 %v2817
    %v2863 = vpop.f32.mrf.mxu0
    %v2864 = vadd.f32 0.0, %v2863
    %2865 = vmatmul.f32.gmra.mxu0 %v2820
    %v2866 = vpop.f32.mrf.mxu0
    %v2867 = vadd.f32 0.0, %v2866
    %2868 = vmatmul.f32.gmra.mxu0 %v2823
    %v2869 = vpop.f32.mrf.mxu0
    %v2870 = vadd.f32 0.0, %v2869
    %2871 = vmatmul.f32.gmra.mxu0 %v2826
    %v2872 = vpop.f32.mrf.mxu0
    %v2873 = vadd.f32 0.0, %v2872
    %2874 = vdwg.mxu0
    %v2875 = vmul.f32 %v2852, 0.35355338
    %v2876 = vmul.f32 %v2855, 0.35355338
    %v2877 = vmul.f32 %v2858, 0.35355338
    %v2878 = vmul.f32 %v2861, 0.35355338
    %v2879 = vmul.f32 %v2864, 0.35355338
    %v2880 = vmul.f32 %v2867, 0.35355338
    %v2881 = vmul.f32 %v2870, 0.35355338
    %v2882 = vmul.f32 %v2873, 0.35355338
    %v2883 = vadd.f32 %v2875, %v1710
    %v2884 = vadd.f32 %v2876, %v1711
    %v2885 = vadd.f32 %v2877, %v1712
    %v2886 = vadd.f32 %v2878, %v1713
    %v2887 = vadd.f32 %v2879, %v1714
    %v2888 = vadd.f32 %v2880, %v1715
    %v2889 = vadd.f32 %v2881, %v1716
    %v2890 = vadd.f32 %v2882, %v1717
    %v2891 = vsel %vm872, %v2883, -inf
    %2892 = vmax.xlane.f32.xlu0 %v2891
    %v2893 = vpop.xlane.xlu0 %2892
    %v2894 = vsel %vm872, %v2884, -inf
    %2895 = vmax.xlane.f32.xlu0 %v2894
    %v2896 = vpop.xlane.xlu0 %2895
    %v2897 = vsel %vm872, %v2885, -inf
    %2898 = vmax.xlane.f32.xlu0 %v2897
    %v2899 = vpop.xlane.xlu0 %2898
    %v2900 = vsel %vm872, %v2886, -inf
    %2901 = vmax.xlane.f32.xlu0 %v2900
    %v2902 = vpop.xlane.xlu0 %2901
    %v2903 = vsel %vm872, %v2887, -inf
    %2904 = vmax.xlane.f32.xlu0 %v2903
    %v2905 = vpop.xlane.xlu0 %2904
    %v2906 = vsel %vm872, %v2888, -inf
    %2907 = vmax.xlane.f32.xlu0 %v2906
    %v2908 = vpop.xlane.xlu0 %2907
    %v2909 = vsel %vm872, %v2889, -inf
    %2910 = vmax.xlane.f32.xlu0 %v2909
    %v2911 = vpop.xlane.xlu0 %2910
    %v2912 = vsel %vm872, %v2890, -inf
    %2913 = vmax.xlane.f32.xlu0 %v2912
    %v2914 = vpop.xlane.xlu0 %2913
    %v2915 = vsub.f32 %v2883, %v2893
    %v2916 = vsub.f32 %v2884, %v2896
    %v2917 = vsub.f32 %v2885, %v2899
    %v2918 = vsub.f32 %v2886, %v2902
    %v2919 = vsub.f32 %v2887, %v2905
    %v2920 = vsub.f32 %v2888, %v2908
    %v2921 = vsub.f32 %v2889, %v2911
    %v2922 = vsub.f32 %v2890, %v2914
    %v2923 = vmul.f32 %v2915, 1.442695
    %v2924 = vpow.pop %v2923
    %v2925 = vmul.f32 %v2916, 1.442695
    %v2926 = vpow.pop %v2925
    %v2927 = vmul.f32 %v2917, 1.442695
    %v2928 = vpow.pop %v2927
    %v2929 = vmul.f32 %v2918, 1.442695
    %v2930 = vpow.pop %v2929
    %v2931 = vmul.f32 %v2919, 1.442695
    %v2932 = vpow.pop %v2931
    %v2933 = vmul.f32 %v2920, 1.442695
    %v2934 = vpow.pop %v2933
    %v2935 = vmul.f32 %v2921, 1.442695
    %v2936 = vpow.pop %v2935
    %v2937 = vmul.f32 %v2922, 1.442695
    %v2938 = vpow.pop %v2937
    %v2939 = vsel %vm872, %v2924, 0.0
    %2940 = vadd.xlane.f32.xlu0 %v2939
    %v2941 = vpop.xlane.xlu0 %2940
    %v2942 = vsel %vm872, %v2926, 0.0
    %2943 = vadd.xlane.f32.xlu0 %v2942
    %v2944 = vpop.xlane.xlu0 %2943
    %v2945 = vsel %vm872, %v2928, 0.0
    %2946 = vadd.xlane.f32.xlu0 %v2945
    %v2947 = vpop.xlane.xlu0 %2946
    %v2948 = vsel %vm872, %v2930, 0.0
    %2949 = vadd.xlane.f32.xlu0 %v2948
    %v2950 = vpop.xlane.xlu0 %2949
    %v2951 = vsel %vm872, %v2932, 0.0
    %2952 = vadd.xlane.f32.xlu0 %v2951
    %v2953 = vpop.xlane.xlu0 %2952
    %v2954 = vsel %vm872, %v2934, 0.0
    %2955 = vadd.xlane.f32.xlu0 %v2954
    %v2956 = vpop.xlane.xlu0 %2955
    %v2957 = vsel %vm872, %v2936, 0.0
    %2958 = vadd.xlane.f32.xlu0 %v2957
    %v2959 = vpop.xlane.xlu0 %2958
    %v2960 = vsel %vm872, %v2938, 0.0
    %2961 = vadd.xlane.f32.xlu0 %v2960
    %v2962 = vpop.xlane.xlu0 %2961
    %v2963 = vrcp.pop %v2941
    %v2964 = vmul.f32 %v2941, %v2963
    %v2965 = vsub.f32 1.0, %v2964
    %v2966 = vmul.f32 %v2963, %v2965
    %v2967 = vadd.f32 %v2963, %v2966
    %vm2968 = vweird.f32 %v2941
    %vm2969 = vweird.f32 %v2963
    %vm2970 = vmor %vm2968, %vm2969
    %v2971 = vsel %vm2970, %v2963, %v2967
    %v2972 = vand.u32 2147483647, %v2941
    %vm2973 = vcmp.eq.f32.partialorder %v2972, 8.507059e+37
    %v2974 = vand.u32 %v2941, 2147483648
    %v2975 = vor.u32 1.1754944e-38, %v2974
    %v2976 = vsel %vm2973, %v2975, %v2971
    %v2977 = vmul.f32 %v2924, %v2976
    %v2978 = vrcp.pop %v2944
    %v2979 = vmul.f32 %v2944, %v2978
    %v2980 = vsub.f32 1.0, %v2979
    %v2981 = vmul.f32 %v2978, %v2980
    %v2982 = vadd.f32 %v2978, %v2981
    %vm2983 = vweird.f32 %v2944
    %vm2984 = vweird.f32 %v2978
    %vm2985 = vmor %vm2983, %vm2984
    %v2986 = vsel %vm2985, %v2978, %v2982
    %v2987 = vand.u32 2147483647, %v2944
    %vm2988 = vcmp.eq.f32.partialorder %v2987, 8.507059e+37
    %v2989 = vand.u32 %v2944, 2147483648
    %v2990 = vor.u32 1.1754944e-38, %v2989
    %v2991 = vsel %vm2988, %v2990, %v2986
    %v2992 = vmul.f32 %v2926, %v2991
    %v2993 = vrcp.pop %v2947
    %v2994 = vmul.f32 %v2947, %v2993
    %v2995 = vsub.f32 1.0, %v2994
    %v2996 = vmul.f32 %v2993, %v2995
    %v2997 = vadd.f32 %v2993, %v2996
    %vm2998 = vweird.f32 %v2947
    %vm2999 = vweird.f32 %v2993
    %vm3000 = vmor %vm2998, %vm2999
    %v3001 = vsel %vm3000, %v2993, %v2997
    %v3002 = vand.u32 2147483647, %v2947
    %vm3003 = vcmp.eq.f32.partialorder %v3002, 8.507059e+37
    %v3004 = vand.u32 %v2947, 2147483648
    %v3005 = vor.u32 1.1754944e-38, %v3004
    %v3006 = vsel %vm3003, %v3005, %v3001
    %v3007 = vmul.f32 %v2928, %v3006
    %v3008 = vrcp.pop %v2950
    %v3009 = vmul.f32 %v2950, %v3008
    %v3010 = vsub.f32 1.0, %v3009
    %v3011 = vmul.f32 %v3008, %v3010
    %v3012 = vadd.f32 %v3008, %v3011
    %vm3013 = vweird.f32 %v2950
    %vm3014 = vweird.f32 %v3008
    %vm3015 = vmor %vm3013, %vm3014
    %v3016 = vsel %vm3015, %v3008, %v3012
    %v3017 = vand.u32 2147483647, %v2950
    %vm3018 = vcmp.eq.f32.partialorder %v3017, 8.507059e+37
    %v3019 = vand.u32 %v2950, 2147483648
    %v3020 = vor.u32 1.1754944e-38, %v3019
    %v3021 = vsel %vm3018, %v3020, %v3016
    %v3022 = vmul.f32 %v2930, %v3021
    %v3023 = vrcp.pop %v2953
    %v3024 = vmul.f32 %v2953, %v3023
    %v3025 = vsub.f32 1.0, %v3024
    %v3026 = vmul.f32 %v3023, %v3025
    %v3027 = vadd.f32 %v3023, %v3026
    %vm3028 = vweird.f32 %v2953
    %vm3029 = vweird.f32 %v3023
    %vm3030 = vmor %vm3028, %vm3029
    %v3031 = vsel %vm3030, %v3023, %v3027
    %v3032 = vand.u32 2147483647, %v2953
    %vm3033 = vcmp.eq.f32.partialorder %v3032, 8.507059e+37
    %v3034 = vand.u32 %v2953, 2147483648
    %v3035 = vor.u32 1.1754944e-38, %v3034
    %v3036 = vsel %vm3033, %v3035, %v3031
    %v3037 = vmul.f32 %v2932, %v3036
    %v3038 = vrcp.pop %v2956
    %v3039 = vmul.f32 %v2956, %v3038
    %v3040 = vsub.f32 1.0, %v3039
    %v3041 = vmul.f32 %v3038, %v3040
    %v3042 = vadd.f32 %v3038, %v3041
    %vm3043 = vweird.f32 %v2956
    %vm3044 = vweird.f32 %v3038
    %vm3045 = vmor %vm3043, %vm3044
    %v3046 = vsel %vm3045, %v3038, %v3042
    %v3047 = vand.u32 2147483647, %v2956
    %vm3048 = vcmp.eq.f32.partialorder %v3047, 8.507059e+37
    %v3049 = vand.u32 %v2956, 2147483648
    %v3050 = vor.u32 1.1754944e-38, %v3049
    %v3051 = vsel %vm3048, %v3050, %v3046
    %v3052 = vmul.f32 %v2934, %v3051
    %v3053 = vrcp.pop %v2959
    %v3054 = vmul.f32 %v2959, %v3053
    %v3055 = vsub.f32 1.0, %v3054
    %v3056 = vmul.f32 %v3053, %v3055
    %v3057 = vadd.f32 %v3053, %v3056
    %vm3058 = vweird.f32 %v2959
    %vm3059 = vweird.f32 %v3053
    %vm3060 = vmor %vm3058, %vm3059
    %v3061 = vsel %vm3060, %v3053, %v3057
    %v3062 = vand.u32 2147483647, %v2959
    %vm3063 = vcmp.eq.f32.partialorder %v3062, 8.507059e+37
    %v3064 = vand.u32 %v2959, 2147483648
    %v3065 = vor.u32 1.1754944e-38, %v3064
    %v3066 = vsel %vm3063, %v3065, %v3061
    %v3067 = vmul.f32 %v2936, %v3066
    %v3068 = vrcp.pop %v2962
    %v3069 = vmul.f32 %v2962, %v3068
    %v3070 = vsub.f32 1.0, %v3069
    %v3071 = vmul.f32 %v3068, %v3070
    %v3072 = vadd.f32 %v3068, %v3071
    %vm3073 = vweird.f32 %v2962
    %vm3074 = vweird.f32 %v3068
    %vm3075 = vmor %vm3073, %vm3074
    %v3076 = vsel %vm3075, %v3068, %v3072
    %v3077 = vand.u32 2147483647, %v2962
    %vm3078 = vcmp.eq.f32.partialorder %v3077, 8.507059e+37
    %v3079 = vand.u32 %v2962, 2147483648
    %v3080 = vor.u32 1.1754944e-38, %v3079
    %v3081 = vsel %vm3078, %v3080, %v3076
    %v3082 = vmul.f32 %v2938, %v3081
    %v3084 = vsel %vm872, %v2977, 0
    %v3087 = vsel %vm872, %v2992, 0
    %v3090 = vsel %vm872, %v3007, 0
    %v3093 = vsel %vm872, %v3022, 0
    %v3096 = vsel %vm872, %v3037, 0
    %v3099 = vsel %vm872, %v3052, 0
    %v3102 = vsel %vm872, %v3067, 0
    %v3105 = vsel %vm872, %v3082, 0
    %3107 = vmatpush.msra.mxu0 0.0
    %3108 = vmatpush.msra.mxu0 0.0
    %3109 = vmatpush.msra.mxu0 0.0
    %3110 = vmatpush.msra.mxu0 0.0
    %3111 = vmatpush.msra.mxu0 0.0
    %3112 = vmatpush.msra.mxu0 0.0
    %3113 = vmatpush.msra.mxu0 0.0
    %3114 = vmatpush.msra.mxu0 0.0
    %3115 = vmatpush.msra.mxu0 0.0
    %3116 = vmatpush.msra.mxu0 0.0
    %3117 = vmatpush.msra.mxu0 0.0
    %3118 = vmatpush.msra.mxu0 0.0
    %3119 = vmatpush.msra.mxu0 0.0
    %3120 = vmatpush.msra.mxu0 0.0
    %3121 = vmatpush.msra.mxu0 %v2753
    %3122 = vmatpush.msra.mxu0 %v2750
    %3123 = vmatmul.f32.gmra.mxu0 %v3084
    %v3124 = vpop.f32.mrf.mxu0
    %v3125 = vadd.f32 0.0, %v3124
    %3126 = vmatmul.f32.gmra.mxu0 %v3087
    %v3127 = vpop.f32.mrf.mxu0
    %v3128 = vadd.f32 0.0, %v3127
    %3129 = vmatmul.f32.gmra.mxu0 %v3090
    %v3130 = vpop.f32.mrf.mxu0
    %v3131 = vadd.f32 0.0, %v3130
    %3132 = vmatmul.f32.gmra.mxu0 %v3093
    %v3133 = vpop.f32.mrf.mxu0
    %v3134 = vadd.f32 0.0, %v3133
    %3135 = vmatmul.f32.gmra.mxu0 %v3096
    %v3136 = vpop.f32.mrf.mxu0
    %v3137 = vadd.f32 0.0, %v3136
    %3138 = vmatmul.f32.gmra.mxu0 %v3099
    %v3139 = vpop.f32.mrf.mxu0
    %v3140 = vadd.f32 0.0, %v3139
    %3141 = vmatmul.f32.gmra.mxu0 %v3102
    %v3142 = vpop.f32.mrf.mxu0
    %v3143 = vadd.f32 0.0, %v3142
    %3144 = vmatmul.f32.gmra.mxu0 %v3105
    %v3145 = vpop.f32.mrf.mxu0
    %v3146 = vadd.f32 0.0, %v3145
    %3147 = vdwg.mxu0
    %v3148 = vmul.f32 %v3125, %v1702
    %v3149 = vmul.f32 %v3128, %v1703
    %v3150 = vmul.f32 %v3131, %v1704
    %v3151 = vmul.f32 %v3134, %v1705
    %v3152 = vmul.f32 %v3137, %v1706
    %v3153 = vmul.f32 %v3140, %v1707
    %v3154 = vmul.f32 %v3143, %v1708
    %v3155 = vmul.f32 %v3146, %v1709
    %3156 = vmatpush.msra.mxu0 0.0
    %3157 = vmatpush.msra.mxu0 0.0
    %3158 = vmatpush.msra.mxu0 0.0
    %3159 = vmatpush.msra.mxu0 0.0
    %3160 = vmatpush.msra.mxu0 0.0
    %3161 = vmatpush.msra.mxu0 0.0
    %3162 = vmatpush.msra.mxu0 0.0
    %3163 = vmatpush.msra.mxu0 0.0
    %3164 = vmatpush.msra.mxu0 %v3155
    %3165 = vmatpush.msra.mxu0 %v3154
    %3166 = vmatpush.msra.mxu0 %v3153
    %3167 = vmatpush.msra.mxu0 %v3152
    %3168 = vmatpush.msra.mxu0 %v3151
    %3169 = vmatpush.msra.mxu0 %v3150
    %3170 = vmatpush.msra.mxu0 %v3149
    %3171 = vmatpush.msra.mxu0 %v3148
    %3172 = vmatmul.f32.gmra.mxu0 %v2246
    %v3173 = vpop.f32.mrf.mxu0
    %v3174 = vadd.f32 0.0, %v3173
    %3175 = vmatmul.f32.gmra.mxu0 %v2249
    %v3176 = vpop.f32.mrf.mxu0
    %v3177 = vadd.f32 0.0, %v3176
    %3178 = vdwg.mxu0
    %s3179 = scalar_lea.vmem [#allocation38], 32
    %v3180 = vld [vmem:[%s3179] sm:$0xff]
    %v3181 = vld [vmem:[%s3179 + $0x8] sm:$0xff]
    %v3182 = vld [vmem:[%s3179 + $0x10] sm:$0xff]
    %v3183 = vld [vmem:[%s3179 + $0x18] sm:$0xff]
    %s3184 = scalar_lea.vmem %s75, 1
    %v3185 = vld [vmem:[%s3184] sm:$0x1]
    %v3187 = vperm.slane %v3185, 0
    %v3190 = vsel %vm635, %v3174, 0
    %v3193 = vsel %vm635, %v3177, 0
    %3195 = vmatpush.msra.mxu0 0.0
    %3196 = vmatpush.msra.mxu0 0.0
    %3197 = vmatpush.msra.mxu0 0.0
    %3198 = vmatpush.msra.mxu0 0.0
    %3199 = vmatpush.msra.mxu0 0.0
    %3200 = vmatpush.msra.mxu0 0.0
    %3201 = vmatpush.msra.mxu0 0.0
    %3202 = vmatpush.msra.mxu0 0.0
    %3203 = vmatpush.msra.mxu0 0.0
    %3204 = vmatpush.msra.mxu0 0.0
    %3205 = vmatpush.msra.mxu0 0.0
    %3206 = vmatpush.msra.mxu0 0.0
    %3207 = vmatpush.msra.mxu0 %v3183
    %3208 = vmatpush.msra.mxu0 %v3182
    %3209 = vmatpush.msra.mxu0 %v3181
    %3210 = vmatpush.msra.mxu0 %v3180
    %3211 = vmatmul.f32.gmra.mxu0 %v3190
    %v3212 = vpop.f32.mrf.mxu0
    %v3213 = vadd.f32 %v3187, %v3212
    %3214 = vmatmul.f32.gmra.mxu0 %v3193
    %v3215 = vpop.f32.mrf.mxu0
    %v3216 = vadd.f32 %v3187, %v3215
    %3217 = vdwg.mxu0
    %v3218 = vadd.f32 %v2648, %v3213
    %v3219 = vadd.f32 %v2649, %v3216
    %s3220 = scalar_lea.vmem %s93, 3
    %v3221 = vld [vmem:[%s3220] sm:$0x1]
    %s3222 = scalar_lea.vmem %s95, 3
    %v3223 = vld [vmem:[%s3222] sm:$0x1]
    %v3224 = vsel %vm635, %v3218, 0.0
    %3225 = vadd.xlane.f32.xlu0 %v3224
    %v3226 = vpop.xlane.xlu0 %3225
    %v3227 = vsel %vm635, %v3219, 0.0
    %3228 = vadd.xlane.f32.xlu0 %v3227
    %v3229 = vpop.xlane.xlu0 %3228
    %v3230 = vmul.f32 %v3226, %v2327
    %v3231 = vmul.f32 %v3229, %v2327
    %v3232 = vsub.f32 %v3218, %v3230
    %v3233 = vsub.f32 %v3219, %v3231
    %v3234 = vmul.f32 %v3232, %v3232
    %v3235 = vmul.f32 %v3233, %v3233
    %v3236 = vsel %vm635, %v3234, 0.0
    %3237 = vadd.xlane.f32.xlu0 %v3236
    %v3238 = vpop.xlane.xlu0 %3237
    %v3239 = vsel %vm635, %v3235, 0.0
    %3240 = vadd.xlane.f32.xlu0 %v3239
    %v3241 = vpop.xlane.xlu0 %3240
    %v3242 = vmul.f32 %v3238, %v2327
    %v3243 = vmul.f32 %v3241, %v2327
    %v3244 = vadd.f32 %v3242, 1e-05
    %v3245 = vadd.f32 %v3243, 1e-05
    %v3246 = vrsqrt.pop %v3244
    %v3247 = vmul.f32 %v3246, %v3244
    %v3248 = vmul.f32 %v3247, %v3246
    %v3249 = vmul.f32 0.5, %v3248
    %v3250 = vsub.f32 1.5, %v3249
    %v3251 = vmul.f32 %v3246, %v3250
    %vm3252 = vweird.f32 %v3244
    %vm3253 = vweird.f32 %v3246
    %vm3254 = vmor %vm3252, %vm3253
    %v3255 = vsel %vm3254, %v3246, %v3251
    %v3256 = vrsqrt.pop %v3245
    %v3257 = vmul.f32 %v3256, %v3245
    %v3258 = vmul.f32 %v3257, %v3256
    %v3259 = vmul.f32 0.5, %v3258
    %v3260 = vsub.f32 1.5, %v3259
    %v3261 = vmul.f32 %v3256, %v3260
    %vm3262 = vweird.f32 %v3245
    %vm3263 = vweird.f32 %v3256
    %vm3264 = vmor %vm3262, %vm3263
    %v3265 = vsel %vm3264, %v3256, %v3261
    %v3266 = vmul.f32 %v3232, %v3255
    %v3267 = vmul.f32 %v3233, %v3265
    %v3269 = vperm.slane %v3221, 0
    %v3271 = vmul.f32 %v3266, %v3269
    %v3272 = vmul.f32 %v3267, %v3269
    %v3274 = vperm.slane %v3223, 0
    %v3276 = vadd.f32 %v3271, %v3274
    %v3277 = vadd.f32 %v3272, %v3274
    %s3278 = scalar_lea.vmem [#allocation40], 32
    %v3279 = vld [vmem:[%s3278] sm:$0xff]
    %v3280 = vld [vmem:[%s3278 + $0x8] sm:$0xff]
    %v3281 = vld [vmem:[%s3278 + $0x10] sm:$0xff]
    %v3282 = vld [vmem:[%s3278 + $0x18] sm:$0xff]
    %s3283 = scalar_lea.vmem %s79, 1
    %v3284 = vld [vmem:[%s3283] sm:$0x1]
    %v3286 = vperm.slane %v3284, 0
    %3288 = vmatpush.msra.mxu0 0.0
    %3289 = vmatpush.msra.mxu0 0.0
    %3290 = vmatpush.msra.mxu0 0.0
    %3291 = vmatpush.msra.mxu0 0.0
    %3292 = vmatpush.msra.mxu0 0.0
    %3293 = vmatpush.msra.mxu0 0.0
    %3294 = vmatpush.msra.mxu0 0.0
    %3295 = vmatpush.msra.mxu0 0.0
    %3296 = vmatpush.msra.mxu0 0.0
    %3297 = vmatpush.msra.mxu0 0.0
    %3298 = vmatpush.msra.mxu0 0.0
    %3299 = vmatpush.msra.mxu0 0.0
    %3300 = vmatpush.msra.mxu0 %v3282
    %3301 = vmatpush.msra.mxu0 %v3281
    %3302 = vmatpush.msra.mxu0 %v3280
    %3303 = vmatpush.msra.mxu0 %v3279
    %3304 = vmatmul.f32.gmra.mxu0 %v2385
    %v3305 = vpop.f32.mrf.mxu0
    %v3306 = vadd.f32 %v3286, %v3305
    %3307 = vmatmul.f32.gmra.mxu0 %v2388
    %v3308 = vpop.f32.mrf.mxu0
    %v3309 = vadd.f32 %v3286, %v3308
    %3310 = vdwg.mxu0
    %s3311 = scalar_lea.vmem [#allocation41], 32
    %v3312 = vld [vmem:[%s3311] sm:$0xff]
    %v3313 = vld [vmem:[%s3311 + $0x8] sm:$0xff]
    %v3314 = vld [vmem:[%s3311 + $0x10] sm:$0xff]
    %v3315 = vld [vmem:[%s3311 + $0x18] sm:$0xff]
    %s3316 = scalar_lea.vmem %s83, 1
    %v3317 = vld [vmem:[%s3316] sm:$0x1]
    %v3319 = vperm.slane %v3317, 0
    %v3322 = vsel %vm635, %v3306, 0
    %v3325 = vsel %vm635, %v3309, 0
    %3327 = vmatpush.msra.mxu0 0.0
    %3328 = vmatpush.msra.mxu0 0.0
    %3329 = vmatpush.msra.mxu0 0.0
    %3330 = vmatpush.msra.mxu0 0.0
    %3331 = vmatpush.msra.mxu0 0.0
    %3332 = vmatpush.msra.mxu0 0.0
    %3333 = vmatpush.msra.mxu0 0.0
    %3334 = vmatpush.msra.mxu0 0.0
    %3335 = vmatpush.msra.mxu0 0.0
    %3336 = vmatpush.msra.mxu0 0.0
    %3337 = vmatpush.msra.mxu0 0.0
    %3338 = vmatpush.msra.mxu0 0.0
    %3339 = vmatpush.msra.mxu0 %v3315
    %3340 = vmatpush.msra.mxu0 %v3314
    %3341 = vmatpush.msra.mxu0 %v3313
    %3342 = vmatpush.msra.mxu0 %v3312
    %3343 = vmatmul.f32.gmra.mxu0 %v3322
    %v3344 = vpop.f32.mrf.mxu0
    %v3345 = vadd.f32 %v3319, %v3344
    %3346 = vmatmul.f32.gmra.mxu0 %v3325
    %v3347 = vpop.f32.mrf.mxu0
    %v3348 = vadd.f32 %v3319, %v3347
    %3349 = vdwg.mxu0
    %v3350 = vadd.f32 %v3276, %v3345
    %v3351 = vadd.f32 %v3277, %v3348
    %s3352 = scalar_lea.vmem %s93, 4
    %v3353 = vld [vmem:[%s3352] sm:$0x1]
    %s3354 = scalar_lea.vmem %s95, 4
    %v3355 = vld [vmem:[%s3354] sm:$0x1]
    %v3356 = vsel %vm635, %v3350, 0.0
    %3357 = vadd.xlane.f32.xlu0 %v3356
    %v3358 = vpop.xlane.xlu0 %3357
    %v3359 = vsel %vm635, %v3351, 0.0
    %3360 = vadd.xlane.f32.xlu0 %v3359
    %v3361 = vpop.xlane.xlu0 %3360
    %v3362 = vmul.f32 %v3358, %v2327
    %v3363 = vmul.f32 %v3361, %v2327
    %v3364 = vsub.f32 %v3350, %v3362
    %v3365 = vsub.f32 %v3351, %v3363
    %v3366 = vmul.f32 %v3364, %v3364
    %v3367 = vmul.f32 %v3365, %v3365
    %v3368 = vsel %vm635, %v3366, 0.0
    %3369 = vadd.xlane.f32.xlu0 %v3368
    %v3370 = vpop.xlane.xlu0 %3369
    %v3371 = vsel %vm635, %v3367, 0.0
    %3372 = vadd.xlane.f32.xlu0 %v3371
    %v3373 = vpop.xlane.xlu0 %3372
    %v3374 = vmul.f32 %v3370, %v2327
    %v3375 = vmul.f32 %v3373, %v2327
    %v3376 = vadd.f32 %v3374, 1e-05
    %v3377 = vadd.f32 %v3375, 1e-05
    %v3378 = vrsqrt.pop %v3376
    %v3379 = vmul.f32 %v3378, %v3376
    %v3380 = vmul.f32 %v3379, %v3378
    %v3381 = vmul.f32 0.5, %v3380
    %v3382 = vsub.f32 1.5, %v3381
    %v3383 = vmul.f32 %v3378, %v3382
    %vm3384 = vweird.f32 %v3376
    %vm3385 = vweird.f32 %v3378
    %vm3386 = vmor %vm3384, %vm3385
    %v3387 = vsel %vm3386, %v3378, %v3383
    %v3388 = vrsqrt.pop %v3377
    %v3389 = vmul.f32 %v3388, %v3377
    %v3390 = vmul.f32 %v3389, %v3388
    %v3391 = vmul.f32 0.5, %v3390
    %v3392 = vsub.f32 1.5, %v3391
    %v3393 = vmul.f32 %v3388, %v3392
    %vm3394 = vweird.f32 %v3377
    %vm3395 = vweird.f32 %v3388
    %vm3396 = vmor %vm3394, %vm3395
    %v3397 = vsel %vm3396, %v3388, %v3393
    %v3398 = vmul.f32 %v3364, %v3387
    %v3399 = vmul.f32 %v3365, %v3397
    %v3401 = vperm.slane %v3353, 0
    %v3403 = vmul.f32 %v3398, %v3401
    %v3404 = vmul.f32 %v3399, %v3401
    %v3406 = vperm.slane %v3355, 0
    %v3408 = vadd.f32 %v3403, %v3406
    %v3409 = vadd.f32 %v3404, %v3406
    %s3410 = scalar_lea.vmem %s85, 32
    %v3411 = vld [vmem:[%s3410] sm:$0xff]
    %v3412 = vld [vmem:[%s3410 + $0x8] sm:$0xff]
    %v3413 = vld [vmem:[%s3410 + $0x10] sm:$0xff]
    %v3414 = vld [vmem:[%s3410 + $0x18] sm:$0xff]
    %s3415 = scalar_lea.vmem %s87, 1
    %v3416 = vld [vmem:[%s3415] sm:$0x1]
    %v3418 = vperm.slane %v3416, 0
    %v3421 = vsel %vm635, %v3408, 0
    %v3424 = vsel %vm635, %v3409, 0
    %3426 = vmatpush.msra.mxu0 0.0
    %3427 = vmatpush.msra.mxu0 0.0
    %3428 = vmatpush.msra.mxu0 0.0
    %3429 = vmatpush.msra.mxu0 0.0
    %3430 = vmatpush.msra.mxu0 0.0
    %3431 = vmatpush.msra.mxu0 0.0
    %3432 = vmatpush.msra.mxu0 0.0
    %3433 = vmatpush.msra.mxu0 0.0
    %3434 = vmatpush.msra.mxu0 0.0
    %3435 = vmatpush.msra.mxu0 0.0
    %3436 = vmatpush.msra.mxu0 0.0
    %3437 = vmatpush.msra.mxu0 0.0
    %3438 = vmatpush.msra.mxu0 %v3414
    %3439 = vmatpush.msra.mxu0 %v3413
    %3440 = vmatpush.msra.mxu0 %v3412
    %3441 = vmatpush.msra.mxu0 %v3411
    %3442 = vmatmul.f32.gmra.mxu0 %v3421
    %v3443 = vpop.f32.mrf.mxu0
    %v3444 = vadd.f32 %v3418, %v3443
    %3445 = vmatmul.f32.gmra.mxu0 %v3424
    %v3446 = vpop.f32.mrf.mxu0
    %v3447 = vadd.f32 %v3418, %v3446
    %3448 = vdwg.mxu0
    %v3449 = vmax.f32 %v3444, 0.0
    %v3450 = vmax.f32 %v3447, 0.0
    %s3451 = scalar_lea.vmem %s89, 64
    %v3452 = vld [vmem:[%s3451] sm:$0xff]
    %v3453 = vld [vmem:[%s3451 + $0x8] sm:$0xff]
    %v3454 = vld [vmem:[%s3451 + $0x10] sm:$0xff]
    %v3455 = vld [vmem:[%s3451 + $0x18] sm:$0xff]
    %v3456 = vld [vmem:[%s3451 + $0x20] sm:$0xff]
    %v3457 = vld [vmem:[%s3451 + $0x28] sm:$0xff]
    %v3458 = vld [vmem:[%s3451 + $0x30] sm:$0xff]
    %v3459 = vld [vmem:[%s3451 + $0x38] sm:$0xff]
    %s3460 = scalar_lea.vmem %s91, 1
    %v3461 = vld [vmem:[%s3460] sm:$0x1]
    %v3463 = vperm.slane %v3461, 0
    %v3466 = vsel %vm2244, %v3449, 0
    %v3469 = vsel %vm2244, %v3450, 0
    %3471 = vmatpush.msra.mxu0 0.0
    %3472 = vmatpush.msra.mxu0 0.0
    %3473 = vmatpush.msra.mxu0 0.0
    %3474 = vmatpush.msra.mxu0 0.0
    %3475 = vmatpush.msra.mxu0 0.0
    %3476 = vmatpush.msra.mxu0 0.0
    %3477 = vmatpush.msra.mxu0 0.0
    %3478 = vmatpush.msra.mxu0 0.0
    %3479 = vmatpush.msra.mxu0 %v3459
    %3480 = vmatpush.msra.mxu0 %v3458
    %3481 = vmatpush.msra.mxu0 %v3457
    %3482 = vmatpush.msra.mxu0 %v3456
    %3483 = vmatpush.msra.mxu0 %v3455
    %3484 = vmatpush.msra.mxu0 %v3454
    %3485 = vmatpush.msra.mxu0 %v3453
    %3486 = vmatpush.msra.mxu0 %v3452
    %3487 = vmatmul.f32.gmra.mxu0 %v3466
    %v3488 = vpop.f32.mrf.mxu0
    %v3489 = vadd.f32 %v3463, %v3488
    %3490 = vmatmul.f32.gmra.mxu0 %v3469
    %v3491 = vpop.f32.mrf.mxu0
    %v3492 = vadd.f32 %v3463, %v3491
    %3493 = vdwg.mxu0
    %v3494 = vadd.f32 %v3408, %v3489
    %v3495 = vadd.f32 %v3409, %v3492
    %s3496 = scalar_lea.vmem %s93, 5
    %v3497 = vld [vmem:[%s3496] sm:$0x1]
    %s3498 = scalar_lea.vmem %s95, 5
    %v3499 = vld [vmem:[%s3498] sm:$0x1]
    %v3500 = vsel %vm635, %v3494, 0.0
    %3501 = vadd.xlane.f32.xlu0 %v3500
    %v3502 = vpop.xlane.xlu0 %3501
    %v3503 = vsel %vm635, %v3495, 0.0
    %3504 = vadd.xlane.f32.xlu0 %v3503
    %v3505 = vpop.xlane.xlu0 %3504
    %v3506 = vmul.f32 %v3502, %v2327
    %v3507 = vmul.f32 %v3505, %v2327
    %v3508 = vsub.f32 %v3494, %v3506
    %v3509 = vsub.f32 %v3495, %v3507
    %v3510 = vmul.f32 %v3508, %v3508
    %v3511 = vmul.f32 %v3509, %v3509
    %v3512 = vsel %vm635, %v3510, 0.0
    %3513 = vadd.xlane.f32.xlu0 %v3512
    %v3514 = vpop.xlane.xlu0 %3513
    %v3515 = vsel %vm635, %v3511, 0.0
    %3516 = vadd.xlane.f32.xlu0 %v3515
    %v3517 = vpop.xlane.xlu0 %3516
    %v3518 = vmul.f32 %v3514, %v2327
    %v3519 = vmul.f32 %v3517, %v2327
    %v3520 = vadd.f32 %v3518, 1e-05
    %v3521 = vadd.f32 %v3519, 1e-05
    %v3522 = vrsqrt.pop %v3520
    %v3523 = vmul.f32 %v3522, %v3520
    %v3524 = vmul.f32 %v3523, %v3522
    %v3525 = vmul.f32 0.5, %v3524
    %v3526 = vsub.f32 1.5, %v3525
    %v3527 = vmul.f32 %v3522, %v3526
    %vm3528 = vweird.f32 %v3520
    %vm3529 = vweird.f32 %v3522
    %vm3530 = vmor %vm3528, %vm3529
    %v3531 = vsel %vm3530, %v3522, %v3527
    %v3532 = vrsqrt.pop %v3521
    %v3533 = vmul.f32 %v3532, %v3521
    %v3534 = vmul.f32 %v3533, %v3532
    %v3535 = vmul.f32 0.5, %v3534
    %v3536 = vsub.f32 1.5, %v3535
    %v3537 = vmul.f32 %v3532, %v3536
    %vm3538 = vweird.f32 %v3521
    %vm3539 = vweird.f32 %v3532
    %vm3540 = vmor %vm3538, %vm3539
    %v3541 = vsel %vm3540, %v3532, %v3537
    %v3542 = vmul.f32 %v3508, %v3531
    %v3543 = vmul.f32 %v3509, %v3541
    %v3545 = vperm.slane %v3497, 0
    %v3547 = vmul.f32 %v3542, %v3545
    %v3548 = vmul.f32 %v3543, %v3545
    %v3550 = vperm.slane %v3499, 0
    %v3552 = vadd.f32 %v3547, %v3550
    %v3553 = vadd.f32 %v3548, %v3550
    %v3554 = vld [vmem:[%s97] sm:$0xff]
    %v3555 = vld [vmem:[%s97 + $0x8] sm:$0xff]
    %v3556 = vld [vmem:[%s97 + $0x10] sm:$0xff]
    %v3557 = vld [vmem:[%s97 + $0x18] sm:$0xff]
    %v3558 = vld [vmem:[%s99] sm:$0x1]
    %v3560 = vperm.slane %v3558, 0
    %v3563 = vsel %vm635, %v3552, 0
    %v3566 = vsel %vm635, %v3553, 0
    %3568 = vmatpush.msra.mxu0 0.0
    %3569 = vmatpush.msra.mxu0 0.0
    %3570 = vmatpush.msra.mxu0 0.0
    %3571 = vmatpush.msra.mxu0 0.0
    %3572 = vmatpush.msra.mxu0 0.0
    %3573 = vmatpush.msra.mxu0 0.0
    %3574 = vmatpush.msra.mxu0 0.0
    %3575 = vmatpush.msra.mxu0 0.0
    %3576 = vmatpush.msra.mxu0 0.0
    %3577 = vmatpush.msra.mxu0 0.0
    %3578 = vmatpush.msra.mxu0 0.0
    %3579 = vmatpush.msra.mxu0 0.0
    %3580 = vmatpush.msra.mxu0 %v3557
    %3581 = vmatpush.msra.mxu0 %v3556
    %3582 = vmatpush.msra.mxu0 %v3555
    %3583 = vmatpush.msra.mxu0 %v3554
    %3584 = vmatmul.f32.gmra.mxu0 %v3563
    %v3585 = vpop.f32.mrf.mxu0
    %v3586 = vadd.f32 %v3560, %v3585
    %3587 = vmatmul.f32.gmra.mxu0 %v3566
    %v3588 = vpop.f32.mrf.mxu0
    %v3589 = vadd.f32 %v3560, %v3588
    %3590 = vdwg.mxu0
    %v3591 = vsub.f32 %v3586, %v1494
    %v3592 = vsub.f32 %v3589, %v1527
    %v3593 = vmul.f32 %v3591, %v3591
    %v3594 = vmul.f32 %v3592, %v3592
    %v3595 = vmul.f32 %v3593, %v1559
    %v3596 = vmul.f32 %v3594, %v1592
    %v3597 = vsel %vm1599, %v3595, 0.0
    %3598 = vadd.xlane.f32.xlu0 %v3597
    %v3599 = vpop.xlane.xlu0 %3598
    %v3600 = vsel %vm1599, %v3596, 0.0
    %3601 = vadd.xlane.f32.xlu0 %v3600
    %v3602 = vpop.xlane.xlu0 %3601
    %v3603 = vsel %vm1599, %v1559, 0.0
    %3604 = vadd.xlane.f32.xlu0 %v3603
    %v3605 = vpop.xlane.xlu0 %3604
    %v3606 = vsel %vm1599, %v1592, 0.0
    %3607 = vadd.xlane.f32.xlu0 %v3606
    %v3608 = vpop.xlane.xlu0 %3607
    %v3609 = vld [vmem:[#allocation13] sm:$0x3]
    %v3611 = vsel %vm872, %v3609, 0
    %3613 = vmatpush.msra.mxu0 0.0
    %3614 = vmatpush.msra.mxu0 0.0
    %3615 = vmatpush.msra.mxu0 0.0
    %3616 = vmatpush.msra.mxu0 0.0
    %3617 = vmatpush.msra.mxu0 0.0
    %3618 = vmatpush.msra.mxu0 0.0
    %3619 = vmatpush.msra.mxu0 0.0
    %3620 = vmatpush.msra.mxu0 0.0
    %3621 = vmatpush.msra.mxu0 0.0
    %3622 = vmatpush.msra.mxu0 0.0
    %3623 = vmatpush.msra.mxu0 0.0
    %3624 = vmatpush.msra.mxu0 0.0
    %3625 = vmatpush.msra.mxu0 0.0
    %3626 = vmatpush.msra.mxu0 0.0
    %3627 = vmatpush.msra.mxu0 %v3602
    %3628 = vmatpush.msra.mxu0 %v3599
    %3629 = vmatmul.f32.gmra.mxu0 %v3611
    %v3630 = vpop.f32.mrf.mxu0
    %v3631 = vadd.f32 0.0, %v3630
    %3632 = vdwg.mxu0
    %3633 = vmatpush.msra.mxu0 0.0
    %3634 = vmatpush.msra.mxu0 0.0
    %3635 = vmatpush.msra.mxu0 0.0
    %3636 = vmatpush.msra.mxu0 0.0
    %3637 = vmatpush.msra.mxu0 0.0
    %3638 = vmatpush.msra.mxu0 0.0
    %3639 = vmatpush.msra.mxu0 0.0
    %3640 = vmatpush.msra.mxu0 0.0
    %3641 = vmatpush.msra.mxu0 0.0
    %3642 = vmatpush.msra.mxu0 0.0
    %3643 = vmatpush.msra.mxu0 0.0
    %3644 = vmatpush.msra.mxu0 0.0
    %3645 = vmatpush.msra.mxu0 0.0
    %3646 = vmatpush.msra.mxu0 0.0
    %3647 = vmatpush.msra.mxu0 %v3608
    %3648 = vmatpush.msra.mxu0 %v3605
    %3649 = vmatmul.f32.gmra.mxu0 %v3611
    %v3650 = vpop.f32.mrf.mxu0
    %v3651 = vadd.f32 0.0, %v3650
    %3652 = vdwg.mxu0
    %v3653 = vmul.f32 %v3651, 8.0
    %v3654 = vrcp.pop %v3653
    %v3655 = vmul.f32 %v3653, %v3654
    %v3656 = vsub.f32 1.0, %v3655
    %v3657 = vmul.f32 %v3654, %v3656
    %v3658 = vadd.f32 %v3654, %v3657
    %vm3659 = vweird.f32 %v3653
    %vm3660 = vweird.f32 %v3654
    %vm3661 = vmor %vm3659, %vm3660
    %v3662 = vsel %vm3661, %v3654, %v3658
    %v3663 = vand.u32 2147483647, %v3653
    %vm3664 = vcmp.eq.f32.partialorder %v3663, 8.507059e+37
    %v3665 = vand.u32 %v3653, 2147483648
    %v3666 = vor.u32 1.1754944e-38, %v3665
    %v3667 = vsel %vm3664, %v3666, %v3662
    %v3668 = vmul.f32 %v3631, %v3667
    %vm3669 = vcmask 1024
    %v3670 = vsel %vm3669, %v3668, 0.0
    %v3671 = vrot.slane %v3670, 4
    %v3672 = vadd.f32 %v3670, %v3671
    %v3673 = vrot.slane %v3672, 2
    %v3674 = vadd.f32 %v3672, %v3673
    %v3675 = vrot.slane %v3674, 1
    %v3676 = vadd.f32 %v3674, %v3675
    %v3677 = vmul.f32 %v3676, 0.5
    %vm3678 = vcmask 0
    %3679 = vst.msk [vmem:[#allocation43] sm:$0x1] %vm3678, %v981
    %3680 = vst.msk [vmem:[#allocation44] sm:$0x1] %vm3678, %v3677
    %v3681 = vadd.f32 %v3677, %v981
    %3682 = vst.msk [vmem:[#allocation46] sm:$0x1] %vm3678, %v3681
    // Predicated region
    $region306: #{forward.1} parent=1 // pred_check
      _
    $region307: #{forward.1} parent=1 // pred_check_branch
      %3684 = sbr.rel (0) target = $region309
    $region308: #{forward.1} parent=1 // pred_region
      %3686 = vsyncadd [#allocation4], 0
      %s3688 = sshll.u32 [#allocation43], 4
      %s3689 = int_to_ptr.vmem [resolvable:$true] %s3688
      %s3690 = sshll.u32 %s101, 4
      %s3691 = int_to_ptr.hbm [resolvable:$true] %s3690
      %3693 = dma.vmem_to_hbm [thread:$0]  %s3689, 16, %s3691, [#allocation4]
    $region309: #{forward.1} parent=1 // pred_fallthru
      _
    // Predicated region
    $region310: #{forward.1} parent=1 // pred_check
      _
    $region311: #{forward.1} parent=1 // pred_check_branch
      %3695 = sbr.rel (0) target = $region313
    $region312: #{forward.1} parent=1 // pred_region
      %3697 = vsyncadd [#allocation45], 0
      %s3699 = sshll.u32 [#allocation44], 4
      %s3700 = int_to_ptr.vmem [resolvable:$true] %s3699
      %s3701 = sshll.u32 %s103, 4
      %s3702 = int_to_ptr.hbm [resolvable:$true] %s3701
      %3704 = dma.vmem_to_hbm [thread:$0]  %s3700, 16, %s3702, [#allocation45]
    $region313: #{forward.1} parent=1 // pred_fallthru
      _
    // Predicated region
    $region314: #{forward.1} parent=1 // pred_check
      _
    $region315: #{forward.1} parent=1 // pred_check_branch
      %3706 = sbr.rel (0) target = $region317
    $region316: #{forward.1} parent=1 // pred_region
      %3708 = vsyncadd [#allocation45], 0
      %s3710 = sshll.u32 [#allocation46], 4
      %s3711 = int_to_ptr.vmem [resolvable:$true] %s3710
      %s3712 = sshll.u32 %s105, 4
      %s3713 = int_to_ptr.hbm [resolvable:$true] %s3712
      %3715 = dma.vmem_to_hbm [thread:$0]  %s3711, 16, %s3713, [#allocation45]
    $region317: #{forward.1} parent=1 // pred_fallthru
      _
    // Predicated region
    $region318: #{forward.1} parent=1 // pred_check
      _
    $region319: #{forward.1} parent=1 // pred_check_branch
      %3717 = sbr.rel (0) target = $region321
    $region320: #{forward.1} parent=1 // pred_region
      %3719 = dma.done [#allocation4], 16
    $region321: #{forward.1} parent=1 // pred_fallthru
      _
    // Predicated region
    $region322: #{forward.1} parent=1 // pred_check
      _
    $region323: #{forward.1} parent=1 // pred_check_branch
      %3721 = sbr.rel (0) target = $region325
    $region324: #{forward.1} parent=1 // pred_region
      %3723 = dma.done [#allocation45], 16
    $region325: #{forward.1} parent=1 // pred_fallthru
      _
    // Predicated region
    $region326: #{forward.1} parent=1 // pred_check
      _
    $region327: #{forward.1} parent=1 // pred_check_branch
      %3725 = sbr.rel (0) target = $region329
    $region328: #{forward.1} parent=1 // pred_region
      %3727 = dma.done [#allocation45], 16
    $region329: #{forward.1} parent=1 // pred_fallthru
      _
    %3728 = vsyncpa [#allocation3], 1
    %3729 = vsyncpa [#allocation6], 1
    %3730 = vsyncpa [#allocation9], 1
    %3731 = vsyncpa [#allocation12], 1
    %3732 = vsyncpa [#allocation15], 1
    %3733 = vsyncpa [#allocation18], 1
    %3734 = vsyncpa [#allocation21], 1
    %3735 = vsyncpa [#allocation24], 1
    %3736 = vsyncpa [#allocation27], 1
    %3737 = vsyncpa [#allocation30], 1
    %3738 = vsyncpa [#allocation33], 1
    %3739 = vsyncpa [#allocation36], 1
    %3740 = vsyncpa [#allocation39], 1
    %3741 = vsyncpa [#allocation42], 1
    %3742 = vsyncpa [#allocation4], 1
    %3743 = vsyncpa [#allocation45], 1

</llo_original>
